<compile_context>
chip_gen: v7x
topology: tpu7x:2x2x1
jax: 0.10.0
libtpu: 0.0.40
codegen_flags: <defaults>
</compile_context>

<pallas_src>
import functools

import jax
import jax.numpy as jnp
from jax.experimental import pallas as pl
from jax.experimental.pallas import tpu as pltpu

C_IN, C1, C2, C3 = 3, 64, 128, 1024
BN_EPS = 1e-5
DEFAULT_TILE_N = 2048  # multiple of 256; f32 h3 = 8 MiB -> safe on v7x 64 MiB VMEM


def _round_up(x, m):
    return ((x + m - 1) // m) * m


def _pointnetfeat_kernel(x_ref,
                         w1_ref, t1_ref,
                         w2_ref, t2_ref,
                         w3_ref, t3_ref,
                         out_ref, acc_ref, *, tile_n):
    n = pl.program_id(2)

    # (8, C3) running-max accumulator, re-initialized at the start of every
    # (batch, split) sweep over the points tiles.
    @pl.when(n == 0)
    def _():
        acc_ref[...] = jnp.full((8, C3), -jnp.inf, jnp.float32)

    x = x_ref[0]                                              # (tile_n, 3) f32

    # ---- conv1 (K=3, BN scale folded into w1) + shift + relu on the VPU:
    # three broadcast FMAs, keeps the MXU free for the real matmuls.
    w1 = w1_ref[...]                                          # (3, 64)
    h = (x[:, 0:1] * w1[0:1, :]
         + x[:, 1:2] * w1[1:2, :]
         + x[:, 2:3] * w1[2:3, :])                            # (tile_n, 64) f32
    h = jnp.maximum(h + t1_ref[...], 0.0)

    # ---- conv2 (1x1) + shift + relu: bf16 MXU matmul, f32 accumulation.
    # BN scale pre-folded into w2's columns -> epilogue is just +t2, relu.
    h2 = jnp.dot(h.astype(jnp.bfloat16), w2_ref[...],
                 preferred_element_type=jnp.float32)          # (tile_n, 128)
    h2 = jnp.maximum(h2 + t2_ref[...], 0.0)

    # ---- conv3 (1x1) + shift (no relu): bf16 MXU matmul, f32 accumulation.
    h3 = jnp.dot(h2.astype(jnp.bfloat16), w3_ref[...],
                 preferred_element_type=jnp.float32)          # (tile_n, 1024)
    h3 = h3 + t3_ref[...]

    # Per-tile reduction: only cross-vreg (major-axis) element-wise maxima on
    # the VPU -- no per-step XLU sublane reduce, no per-step out_ref RMW.
    # (Padded rows are edge-replicated real points, so no masking is needed.)
    acc_ref[...] = jnp.maximum(
        acc_ref[...], jnp.max(h3.reshape(tile_n // 8, 8, C3), axis=0))

    # Finalize once per (batch, split): 8 -> 1 sublane reduce + store.
    @pl.when(n == pl.num_programs(2) - 1)
    def _():
        out_ref[0] = jnp.max(acc_ref[...], axis=0, keepdims=True)


def pointnetfeat_forward(x_ncw, params, tile_n=DEFAULT_TILE_N, num_splits=None):
    """x_ncw: (B, 3, N) float32 (PyTorch NCW layout).  Returns (B, 1024) f32."""
    B, cin, N = x_ncw.shape
    assert cin == C_IN
    (w1, t1, w2, t2, w3, t3) = params

    x_bnc = jnp.transpose(x_ncw, (0, 2, 1))                   # (B, N, 3)

    # Points tile: multiple of 256 (MXU-friendly), no larger than needed.
    tile_n = max(256, (tile_n // 256) * 256)
    tile_n = min(tile_n, _round_up(N, 256))

    total_tiles = -(-N // tile_n)
    if num_splits is None:
        # v7x has 2 TensorCores; with B == 1 only the (parallel) batch axis
        # would feed them and one core idles.  Splitting the points range into
        # two parallel halves recovers it; harmless on single-TC v5e/v6e.
        num_splits = 2 if (B == 1 and total_tiles >= 2) else 1
    tiles_per_split = -(-total_tiles // num_splits)
    n_pad = num_splits * tiles_per_split * tile_n

    # Edge-pad (replicate the last real point) so padded rows can never exceed
    # the true max -> the kernel needs no -inf masking pass.
    if n_pad != N:
        x_bnc = jnp.pad(x_bnc, ((0, 0), (0, n_pad - N), (0, 0)), mode="edge")

    # Pre-cast the big matmul weights (BN scale already folded in) to bf16:
    # native MXU rate, half the VMEM.  Shifts stay f32 for an exact epilogue.
    w2b = w2.astype(jnp.bfloat16)
    w3b = w3.astype(jnp.bfloat16)

    full2d = lambda shape: pl.BlockSpec(shape, lambda b, s, n: (0, 0))

    kernel = functools.partial(_pointnetfeat_kernel, tile_n=tile_n)

    # VMEM budget is dominated by the f32 (tile_n, 1024) h3 intermediate;
    # cap at 48 MiB so the same config stays inside v7x's 64 MiB physical VMEM.
    h3_bytes = tile_n * C3 * 4
    vmem_limit = min(48 * 1024 * 1024,
                     max(32 * 1024 * 1024, 3 * h3_bytes + 8 * 1024 * 1024))

    out = pl.pallas_call(
        kernel,
        out_shape=jax.ShapeDtypeStruct((B, num_splits, C3), jnp.float32),
        grid_spec=pltpu.PrefetchScalarGridSpec(
            num_scalar_prefetch=0,
            grid=(B, num_splits, tiles_per_split),
            in_specs=[
                pl.BlockSpec((1, tile_n, C_IN),
                             lambda b, s, n: (b, s * tiles_per_split + n, 0)),
                full2d((C_IN, C1)), full2d((1, C1)),           # layer 1
                full2d((C1, C2)),   full2d((1, C2)),           # layer 2
                full2d((C2, C3)),   full2d((1, C3)),           # layer 3
            ],
            out_specs=pl.BlockSpec((1, 1, C3), lambda b, s, n: (b, s, 0)),
            scratch_shapes=[pltpu.VMEM((8, C3), jnp.float32)],
        ),
        compiler_params=pltpu.CompilerParams(
            dimension_semantics=("parallel", "parallel", "arbitrary"),
            vmem_limit_bytes=vmem_limit,
        ),
    )(x_bnc, w1, t1, w2b, t2, w3b, t3)

    if num_splits > 1:
        out = jnp.max(out, axis=1)                             # combine halves
    return out.reshape(B, C3)


def _fold_bn(w, bias, gamma, beta, mean, var):
    """Fold conv bias + eval-mode BatchNorm into the weight columns + a shift."""
    scale = gamma / jnp.sqrt(var + BN_EPS)
    w_folded = (w * scale.reshape(1, -1)).astype(jnp.float32)
    shift = ((bias - mean) * scale + beta).reshape(1, -1).astype(jnp.float32)
    return w_folded, shift


def make_params(key):
    """Deterministic synthetic parameters (shapes match the PyTorch module)."""
    ks = jax.random.split(key, 18)
    i = iter(range(18))

    def layer(cin, cout):
        w = jax.random.normal(ks[next(i)], (cin, cout), jnp.float32) * 0.1   # conv weight (transposed)
        b = jax.random.normal(ks[next(i)], (cout,), jnp.float32) * 0.1       # conv bias
        gamma = 1.0 + 0.1 * jax.random.normal(ks[next(i)], (cout,), jnp.float32)
        beta = 0.1 * jax.random.normal(ks[next(i)], (cout,), jnp.float32)
        mean = 0.1 * jax.random.normal(ks[next(i)], (cout,), jnp.float32)
        var = jax.random.uniform(ks[next(i)], (cout,), jnp.float32, 0.5, 1.5)
        return _fold_bn(w, b, gamma, beta, mean, var)

    w1, t1 = layer(C_IN, C1)
    w2, t2 = layer(C1, C2)
    w3, t3 = layer(C2, C3)
    return (w1, t1, w2, t2, w3, t3)


def reference_forward(x_ncw, params):
    """Pure-JAX f32 reference (same folded-BN math)."""
    (w1, t1, w2, t2, w3, t3) = params
    x = jnp.transpose(x_ncw, (0, 2, 1))
    h = jnp.maximum(x @ w1 + t1, 0.0)
    h = jnp.maximum(h @ w2 + t2, 0.0)
    h = h @ w3 + t3
    return jnp.max(h, axis=1)


if __name__ == "__main__":
    key = jax.random.PRNGKey(0)
    k_x, k_p, k_x2 = jax.random.split(key, 3)

    params = make_params(k_p)

    # Case 1: B=2, N=500 -> single 512-wide edge-padded tile per batch element.
    B, N = 2, 500
    x = jax.random.normal(k_x, (B, C_IN, N), jnp.float32)     # PyTorch (B, 3, N)
    out = jax.block_until_ready(pointnetfeat_forward(x, params))
    ref = reference_forward(x, params)
    assert out.shape == (B, 1024)
    assert bool(jnp.all(jnp.isfinite(out))), "non-finite output"
    # bf16 MXU operands (f32 accumulation) -> relaxed tolerance vs f32 reference.
    assert jnp.allclose(out, ref, atol=2e-2, rtol=2e-2), "mismatch vs JAX reference (case 1)"

    # Case 2: B=1, N=1000, tile_n=256 -> exercises multi-tile running-max
    # accumulation AND the 2-way points split (v7x second-core path).
    x2 = jax.random.normal(k_x2, (1, C_IN, 1000), jnp.float32)
    out2 = jax.block_until_ready(pointnetfeat_forward(x2, params, tile_n=256))
    ref2 = reference_forward(x2, params)
    assert out2.shape == (1, 1024)
    assert jnp.allclose(out2, ref2, atol=2e-2, rtol=2e-2), "mismatch vs JAX reference (case 2)"

    print("KERNEL_OK")
</pallas_src>

<mosaic_0001>
module attributes {stable_mosaic.version = 11 : i64} {
  func.func @_pointnetfeat_kernel(%arg0: i32, %arg1: i32, %arg2: i32, %arg3: memref<1x512x3xf32, #tpu.memory_space<vmem>>, %arg4: memref<3x64xf32, #tpu.memory_space<vmem>>, %arg5: memref<1x64xf32, #tpu.memory_space<vmem>>, %arg6: memref<64x128xbf16, #tpu.memory_space<vmem>>, %arg7: memref<1x128xf32, #tpu.memory_space<vmem>>, %arg8: memref<128x1024xbf16, #tpu.memory_space<vmem>>, %arg9: memref<1x1024xf32, #tpu.memory_space<vmem>>, %arg10: memref<1x1x1024xf32, #tpu.memory_space<vmem>>, %arg11: memref<8x1024xf32, #tpu.memory_space<vmem>>) attributes {dimension_semantics = [#tpu.dimension_semantics<parallel>, #tpu.dimension_semantics<parallel>, #tpu.dimension_semantics<arbitrary>], iteration_bounds = array<i64: 2, 1, 1>, scalar_prefetch = 0 : i64, scratch_operands = 1 : i64, tpu.core_type = #tpu.core_type<tc>, window_params = [{transform_indices = @transform_0, window_bounds = array<i64: 1, 512, 3>}, {pipeline_mode = #tpu.pipeline_mode<synchronous>, transform_indices = @transform_1, window_bounds = array<i64: 3, 64>}, {pipeline_mode = #tpu.pipeline_mode<synchronous>, transform_indices = @transform_2, window_bounds = array<i64: 1, 64>}, {pipeline_mode = #tpu.pipeline_mode<synchronous>, transform_indices = @transform_3, window_bounds = array<i64: 64, 128>}, {pipeline_mode = #tpu.pipeline_mode<synchronous>, transform_indices = @transform_4, window_bounds = array<i64: 1, 128>}, {pipeline_mode = #tpu.pipeline_mode<synchronous>, transform_indices = @transform_5, window_bounds = array<i64: 128, 1024>}, {pipeline_mode = #tpu.pipeline_mode<synchronous>, transform_indices = @transform_6, window_bounds = array<i64: 1, 1024>}, {transform_indices = @transform_7, window_bounds = array<i64: 1, 1, 1024>}]} {
    %c0_i32 = arith.constant 0 : i32
    %0 = arith.cmpi eq, %arg2, %c0_i32 : i32
    %1 = arith.extui %0 : i1 to i32
    %c0_i32_0 = arith.constant 0 : i32
    %2 = arith.cmpi ne, %1, %c0_i32_0 : i32
    scf.if %2 {
      %cst_25 = arith.constant 0xFF800000 : f32
      %50 = vector.broadcast %cst_25 : f32 to vector<8x1024xf32>
      %c0_26 = arith.constant 0 : index
      %c0_27 = arith.constant 0 : index
      %51 = vector.load %arg11[%c0_26, %c0_27] : memref<8x1024xf32, #tpu.memory_space<vmem>>, vector<8x1024xf32>
      tpu.vector_store %arg11[%c0_26, %c0_27], %50 {strides = array<i32>} : memref<8x1024xf32, #tpu.memory_space<vmem>>, vector<8x1024xf32>,
    } else {
    }
    %c0 = arith.constant 0 : index
    %c0_1 = arith.constant 0 : index
    %c0_2 = arith.constant 0 : index
    %3 = vector.load %arg3[%c0, %c0_1, %c0_2] : memref<1x512x3xf32, #tpu.memory_space<vmem>>, vector<1x512x3xf32>
    %4 = vector.shape_cast %3 : vector<1x512x3xf32> to vector<512x3xf32>
    %c0_3 = arith.constant 0 : index
    %c0_4 = arith.constant 0 : index
    %5 = vector.load %arg4[%c0_3, %c0_4] : memref<3x64xf32, #tpu.memory_space<vmem>>, vector<3x64xf32>
    %6 = vector.extract_strided_slice %4 {offsets = [0, 0], sizes = [512, 1], strides = [1, 1]} : vector<512x3xf32> to vector<512x1xf32>
    %7 = vector.extract_strided_slice %5 {offsets = [0, 0], sizes = [1, 64], strides = [1, 1]} : vector<3x64xf32> to vector<1x64xf32>
    %8 = vector.broadcast %6 : vector<512x1xf32> to vector<512x64xf32>
    %9 = vector.broadcast %7 : vector<1x64xf32> to vector<512x64xf32>
    %10 = arith.mulf %8, %9 : vector<512x64xf32>
    %11 = vector.extract_strided_slice %4 {offsets = [0, 1], sizes = [512, 1], strides = [1, 1]} : vector<512x3xf32> to vector<512x1xf32>
    %12 = vector.extract_strided_slice %5 {offsets = [1, 0], sizes = [1, 64], strides = [1, 1]} : vector<3x64xf32> to vector<1x64xf32>
    %13 = vector.broadcast %11 : vector<512x1xf32> to vector<512x64xf32>
    %14 = vector.broadcast %12 : vector<1x64xf32> to vector<512x64xf32>
    %15 = arith.mulf %13, %14 : vector<512x64xf32>
    %16 = arith.addf %10, %15 : vector<512x64xf32>
    %17 = vector.extract_strided_slice %4 {offsets = [0, 2], sizes = [512, 1], strides = [1, 1]} : vector<512x3xf32> to vector<512x1xf32>
    %18 = vector.extract_strided_slice %5 {offsets = [2, 0], sizes = [1, 64], strides = [1, 1]} : vector<3x64xf32> to vector<1x64xf32>
    %19 = vector.broadcast %17 : vector<512x1xf32> to vector<512x64xf32>
    %20 = vector.broadcast %18 : vector<1x64xf32> to vector<512x64xf32>
    %21 = arith.mulf %19, %20 : vector<512x64xf32>
    %22 = arith.addf %16, %21 : vector<512x64xf32>
    %c0_5 = arith.constant 0 : index
    %c0_6 = arith.constant 0 : index
    %23 = vector.load %arg5[%c0_5, %c0_6] : memref<1x64xf32, #tpu.memory_space<vmem>>, vector<1x64xf32>
    %24 = vector.broadcast %23 : vector<1x64xf32> to vector<512x64xf32>
    %25 = arith.addf %22, %24 : vector<512x64xf32>
    %cst = arith.constant 0.000000e+00 : f32
    %26 = vector.broadcast %cst : f32 to vector<512x64xf32>
    %27 = arith.maximumf %25, %26 : vector<512x64xf32>
    %28 = arith.truncf %27 : vector<512x64xf32> to vector<512x64xbf16>
    %c0_7 = arith.constant 0 : index
    %c0_8 = arith.constant 0 : index
    %29 = vector.load %arg6[%c0_7, %c0_8] : memref<64x128xbf16, #tpu.memory_space<vmem>>, vector<64x128xbf16>
    %cst_9 = arith.constant dense<0.000000e+00> : vector<512x128xf32>
    %30 = tpu.matmul %28, %29, %cst_9 {dimension_numbers = #tpu.dot_dimension_numbers<[1], [0], [0], [1], [0, 0, 1, 1], [], []>} : vector<512x64xbf16>, vector<64x128xbf16>, vector<512x128xf32> -> vector<512x128xf32>
    %c0_10 = arith.constant 0 : index
    %c0_11 = arith.constant 0 : index
    %31 = vector.load %arg7[%c0_10, %c0_11] : memref<1x128xf32, #tpu.memory_space<vmem>>, vector<1x128xf32>
    %32 = vector.broadcast %31 : vector<1x128xf32> to vector<512x128xf32>
    %33 = arith.addf %30, %32 : vector<512x128xf32>
    %cst_12 = arith.constant 0.000000e+00 : f32
    %34 = vector.broadcast %cst_12 : f32 to vector<512x128xf32>
    %35 = arith.maximumf %33, %34 : vector<512x128xf32>
    %36 = arith.truncf %35 : vector<512x128xf32> to vector<512x128xbf16>
    %c0_13 = arith.constant 0 : index
    %c0_14 = arith.constant 0 : index
    %37 = vector.load %arg8[%c0_13, %c0_14] : memref<128x1024xbf16, #tpu.memory_space<vmem>>, vector<128x1024xbf16>
    %cst_15 = arith.constant dense<0.000000e+00> : vector<512x1024xf32>
    %38 = tpu.matmul %36, %37, %cst_15 {dimension_numbers = #tpu.dot_dimension_numbers<[1], [0], [0], [1], [0, 0, 1, 1], [], []>} : vector<512x128xbf16>, vector<128x1024xbf16>, vector<512x1024xf32> -> vector<512x1024xf32>
    %c0_16 = arith.constant 0 : index
    %c0_17 = arith.constant 0 : index
    %39 = vector.load %arg9[%c0_16, %c0_17] : memref<1x1024xf32, #tpu.memory_space<vmem>>, vector<1x1024xf32>
    %40 = vector.broadcast %39 : vector<1x1024xf32> to vector<512x1024xf32>
    %41 = arith.addf %38, %40 : vector<512x1024xf32>
    %c0_18 = arith.constant 0 : index
    %c0_19 = arith.constant 0 : index
    %42 = vector.load %arg11[%c0_18, %c0_19] : memref<8x1024xf32, #tpu.memory_space<vmem>>, vector<8x1024xf32>
    %43 = vector.shape_cast %41 : vector<512x1024xf32> to vector<64x8x1024xf32>
    %cst_20 = arith.constant dense<0xFF800000> : vector<8x1024xf32>
    %44 = vector.multi_reduction <maximumf>, %43, %cst_20 [0] : vector<64x8x1024xf32> to vector<8x1024xf32>
    %45 = arith.maximumf %42, %44 : vector<8x1024xf32>
    %c0_21 = arith.constant 0 : index
    %c0_22 = arith.constant 0 : index
    %46 = vector.load %arg11[%c0_21, %c0_22] : memref<8x1024xf32, #tpu.memory_space<vmem>>, vector<8x1024xf32>
    tpu.vector_store %arg11[%c0_21, %c0_22], %45 {strides = array<i32>} : memref<8x1024xf32, #tpu.memory_space<vmem>>, vector<8x1024xf32>,
    %c0_i32_23 = arith.constant 0 : i32
    %47 = arith.cmpi eq, %arg2, %c0_i32_23 : i32
    %48 = arith.extui %47 : i1 to i32
    %c0_i32_24 = arith.constant 0 : i32
    %49 = arith.cmpi ne, %48, %c0_i32_24 : i32
    scf.if %49 {
      %c0_25 = arith.constant 0 : index
      %c0_26 = arith.constant 0 : index
      %50 = vector.load %arg11[%c0_25, %c0_26] : memref<8x1024xf32, #tpu.memory_space<vmem>>, vector<8x1024xf32>
      %cst_27 = arith.constant dense<0xFF800000> : vector<1024xf32>
      %51 = vector.multi_reduction <maximumf>, %50, %cst_27 [0] : vector<8x1024xf32> to vector<1024xf32>
      %52 = vector.shape_cast %51 : vector<1024xf32> to vector<1x1024xf32>
      %c0_28 = arith.constant 0 : index
      %c0_29 = arith.constant 0 : index
      %c0_30 = arith.constant 0 : index
      %53 = vector.load %arg10[%c0_28, %c0_29, %c0_30] : memref<1x1x1024xf32, #tpu.memory_space<vmem>>, vector<1x1x1024xf32>
      %54 = vector.shape_cast %53 : vector<1x1x1024xf32> to vector<1x1024xf32>
      %55 = vector.shape_cast %52 : vector<1x1024xf32> to vector<1x1x1024xf32>
      tpu.vector_store %arg10[%c0_28, %c0_29, %c0_30], %55 {strides = array<i32>} : memref<1x1x1024xf32, #tpu.memory_space<vmem>>, vector<1x1x1024xf32>,
    } else {
    }
    return
  }
  func.func @transform_0(%arg0: i32, %arg1: i32, %arg2: i32) -> (i32, i32, i32) {
    %c1_i32 = arith.constant 1 : i32
    %0 = arith.muli %arg1, %c1_i32 : i32
    %1 = arith.addi %0, %arg2 : i32
    %c0_i32 = arith.constant 0 : i32
    %c0_i32_0 = arith.constant 0 : i32
    return %arg0, %1, %c0_i32 : i32, i32, i32
  }
  func.func @transform_1(%arg0: i32, %arg1: i32, %arg2: i32) -> (i32, i32) {
    %c0_i32 = arith.constant 0 : i32
    %c0_i32_0 = arith.constant 0 : i32
    %c0_i32_1 = arith.constant 0 : i32
    return %c0_i32, %c0_i32_0 : i32, i32
  }
  func.func @transform_2(%arg0: i32, %arg1: i32, %arg2: i32) -> (i32, i32) {
    %c0_i32 = arith.constant 0 : i32
    %c0_i32_0 = arith.constant 0 : i32
    %c0_i32_1 = arith.constant 0 : i32
    return %c0_i32, %c0_i32_0 : i32, i32
  }
  func.func @transform_3(%arg0: i32, %arg1: i32, %arg2: i32) -> (i32, i32) {
    %c0_i32 = arith.constant 0 : i32
    %c0_i32_0 = arith.constant 0 : i32
    %c0_i32_1 = arith.constant 0 : i32
    return %c0_i32, %c0_i32_0 : i32, i32
  }
  func.func @transform_4(%arg0: i32, %arg1: i32, %arg2: i32) -> (i32, i32) {
    %c0_i32 = arith.constant 0 : i32
    %c0_i32_0 = arith.constant 0 : i32
    %c0_i32_1 = arith.constant 0 : i32
    return %c0_i32, %c0_i32_0 : i32, i32
  }
  func.func @transform_5(%arg0: i32, %arg1: i32, %arg2: i32) -> (i32, i32) {
    %c0_i32 = arith.constant 0 : i32
    %c0_i32_0 = arith.constant 0 : i32
    %c0_i32_1 = arith.constant 0 : i32
    return %c0_i32, %c0_i32_0 : i32, i32
  }
  func.func @transform_6(%arg0: i32, %arg1: i32, %arg2: i32) -> (i32, i32) {
    %c0_i32 = arith.constant 0 : i32
    %c0_i32_0 = arith.constant 0 : i32
    %c0_i32_1 = arith.constant 0 : i32
    return %c0_i32, %c0_i32_0 : i32, i32
  }
  func.func @transform_7(%arg0: i32, %arg1: i32, %arg2: i32) -> (i32, i32, i32) {
    %c0_i32 = arith.constant 0 : i32
    %c0_i32_0 = arith.constant 0 : i32
    return %arg0, %arg1, %c0_i32 : i32, i32, i32
  }
}

</mosaic_0001>

<llo_original>
// kernel: tpu_custom_call.1
$region0: #{tpu_custom_call.1}
  #allocation0 [shape = 'u32[]', space=smem, size = 0x4, offset = 0x4, fixed_abs, tag = 'smem constant byte address 0x4 - core index']
  #allocation1 [shape = 'u32[144,128]{1,0:T(1,128)}', space=vmem, size = 0x12000, scoped, tag = 'internal scratch']
  #allocation2 [shape = 'f32[8,1024]{1,0:T(8,128)}', space=vmem, size = 0x8000, scoped, tag = 'scratch operand']
  %s0 = inlined_call_operand.vmem [shape: f32[2,512,3], index: 0, kind: input, shape index: {}]
  %s1 = inlined_call_operand.vmem [shape: f32[3,64], index: 1, kind: input, shape index: {}]
  %s2 = inlined_call_operand.vmem [shape: f32[1,64], index: 2, kind: input, shape index: {}]
  %s3 = inlined_call_operand.vmem [shape: bf16[64,128], index: 3, kind: input, shape index: {}]
  %s4 = inlined_call_operand.vmem [shape: f32[1,128], index: 4, kind: input, shape index: {}]
  %s5 = inlined_call_operand.vmem [shape: bf16[128,1024], index: 5, kind: input, shape index: {}]
  %s6 = inlined_call_operand.vmem [shape: f32[1,1024], index: 6, kind: input, shape index: {}]
  %s7 = inlined_call_operand.hbm [shape: f32[2,1,1024], index: 7, kind: output, shape index: {}]
  %s8 = sld [smem:[#allocation0]]
  $region69: #{tpu_custom_call.1} parent=0
    _
  %s10 = ssub.s32 1, %s8
  %s11 = scalar_select 0, %s10, %s8
  $region1: #{tpu_custom_call.1} parent=0
    #allocation3 [shape = 'u8[8192]{0}', space=vmem, size = 0x2000, scoped, tag = 'output window, operand 0']
    #allocation4 [shape = 's32[2]{0}', space=sflag, size = 0x8, scoped, tag = 'scoped memory for tpu_custom_call.1']
    %12 = vsyncpa [#allocation4], 0
    %s13 = scalar_lea.sflag [#allocation4], 1
    %14 = vsyncpa %s13, 0
    loop: start=0, step=1, limit=4
    $region2: #{tpu_custom_call.1} parent=1 // loop_pre_header
      _
    $region3: #{tpu_custom_call.1} parent=1 // loop_header
      %s16 = sphi 0, %s20
      %p17 = scmp.ge.s32.totalorder %s16, 4
      %s23 = sphi 0, %s42
      %s24 = sphi 0, %s38
      %s25 = sphi 0, %s34
      %s26 = sphi 0, %s23
      %s27 = sphi 0, %s24
      %s28 = sphi 0, %s25
      %s29 = sphi 0, %s26
      %s30 = sphi 0, %s27
      %s31 = sphi 0, %s28
      %s49 = sphi 0, %s51
      %s52 = sphi 0, %s49
      %s53 = sphi 0, %s52
      %s69 = sphi 0, %s53
      %s73 = sphi 0, %s73
      %s75 = sphi 0, %s73
      %s76 = sphi 0, %s75
      %s90 = sphi 0, %s76
      %s94 = sphi 0, %s94
      %s96 = sphi 0, %s94
      %s97 = sphi 0, %s96
      %s111 = sphi 0, %s97
      %s115 = sphi 0, %s115
      %s117 = sphi 0, %s115
      %s118 = sphi 0, %s117
      %s132 = sphi 0, %s118
      %s136 = sphi 0, %s136
      %s138 = sphi 0, %s136
      %s139 = sphi 0, %s138
      %s153 = sphi 0, %s139
      %s157 = sphi 0, %s157
      %s159 = sphi 0, %s157
      %s160 = sphi 0, %s159
      %s174 = sphi 0, %s160
      %s178 = sphi 0, %s178
      %s180 = sphi 0, %s178
      %s181 = sphi 0, %s180
      %s195 = sphi 0, %s181
      %s203 = sphi 0, %s205
      %s206 = sphi 0, %s203
      %s207 = sphi 0, %s206
      %s223 = sphi 0, %s207
    $region4: #{tpu_custom_call.1} parent=1 // loop_header_branch
      %19 = sbr.rel (%p17) target = $region8
    $region5: #{tpu_custom_call.1} parent=1 // loop_body
      %s21 = ssub.s32 %s16, 1
      %s22 = ssub.s32 %s16, 2
      %s32 = sadd.s32 1, %s25
      %p33 = scmp.ge.s32.totalorder %s32, 1
      %s34 = scalar_select %p33, 0, %s32
      %s35 = sadd.s32 1, %s24
      %s36 = scalar_select %p33, %s35, %s24
      %p37 = scmp.ge.s32.totalorder %s36, 1
      %s38 = scalar_select %p37, 0, %s36
      %s39 = sadd.s32 1, %s23
      %s40 = scalar_select %p37, %s39, %s23
      %p41 = scmp.ge.s32.totalorder %s40, 2
      %s42 = scalar_select %p41, 0, %s40
      %s43 = sadd.s32 %s24, %s25
      %s44 = sadd.s32 %s38, %s34
      %s45 = ssub.s32 %s23, %s42
      %s46 = ssub.s32 %s43, %s44
      %s47 = sor.u32 %s45, %s46
      %p48 = scmp.eq.s32.totalorder %s47, 0
      %s50 = sadd.s32 %s49, 1
      %s51 = scalar_select %p48, %s49, %s50
      %p54 = pneg %p48
      %p55 = scmp.eq.s32.totalorder %s16, 1
      %p56 = por %p54, %p55
      %p57 = scmp.ne.s32.totalorder %s49, %s52
      %p58 = scmp.eq.s32.totalorder %s16, 0
      %p59 = por %p57, %p58
      %p60 = scmp.ne.s32.totalorder %s49, %s52
      %p61 = scmp.eq.s32.totalorder %s21, 1
      %p62 = por %p60, %p61
      %p63 = scmp.ne.s32.totalorder %s52, %s53
      %p64 = scmp.eq.s32.totalorder %s21, 0
      %p65 = por %p63, %p64
      %p66 = scmp.ne.s32.totalorder %s52, %s53
      %p67 = scmp.eq.s32.totalorder %s22, 1
      %p68 = por %p66, %p67
      %p70 = scmp.ne.s32.totalorder %s53, %s69
      %p71 = scmp.eq.s32.totalorder %s22, 0
      %p72 = por %p70, %p71
      %s74 = sadd.s32 %s73, 1
      %p77 = scmp.eq.s32.totalorder %s16, 1
      %p78 = scmp.ne.s32.totalorder %s73, %s75
      %p79 = scmp.eq.s32.totalorder %s16, 0
      %p80 = por %p78, %p79
      %p81 = scmp.ne.s32.totalorder %s73, %s75
      %p82 = scmp.eq.s32.totalorder %s21, 1
      %p83 = por %p81, %p82
      %p84 = scmp.ne.s32.totalorder %s75, %s76
      %p85 = scmp.eq.s32.totalorder %s21, 0
      %p86 = por %p84, %p85
      %p87 = scmp.ne.s32.totalorder %s75, %s76
      %p88 = scmp.eq.s32.totalorder %s22, 1
      %p89 = por %p87, %p88
      %p91 = scmp.ne.s32.totalorder %s76, %s90
      %p92 = scmp.eq.s32.totalorder %s22, 0
      %p93 = por %p91, %p92
      %s95 = sadd.s32 %s94, 1
      %p98 = scmp.eq.s32.totalorder %s16, 1
      %p99 = scmp.ne.s32.totalorder %s94, %s96
      %p100 = scmp.eq.s32.totalorder %s16, 0
      %p101 = por %p99, %p100
      %p102 = scmp.ne.s32.totalorder %s94, %s96
      %p103 = scmp.eq.s32.totalorder %s21, 1
      %p104 = por %p102, %p103
      %p105 = scmp.ne.s32.totalorder %s96, %s97
      %p106 = scmp.eq.s32.totalorder %s21, 0
      %p107 = por %p105, %p106
      %p108 = scmp.ne.s32.totalorder %s96, %s97
      %p109 = scmp.eq.s32.totalorder %s22, 1
      %p110 = por %p108, %p109
      %p112 = scmp.ne.s32.totalorder %s97, %s111
      %p113 = scmp.eq.s32.totalorder %s22, 0
      %p114 = por %p112, %p113
      %s116 = sadd.s32 %s115, 1
      %p119 = scmp.eq.s32.totalorder %s16, 1
      %p120 = scmp.ne.s32.totalorder %s115, %s117
      %p121 = scmp.eq.s32.totalorder %s16, 0
      %p122 = por %p120, %p121
      %p123 = scmp.ne.s32.totalorder %s115, %s117
      %p124 = scmp.eq.s32.totalorder %s21, 1
      %p125 = por %p123, %p124
      %p126 = scmp.ne.s32.totalorder %s117, %s118
      %p127 = scmp.eq.s32.totalorder %s21, 0
      %p128 = por %p126, %p127
      %p129 = scmp.ne.s32.totalorder %s117, %s118
      %p130 = scmp.eq.s32.totalorder %s22, 1
      %p131 = por %p129, %p130
      %p133 = scmp.ne.s32.totalorder %s118, %s132
      %p134 = scmp.eq.s32.totalorder %s22, 0
      %p135 = por %p133, %p134
      %s137 = sadd.s32 %s136, 1
      %p140 = scmp.eq.s32.totalorder %s16, 1
      %p141 = scmp.ne.s32.totalorder %s136, %s138
      %p142 = scmp.eq.s32.totalorder %s16, 0
      %p143 = por %p141, %p142
      %p144 = scmp.ne.s32.totalorder %s136, %s138
      %p145 = scmp.eq.s32.totalorder %s21, 1
      %p146 = por %p144, %p145
      %p147 = scmp.ne.s32.totalorder %s138, %s139
      %p148 = scmp.eq.s32.totalorder %s21, 0
      %p149 = por %p147, %p148
      %p150 = scmp.ne.s32.totalorder %s138, %s139
      %p151 = scmp.eq.s32.totalorder %s22, 1
      %p152 = por %p150, %p151
      %p154 = scmp.ne.s32.totalorder %s139, %s153
      %p155 = scmp.eq.s32.totalorder %s22, 0
      %p156 = por %p154, %p155
      %s158 = sadd.s32 %s157, 1
      %p161 = scmp.eq.s32.totalorder %s16, 1
      %p162 = scmp.ne.s32.totalorder %s157, %s159
      %p163 = scmp.eq.s32.totalorder %s16, 0
      %p164 = por %p162, %p163
      %p165 = scmp.ne.s32.totalorder %s157, %s159
      %p166 = scmp.eq.s32.totalorder %s21, 1
      %p167 = por %p165, %p166
      %p168 = scmp.ne.s32.totalorder %s159, %s160
      %p169 = scmp.eq.s32.totalorder %s21, 0
      %p170 = por %p168, %p169
      %p171 = scmp.ne.s32.totalorder %s159, %s160
      %p172 = scmp.eq.s32.totalorder %s22, 1
      %p173 = por %p171, %p172
      %p175 = scmp.ne.s32.totalorder %s160, %s174
      %p176 = scmp.eq.s32.totalorder %s22, 0
      %p177 = por %p175, %p176
      %s179 = sadd.s32 %s178, 1
      %p182 = scmp.eq.s32.totalorder %s16, 1
      %p183 = scmp.ne.s32.totalorder %s178, %s180
      %p184 = scmp.eq.s32.totalorder %s16, 0
      %p185 = por %p183, %p184
      %p186 = scmp.ne.s32.totalorder %s178, %s180
      %p187 = scmp.eq.s32.totalorder %s21, 1
      %p188 = por %p186, %p187
      %p189 = scmp.ne.s32.totalorder %s180, %s181
      %p190 = scmp.eq.s32.totalorder %s21, 0
      %p191 = por %p189, %p190
      %p192 = scmp.ne.s32.totalorder %s180, %s181
      %p193 = scmp.eq.s32.totalorder %s22, 1
      %p194 = por %p192, %p193
      %p196 = scmp.ne.s32.totalorder %s181, %s195
      %p197 = scmp.eq.s32.totalorder %s22, 0
      %p198 = por %p196, %p197
      %s199 = ssub.s32 %s23, %s42
      %s200 = ssub.s32 %s24, %s38
      %s201 = sor.u32 %s199, %s200
      %p202 = scmp.eq.s32.totalorder %s201, 0
      %s204 = sadd.s32 %s203, 1
      %s205 = scalar_select %p202, %s203, %s204
      %p208 = pneg %p202
      %p209 = scmp.eq.s32.totalorder %s16, 1
      %p210 = por %p208, %p209
      %p211 = scmp.ne.s32.totalorder %s203, %s206
      %p212 = scmp.eq.s32.totalorder %s16, 0
      %p213 = por %p211, %p212
      %p214 = scmp.ne.s32.totalorder %s203, %s206
      %p215 = scmp.eq.s32.totalorder %s21, 1
      %p216 = por %p214, %p215
      %p217 = scmp.ne.s32.totalorder %s206, %s207
      %p218 = scmp.eq.s32.totalorder %s21, 0
      %p219 = por %p217, %p218
      %p220 = scmp.ne.s32.totalorder %s206, %s207
      %p221 = scmp.eq.s32.totalorder %s22, 1
      %p222 = por %p220, %p221
      %p224 = scmp.ne.s32.totalorder %s207, %s223
      %p225 = scmp.eq.s32.totalorder %s22, 0
      %p226 = por %p224, %p225
      %p227 = scmp.le.s32.totalorder 1, %s16
      %p228 = scmp.lt.s32.totalorder %s16, 3
      %p229 = pnand %p227, %p228
      %p230 = pneg %p229
      // Predicated region
      $region9: #{tpu_custom_call.1} parent=5 // pred_check
        _
      $region10: #{tpu_custom_call.1} parent=5 // pred_check_branch
        %232 = sbr.rel (%p229) target = $region12
      $region11: #{tpu_custom_call.1} parent=5 // pred_region
        %s233 = ssub.s32 %s16, 1
        // Predicated region
        $region13: #{tpu_custom_call.1} parent=11 // pred_check
          %p234 = pneg %p86
        $region14: #{tpu_custom_call.1} parent=11 // pred_check_branch
          %236 = sbr.rel (%p234) target = $region16
        $region15: #{tpu_custom_call.1} parent=11 // pred_region
          _
        $region16: #{tpu_custom_call.1} parent=11 // pred_fallthru
          _
        // Predicated region
        $region17: #{tpu_custom_call.1} parent=11 // pred_check
          %p237 = pneg %p107
        $region18: #{tpu_custom_call.1} parent=11 // pred_check_branch
          %239 = sbr.rel (%p237) target = $region20
        $region19: #{tpu_custom_call.1} parent=11 // pred_region
          _
        $region20: #{tpu_custom_call.1} parent=11 // pred_fallthru
          _
        // Predicated region
        $region21: #{tpu_custom_call.1} parent=11 // pred_check
          %p240 = pneg %p128
        $region22: #{tpu_custom_call.1} parent=11 // pred_check_branch
          %242 = sbr.rel (%p240) target = $region24
        $region23: #{tpu_custom_call.1} parent=11 // pred_region
          _
        $region24: #{tpu_custom_call.1} parent=11 // pred_fallthru
          _
        // Predicated region
        $region25: #{tpu_custom_call.1} parent=11 // pred_check
          %p243 = pneg %p149
        $region26: #{tpu_custom_call.1} parent=11 // pred_check_branch
          %245 = sbr.rel (%p243) target = $region28
        $region27: #{tpu_custom_call.1} parent=11 // pred_region
          _
        $region28: #{tpu_custom_call.1} parent=11 // pred_fallthru
          _
        // Predicated region
        $region29: #{tpu_custom_call.1} parent=11 // pred_check
          %p246 = pneg %p170
        $region30: #{tpu_custom_call.1} parent=11 // pred_check_branch
          %248 = sbr.rel (%p246) target = $region32
        $region31: #{tpu_custom_call.1} parent=11 // pred_region
          _
        $region32: #{tpu_custom_call.1} parent=11 // pred_fallthru
          _
        // Predicated region
        $region33: #{tpu_custom_call.1} parent=11 // pred_check
          %p249 = pneg %p191
        $region34: #{tpu_custom_call.1} parent=11 // pred_check_branch
          %251 = sbr.rel (%p249) target = $region36
        $region35: #{tpu_custom_call.1} parent=11 // pred_region
          _
        $region36: #{tpu_custom_call.1} parent=11 // pred_fallthru
          _
      $region12: #{tpu_custom_call.1} parent=5 // pred_fallthru
        _
      %p252 = scmp.lt.s32.totalorder %s16, 2
      // Predicated region
      $region37: #{tpu_custom_call.1} parent=5 // pred_check
        %p253 = pneg %p252
      $region38: #{tpu_custom_call.1} parent=5 // pred_check_branch
        %255 = sbr.rel (%p253) target = $region40
      $region39: #{tpu_custom_call.1} parent=5 // pred_region
        // Predicated region
        $region41: #{tpu_custom_call.1} parent=39 // pred_check
          %p256 = pneg %p59
        $region42: #{tpu_custom_call.1} parent=39 // pred_check_branch
          %258 = sbr.rel (%p256) target = $region44
        $region43: #{tpu_custom_call.1} parent=39 // pred_region
          %s259 = sadd.s32 %s24, %s25
          %s260 = smul.u32 64, %s259
          %p261 = scmp.lt.s32.totalorder %s23, 1
          %s262 = scalar_select %p261, %s23, 1
          %p263 = scmp.lt.s32.totalorder %s260, 63
          %s264 = scalar_select %p263, %s260, 63
          %s265 = smul.addr %s262, 64
          %s266 = sadd.s32 %s264, %s265
          %s267 = smul.addr %s266, 8
          %s268 = scalar_lea.vmem %s0, %s267
          %s269 = sadd.s32 %s24, %s25
          %s270 = smul.u32 64, %s269
        $region44: #{tpu_custom_call.1} parent=39 // pred_fallthru
          _
      $region40: #{tpu_custom_call.1} parent=5 // pred_fallthru
        _
      %p271 = scmp.le.s32.totalorder 1, %s16
      %p272 = scmp.lt.s32.totalorder %s16, 3
      %p273 = pnand %p271, %p272
      %p274 = pneg %p273
      // Predicated region
      $region45: #{tpu_custom_call.1} parent=5 // pred_check
        _
      $region46: #{tpu_custom_call.1} parent=5 // pred_check_branch
        %276 = sbr.rel (%p273) target = $region48
      $region47: #{tpu_custom_call.1} parent=5 // pred_region
        %s277 = ssub.s32 %s16, 1
        %s278 = sadd.s32 %s27, %s28
        %s279 = smul.u32 64, %s278
        %p280 = scmp.lt.s32.totalorder %s26, 1
        %s281 = scalar_select %p280, %s26, 1
        %p282 = scmp.lt.s32.totalorder %s279, 63
        %s283 = scalar_select %p282, %s279, 63
        %s284 = smul.addr %s281, 64
        %s285 = sadd.s32 %s283, %s284
        %s286 = smul.addr %s285, 8
        %s287 = scalar_lea.vmem %s0, %s286
        %p288 = pneg %p65
        %p289 = pneg %p62
        %p290 = pneg %p86
        %p291 = pneg %p83
        %p292 = pneg %p107
        %p293 = pneg %p104
        %p294 = pneg %p128
        %p295 = pneg %p125
        %p296 = pneg %p149
        %p297 = pneg %p146
        %p298 = pneg %p170
        %p299 = pneg %p167
        %p300 = pneg %p191
        %p301 = pneg %p188
        %p302 = pneg %p219
        %p303 = pneg %p216
        %s304 = sand.u32 %s206, 1
        %s305 = scalar_lea.sflag [#allocation4], %s304
        %s306 = sand.u32 %s206, 1
        %s307 = smul.addr %s306, 8
        %s308 = scalar_lea.vmem [#allocation3], %s307
        %s309 = sadd.s32 %s27, %s28
        %s310 = smul.u32 64, %s309
        %p311 = scmp.lt.s32.totalorder %s26, 1
        %s312 = scalar_select %p311, %s26, 1
        %p313 = scmp.lt.s32.totalorder %s310, 63
        %s314 = scalar_select %p313, %s310, 63
        %s315 = smul.addr %s312, 64
        %s316 = sadd.s32 %s314, %s315
        %s317 = smul.addr %s316, 8
        %s318 = scalar_lea.vmem %s0, %s317
        %s319 = sadd.s32 %s27, %s28
        %s320 = smul.u32 64, %s319
        %p322 = scmp.eq.s32.totalorder %s28, 0
        // Predicated region
        $region49: #{tpu_custom_call.1} parent=47 // pred_check
          %p323 = pneg %p322
        $region50: #{tpu_custom_call.1} parent=47 // pred_check_branch
          %325 = sbr.rel (%p323) target = $region52
        $region51: #{tpu_custom_call.1} parent=47 // pred_region
          %326 = vst [vmem:[#allocation2] sm:$0xff] -inf
          %327 = vst [vmem:[#allocation2 + $0x8] sm:$0xff] -inf
          %328 = vst [vmem:[#allocation2 + $0x10] sm:$0xff] -inf
          %329 = vst [vmem:[#allocation2 + $0x18] sm:$0xff] -inf
          %330 = vst [vmem:[#allocation2 + $0x20] sm:$0xff] -inf
          %331 = vst [vmem:[#allocation2 + $0x28] sm:$0xff] -inf
          %332 = vst [vmem:[#allocation2 + $0x30] sm:$0xff] -inf
          %333 = vst [vmem:[#allocation2 + $0x38] sm:$0xff] -inf
        $region52: #{tpu_custom_call.1} parent=47 // pred_fallthru
          _
        %v334 = vld [vmem:[%s318] sm:$0xff]
        %v335 = vld [vmem:[%s318 + $0x8] sm:$0xff]
        %v336 = vld [vmem:[%s318 + $0x10] sm:$0xff]
        %v337 = vld [vmem:[%s318 + $0x18] sm:$0xff]
        %v338 = vld [vmem:[%s318 + $0x20] sm:$0xff]
        %v339 = vld [vmem:[%s318 + $0x28] sm:$0xff]
        %v340 = vld [vmem:[%s318 + $0x30] sm:$0xff]
        %v341 = vld [vmem:[%s318 + $0x38] sm:$0xff]
        %v342 = vld [vmem:[%s318 + $0x40] sm:$0xff]
        %v343 = vld [vmem:[%s318 + $0x48] sm:$0xff]
        %v344 = vld [vmem:[%s318 + $0x50] sm:$0xff]
        %v345 = vld [vmem:[%s318 + $0x58] sm:$0xff]
        %v346 = vld [vmem:[%s318 + $0x60] sm:$0xff]
        %v347 = vld [vmem:[%s318 + $0x68] sm:$0xff]
        %v348 = vld [vmem:[%s318 + $0x70] sm:$0xff]
        %v349 = vld [vmem:[%s318 + $0x78] sm:$0xff]
        %v350 = vld [vmem:[%s318 + $0x80] sm:$0xff]
        %v351 = vld [vmem:[%s318 + $0x88] sm:$0xff]
        %v352 = vld [vmem:[%s318 + $0x90] sm:$0xff]
        %v353 = vld [vmem:[%s318 + $0x98] sm:$0xff]
        %v354 = vld [vmem:[%s318 + $0xa0] sm:$0xff]
        %v355 = vld [vmem:[%s318 + $0xa8] sm:$0xff]
        %v356 = vld [vmem:[%s318 + $0xb0] sm:$0xff]
        %v357 = vld [vmem:[%s318 + $0xb8] sm:$0xff]
        %v358 = vld [vmem:[%s318 + $0xc0] sm:$0xff]
        %v359 = vld [vmem:[%s318 + $0xc8] sm:$0xff]
        %v360 = vld [vmem:[%s318 + $0xd0] sm:$0xff]
        %v361 = vld [vmem:[%s318 + $0xd8] sm:$0xff]
        %v362 = vld [vmem:[%s318 + $0xe0] sm:$0xff]
        %v363 = vld [vmem:[%s318 + $0xe8] sm:$0xff]
        %v364 = vld [vmem:[%s318 + $0xf0] sm:$0xff]
        %v365 = vld [vmem:[%s318 + $0xf8] sm:$0xff]
        %v366 = vld [vmem:[%s318 + $0x100] sm:$0xff]
        %v367 = vld [vmem:[%s318 + $0x108] sm:$0xff]
        %v368 = vld [vmem:[%s318 + $0x110] sm:$0xff]
        %v369 = vld [vmem:[%s318 + $0x118] sm:$0xff]
        %v370 = vld [vmem:[%s318 + $0x120] sm:$0xff]
        %v371 = vld [vmem:[%s318 + $0x128] sm:$0xff]
        %v372 = vld [vmem:[%s318 + $0x130] sm:$0xff]
        %v373 = vld [vmem:[%s318 + $0x138] sm:$0xff]
        %v374 = vld [vmem:[%s318 + $0x140] sm:$0xff]
        %v375 = vld [vmem:[%s318 + $0x148] sm:$0xff]
        %v376 = vld [vmem:[%s318 + $0x150] sm:$0xff]
        %v377 = vld [vmem:[%s318 + $0x158] sm:$0xff]
        %v378 = vld [vmem:[%s318 + $0x160] sm:$0xff]
        %v379 = vld [vmem:[%s318 + $0x168] sm:$0xff]
        %v380 = vld [vmem:[%s318 + $0x170] sm:$0xff]
        %v381 = vld [vmem:[%s318 + $0x178] sm:$0xff]
        %v382 = vld [vmem:[%s318 + $0x180] sm:$0xff]
        %v383 = vld [vmem:[%s318 + $0x188] sm:$0xff]
        %v384 = vld [vmem:[%s318 + $0x190] sm:$0xff]
        %v385 = vld [vmem:[%s318 + $0x198] sm:$0xff]
        %v386 = vld [vmem:[%s318 + $0x1a0] sm:$0xff]
        %v387 = vld [vmem:[%s318 + $0x1a8] sm:$0xff]
        %v388 = vld [vmem:[%s318 + $0x1b0] sm:$0xff]
        %v389 = vld [vmem:[%s318 + $0x1b8] sm:$0xff]
        %v390 = vld [vmem:[%s318 + $0x1c0] sm:$0xff]
        %v391 = vld [vmem:[%s318 + $0x1c8] sm:$0xff]
        %v392 = vld [vmem:[%s318 + $0x1d0] sm:$0xff]
        %v393 = vld [vmem:[%s318 + $0x1d8] sm:$0xff]
        %v394 = vld [vmem:[%s318 + $0x1e0] sm:$0xff]
        %v395 = vld [vmem:[%s318 + $0x1e8] sm:$0xff]
        %v396 = vld [vmem:[%s318 + $0x1f0] sm:$0xff]
        %v397 = vld [vmem:[%s318 + $0x1f8] sm:$0xff]
        %v398 = vld [vmem:[%s1] sm:$0x7]
        %400 = vset.pattern.permute.xlu0 0
        %401 = vperm.xlu0 %400, %v334
        %v402 = vpop.permute.xlu0 %401
        %405 = vset.pattern.permute.xlu0 0
        %406 = vperm.xlu0 %405, %v335
        %v407 = vpop.permute.xlu0 %406
        %410 = vset.pattern.permute.xlu0 0
        %411 = vperm.xlu0 %410, %v336
        %v412 = vpop.permute.xlu0 %411
        %415 = vset.pattern.permute.xlu0 0
        %416 = vperm.xlu0 %415, %v337
        %v417 = vpop.permute.xlu0 %416
        %420 = vset.pattern.permute.xlu0 0
        %421 = vperm.xlu0 %420, %v338
        %v422 = vpop.permute.xlu0 %421
        %425 = vset.pattern.permute.xlu0 0
        %426 = vperm.xlu0 %425, %v339
        %v427 = vpop.permute.xlu0 %426
        %430 = vset.pattern.permute.xlu0 0
        %431 = vperm.xlu0 %430, %v340
        %v432 = vpop.permute.xlu0 %431
        %435 = vset.pattern.permute.xlu0 0
        %436 = vperm.xlu0 %435, %v341
        %v437 = vpop.permute.xlu0 %436
        %440 = vset.pattern.permute.xlu0 0
        %441 = vperm.xlu0 %440, %v342
        %v442 = vpop.permute.xlu0 %441
        %445 = vset.pattern.permute.xlu0 0
        %446 = vperm.xlu0 %445, %v343
        %v447 = vpop.permute.xlu0 %446
        %450 = vset.pattern.permute.xlu0 0
        %451 = vperm.xlu0 %450, %v344
        %v452 = vpop.permute.xlu0 %451
        %455 = vset.pattern.permute.xlu0 0
        %456 = vperm.xlu0 %455, %v345
        %v457 = vpop.permute.xlu0 %456
        %460 = vset.pattern.permute.xlu0 0
        %461 = vperm.xlu0 %460, %v346
        %v462 = vpop.permute.xlu0 %461
        %465 = vset.pattern.permute.xlu0 0
        %466 = vperm.xlu0 %465, %v347
        %v467 = vpop.permute.xlu0 %466
        %470 = vset.pattern.permute.xlu0 0
        %471 = vperm.xlu0 %470, %v348
        %v472 = vpop.permute.xlu0 %471
        %475 = vset.pattern.permute.xlu0 0
        %476 = vperm.xlu0 %475, %v349
        %v477 = vpop.permute.xlu0 %476
        %480 = vset.pattern.permute.xlu0 0
        %481 = vperm.xlu0 %480, %v350
        %v482 = vpop.permute.xlu0 %481
        %485 = vset.pattern.permute.xlu0 0
        %486 = vperm.xlu0 %485, %v351
        %v487 = vpop.permute.xlu0 %486
        %490 = vset.pattern.permute.xlu0 0
        %491 = vperm.xlu0 %490, %v352
        %v492 = vpop.permute.xlu0 %491
        %495 = vset.pattern.permute.xlu0 0
        %496 = vperm.xlu0 %495, %v353
        %v497 = vpop.permute.xlu0 %496
        %500 = vset.pattern.permute.xlu0 0
        %501 = vperm.xlu0 %500, %v354
        %v502 = vpop.permute.xlu0 %501
        %505 = vset.pattern.permute.xlu0 0
        %506 = vperm.xlu0 %505, %v355
        %v507 = vpop.permute.xlu0 %506
        %510 = vset.pattern.permute.xlu0 0
        %511 = vperm.xlu0 %510, %v356
        %v512 = vpop.permute.xlu0 %511
        %515 = vset.pattern.permute.xlu0 0
        %516 = vperm.xlu0 %515, %v357
        %v517 = vpop.permute.xlu0 %516
        %520 = vset.pattern.permute.xlu0 0
        %521 = vperm.xlu0 %520, %v358
        %v522 = vpop.permute.xlu0 %521
        %525 = vset.pattern.permute.xlu0 0
        %526 = vperm.xlu0 %525, %v359
        %v527 = vpop.permute.xlu0 %526
        %530 = vset.pattern.permute.xlu0 0
        %531 = vperm.xlu0 %530, %v360
        %v532 = vpop.permute.xlu0 %531
        %535 = vset.pattern.permute.xlu0 0
        %536 = vperm.xlu0 %535, %v361
        %v537 = vpop.permute.xlu0 %536
        %540 = vset.pattern.permute.xlu0 0
        %541 = vperm.xlu0 %540, %v362
        %v542 = vpop.permute.xlu0 %541
        %545 = vset.pattern.permute.xlu0 0
        %546 = vperm.xlu0 %545, %v363
        %v547 = vpop.permute.xlu0 %546
        %550 = vset.pattern.permute.xlu0 0
        %551 = vperm.xlu0 %550, %v364
        %v552 = vpop.permute.xlu0 %551
        %555 = vset.pattern.permute.xlu0 0
        %556 = vperm.xlu0 %555, %v365
        %v557 = vpop.permute.xlu0 %556
        %560 = vset.pattern.permute.xlu0 0
        %561 = vperm.xlu0 %560, %v366
        %v562 = vpop.permute.xlu0 %561
        %565 = vset.pattern.permute.xlu0 0
        %566 = vperm.xlu0 %565, %v367
        %v567 = vpop.permute.xlu0 %566
        %570 = vset.pattern.permute.xlu0 0
        %571 = vperm.xlu0 %570, %v368
        %v572 = vpop.permute.xlu0 %571
        %575 = vset.pattern.permute.xlu0 0
        %576 = vperm.xlu0 %575, %v369
        %v577 = vpop.permute.xlu0 %576
        %580 = vset.pattern.permute.xlu0 0
        %581 = vperm.xlu0 %580, %v370
        %v582 = vpop.permute.xlu0 %581
        %585 = vset.pattern.permute.xlu0 0
        %586 = vperm.xlu0 %585, %v371
        %v587 = vpop.permute.xlu0 %586
        %590 = vset.pattern.permute.xlu0 0
        %591 = vperm.xlu0 %590, %v372
        %v592 = vpop.permute.xlu0 %591
        %595 = vset.pattern.permute.xlu0 0
        %596 = vperm.xlu0 %595, %v373
        %v597 = vpop.permute.xlu0 %596
        %600 = vset.pattern.permute.xlu0 0
        %601 = vperm.xlu0 %600, %v374
        %v602 = vpop.permute.xlu0 %601
        %605 = vset.pattern.permute.xlu0 0
        %606 = vperm.xlu0 %605, %v375
        %v607 = vpop.permute.xlu0 %606
        %610 = vset.pattern.permute.xlu0 0
        %611 = vperm.xlu0 %610, %v376
        %v612 = vpop.permute.xlu0 %611
        %615 = vset.pattern.permute.xlu0 0
        %616 = vperm.xlu0 %615, %v377
        %v617 = vpop.permute.xlu0 %616
        %620 = vset.pattern.permute.xlu0 0
        %621 = vperm.xlu0 %620, %v378
        %v622 = vpop.permute.xlu0 %621
        %625 = vset.pattern.permute.xlu0 0
        %626 = vperm.xlu0 %625, %v379
        %v627 = vpop.permute.xlu0 %626
        %630 = vset.pattern.permute.xlu0 0
        %631 = vperm.xlu0 %630, %v380
        %v632 = vpop.permute.xlu0 %631
        %635 = vset.pattern.permute.xlu0 0
        %636 = vperm.xlu0 %635, %v381
        %v637 = vpop.permute.xlu0 %636
        %640 = vset.pattern.permute.xlu0 0
        %641 = vperm.xlu0 %640, %v382
        %v642 = vpop.permute.xlu0 %641
        %645 = vset.pattern.permute.xlu0 0
        %646 = vperm.xlu0 %645, %v383
        %v647 = vpop.permute.xlu0 %646
        %650 = vset.pattern.permute.xlu0 0
        %651 = vperm.xlu0 %650, %v384
        %v652 = vpop.permute.xlu0 %651
        %655 = vset.pattern.permute.xlu0 0
        %656 = vperm.xlu0 %655, %v385
        %v657 = vpop.permute.xlu0 %656
        %660 = vset.pattern.permute.xlu0 0
        %661 = vperm.xlu0 %660, %v386
        %v662 = vpop.permute.xlu0 %661
        %665 = vset.pattern.permute.xlu0 0
        %666 = vperm.xlu0 %665, %v387
        %v667 = vpop.permute.xlu0 %666
        %670 = vset.pattern.permute.xlu0 0
        %671 = vperm.xlu0 %670, %v388
        %v672 = vpop.permute.xlu0 %671
        %675 = vset.pattern.permute.xlu0 0
        %676 = vperm.xlu0 %675, %v389
        %v677 = vpop.permute.xlu0 %676
        %680 = vset.pattern.permute.xlu0 0
        %681 = vperm.xlu0 %680, %v390
        %v682 = vpop.permute.xlu0 %681
        %685 = vset.pattern.permute.xlu0 0
        %686 = vperm.xlu0 %685, %v391
        %v687 = vpop.permute.xlu0 %686
        %690 = vset.pattern.permute.xlu0 0
        %691 = vperm.xlu0 %690, %v392
        %v692 = vpop.permute.xlu0 %691
        %695 = vset.pattern.permute.xlu0 0
        %696 = vperm.xlu0 %695, %v393
        %v697 = vpop.permute.xlu0 %696
        %700 = vset.pattern.permute.xlu0 0
        %701 = vperm.xlu0 %700, %v394
        %v702 = vpop.permute.xlu0 %701
        %705 = vset.pattern.permute.xlu0 0
        %706 = vperm.xlu0 %705, %v395
        %v707 = vpop.permute.xlu0 %706
        %710 = vset.pattern.permute.xlu0 0
        %711 = vperm.xlu0 %710, %v396
        %v712 = vpop.permute.xlu0 %711
        %715 = vset.pattern.permute.xlu0 0
        %716 = vperm.xlu0 %715, %v397
        %v717 = vpop.permute.xlu0 %716
        %v719 = vlaneseq
        %v720 = vshrl.u32 %v719, 7
        %v721 = vsub.s32 0, %v720
        %v722 = vrot.slane %v398, %v721
        %v723 = vmul.f32 %v402, %v722
        %v724 = vmul.f32 %v407, %v722
        %v725 = vmul.f32 %v412, %v722
        %v726 = vmul.f32 %v417, %v722
        %v727 = vmul.f32 %v422, %v722
        %v728 = vmul.f32 %v427, %v722
        %v729 = vmul.f32 %v432, %v722
        %v730 = vmul.f32 %v437, %v722
        %v731 = vmul.f32 %v442, %v722
        %v732 = vmul.f32 %v447, %v722
        %v733 = vmul.f32 %v452, %v722
        %v734 = vmul.f32 %v457, %v722
        %v735 = vmul.f32 %v462, %v722
        %v736 = vmul.f32 %v467, %v722
        %v737 = vmul.f32 %v472, %v722
        %v738 = vmul.f32 %v477, %v722
        %v739 = vmul.f32 %v482, %v722
        %v740 = vmul.f32 %v487, %v722
        %v741 = vmul.f32 %v492, %v722
        %v742 = vmul.f32 %v497, %v722
        %v743 = vmul.f32 %v502, %v722
        %v744 = vmul.f32 %v507, %v722
        %v745 = vmul.f32 %v512, %v722
        %v746 = vmul.f32 %v517, %v722
        %v747 = vmul.f32 %v522, %v722
        %v748 = vmul.f32 %v527, %v722
        %v749 = vmul.f32 %v532, %v722
        %v750 = vmul.f32 %v537, %v722
        %v751 = vmul.f32 %v542, %v722
        %v752 = vmul.f32 %v547, %v722
        %v753 = vmul.f32 %v552, %v722
        %v754 = vmul.f32 %v557, %v722
        %v755 = vmul.f32 %v562, %v722
        %v756 = vmul.f32 %v567, %v722
        %v757 = vmul.f32 %v572, %v722
        %v758 = vmul.f32 %v577, %v722
        %v759 = vmul.f32 %v582, %v722
        %v760 = vmul.f32 %v587, %v722
        %v761 = vmul.f32 %v592, %v722
        %v762 = vmul.f32 %v597, %v722
        %v763 = vmul.f32 %v602, %v722
        %v764 = vmul.f32 %v607, %v722
        %v765 = vmul.f32 %v612, %v722
        %v766 = vmul.f32 %v617, %v722
        %v767 = vmul.f32 %v622, %v722
        %v768 = vmul.f32 %v627, %v722
        %v769 = vmul.f32 %v632, %v722
        %v770 = vmul.f32 %v637, %v722
        %v771 = vmul.f32 %v642, %v722
        %v772 = vmul.f32 %v647, %v722
        %v773 = vmul.f32 %v652, %v722
        %v774 = vmul.f32 %v657, %v722
        %v775 = vmul.f32 %v662, %v722
        %v776 = vmul.f32 %v667, %v722
        %v777 = vmul.f32 %v672, %v722
        %v778 = vmul.f32 %v677, %v722
        %v779 = vmul.f32 %v682, %v722
        %v780 = vmul.f32 %v687, %v722
        %v781 = vmul.f32 %v692, %v722
        %v782 = vmul.f32 %v697, %v722
        %v783 = vmul.f32 %v702, %v722
        %v784 = vmul.f32 %v707, %v722
        %v785 = vmul.f32 %v712, %v722
        %v786 = vmul.f32 %v717, %v722
        %787 = vset.pattern.permute.xlu0 1
        %788 = vperm.xlu0 %787, %v334
        %v789 = vpop.permute.xlu0 %788
        %791 = vset.pattern.permute.xlu0 1
        %792 = vperm.xlu0 %791, %v335
        %v793 = vpop.permute.xlu0 %792
        %795 = vset.pattern.permute.xlu0 1
        %796 = vperm.xlu0 %795, %v336
        %v797 = vpop.permute.xlu0 %796
        %799 = vset.pattern.permute.xlu0 1
        %800 = vperm.xlu0 %799, %v337
        %v801 = vpop.permute.xlu0 %800
        %803 = vset.pattern.permute.xlu0 1
        %804 = vperm.xlu0 %803, %v338
        %v805 = vpop.permute.xlu0 %804
        %807 = vset.pattern.permute.xlu0 1
        %808 = vperm.xlu0 %807, %v339
        %v809 = vpop.permute.xlu0 %808
        %811 = vset.pattern.permute.xlu0 1
        %812 = vperm.xlu0 %811, %v340
        %v813 = vpop.permute.xlu0 %812
        %815 = vset.pattern.permute.xlu0 1
        %816 = vperm.xlu0 %815, %v341
        %v817 = vpop.permute.xlu0 %816
        %819 = vset.pattern.permute.xlu0 1
        %820 = vperm.xlu0 %819, %v342
        %v821 = vpop.permute.xlu0 %820
        %823 = vset.pattern.permute.xlu0 1
        %824 = vperm.xlu0 %823, %v343
        %v825 = vpop.permute.xlu0 %824
        %827 = vset.pattern.permute.xlu0 1
        %828 = vperm.xlu0 %827, %v344
        %v829 = vpop.permute.xlu0 %828
        %831 = vset.pattern.permute.xlu0 1
        %832 = vperm.xlu0 %831, %v345
        %v833 = vpop.permute.xlu0 %832
        %835 = vset.pattern.permute.xlu0 1
        %836 = vperm.xlu0 %835, %v346
        %v837 = vpop.permute.xlu0 %836
        %839 = vset.pattern.permute.xlu0 1
        %840 = vperm.xlu0 %839, %v347
        %v841 = vpop.permute.xlu0 %840
        %843 = vset.pattern.permute.xlu0 1
        %844 = vperm.xlu0 %843, %v348
        %v845 = vpop.permute.xlu0 %844
        %847 = vset.pattern.permute.xlu0 1
        %848 = vperm.xlu0 %847, %v349
        %v849 = vpop.permute.xlu0 %848
        %851 = vset.pattern.permute.xlu0 1
        %852 = vperm.xlu0 %851, %v350
        %v853 = vpop.permute.xlu0 %852
        %855 = vset.pattern.permute.xlu0 1
        %856 = vperm.xlu0 %855, %v351
        %v857 = vpop.permute.xlu0 %856
        %859 = vset.pattern.permute.xlu0 1
        %860 = vperm.xlu0 %859, %v352
        %v861 = vpop.permute.xlu0 %860
        %863 = vset.pattern.permute.xlu0 1
        %864 = vperm.xlu0 %863, %v353
        %v865 = vpop.permute.xlu0 %864
        %867 = vset.pattern.permute.xlu0 1
        %868 = vperm.xlu0 %867, %v354
        %v869 = vpop.permute.xlu0 %868
        %871 = vset.pattern.permute.xlu0 1
        %872 = vperm.xlu0 %871, %v355
        %v873 = vpop.permute.xlu0 %872
        %875 = vset.pattern.permute.xlu0 1
        %876 = vperm.xlu0 %875, %v356
        %v877 = vpop.permute.xlu0 %876
        %879 = vset.pattern.permute.xlu0 1
        %880 = vperm.xlu0 %879, %v357
        %v881 = vpop.permute.xlu0 %880
        %883 = vset.pattern.permute.xlu0 1
        %884 = vperm.xlu0 %883, %v358
        %v885 = vpop.permute.xlu0 %884
        %887 = vset.pattern.permute.xlu0 1
        %888 = vperm.xlu0 %887, %v359
        %v889 = vpop.permute.xlu0 %888
        %891 = vset.pattern.permute.xlu0 1
        %892 = vperm.xlu0 %891, %v360
        %v893 = vpop.permute.xlu0 %892
        %895 = vset.pattern.permute.xlu0 1
        %896 = vperm.xlu0 %895, %v361
        %v897 = vpop.permute.xlu0 %896
        %899 = vset.pattern.permute.xlu0 1
        %900 = vperm.xlu0 %899, %v362
        %v901 = vpop.permute.xlu0 %900
        %903 = vset.pattern.permute.xlu0 1
        %904 = vperm.xlu0 %903, %v363
        %v905 = vpop.permute.xlu0 %904
        %907 = vset.pattern.permute.xlu0 1
        %908 = vperm.xlu0 %907, %v364
        %v909 = vpop.permute.xlu0 %908
        %911 = vset.pattern.permute.xlu0 1
        %912 = vperm.xlu0 %911, %v365
        %v913 = vpop.permute.xlu0 %912
        %915 = vset.pattern.permute.xlu0 1
        %916 = vperm.xlu0 %915, %v366
        %v917 = vpop.permute.xlu0 %916
        %919 = vset.pattern.permute.xlu0 1
        %920 = vperm.xlu0 %919, %v367
        %v921 = vpop.permute.xlu0 %920
        %923 = vset.pattern.permute.xlu0 1
        %924 = vperm.xlu0 %923, %v368
        %v925 = vpop.permute.xlu0 %924
        %927 = vset.pattern.permute.xlu0 1
        %928 = vperm.xlu0 %927, %v369
        %v929 = vpop.permute.xlu0 %928
        %931 = vset.pattern.permute.xlu0 1
        %932 = vperm.xlu0 %931, %v370
        %v933 = vpop.permute.xlu0 %932
        %935 = vset.pattern.permute.xlu0 1
        %936 = vperm.xlu0 %935, %v371
        %v937 = vpop.permute.xlu0 %936
        %939 = vset.pattern.permute.xlu0 1
        %940 = vperm.xlu0 %939, %v372
        %v941 = vpop.permute.xlu0 %940
        %943 = vset.pattern.permute.xlu0 1
        %944 = vperm.xlu0 %943, %v373
        %v945 = vpop.permute.xlu0 %944
        %947 = vset.pattern.permute.xlu0 1
        %948 = vperm.xlu0 %947, %v374
        %v949 = vpop.permute.xlu0 %948
        %951 = vset.pattern.permute.xlu0 1
        %952 = vperm.xlu0 %951, %v375
        %v953 = vpop.permute.xlu0 %952
        %955 = vset.pattern.permute.xlu0 1
        %956 = vperm.xlu0 %955, %v376
        %v957 = vpop.permute.xlu0 %956
        %959 = vset.pattern.permute.xlu0 1
        %960 = vperm.xlu0 %959, %v377
        %v961 = vpop.permute.xlu0 %960
        %963 = vset.pattern.permute.xlu0 1
        %964 = vperm.xlu0 %963, %v378
        %v965 = vpop.permute.xlu0 %964
        %967 = vset.pattern.permute.xlu0 1
        %968 = vperm.xlu0 %967, %v379
        %v969 = vpop.permute.xlu0 %968
        %971 = vset.pattern.permute.xlu0 1
        %972 = vperm.xlu0 %971, %v380
        %v973 = vpop.permute.xlu0 %972
        %975 = vset.pattern.permute.xlu0 1
        %976 = vperm.xlu0 %975, %v381
        %v977 = vpop.permute.xlu0 %976
        %979 = vset.pattern.permute.xlu0 1
        %980 = vperm.xlu0 %979, %v382
        %v981 = vpop.permute.xlu0 %980
        %983 = vset.pattern.permute.xlu0 1
        %984 = vperm.xlu0 %983, %v383
        %v985 = vpop.permute.xlu0 %984
        %987 = vset.pattern.permute.xlu0 1
        %988 = vperm.xlu0 %987, %v384
        %v989 = vpop.permute.xlu0 %988
        %991 = vset.pattern.permute.xlu0 1
        %992 = vperm.xlu0 %991, %v385
        %v993 = vpop.permute.xlu0 %992
        %995 = vset.pattern.permute.xlu0 1
        %996 = vperm.xlu0 %995, %v386
        %v997 = vpop.permute.xlu0 %996
        %999 = vset.pattern.permute.xlu0 1
        %1000 = vperm.xlu0 %999, %v387
        %v1001 = vpop.permute.xlu0 %1000
        %1003 = vset.pattern.permute.xlu0 1
        %1004 = vperm.xlu0 %1003, %v388
        %v1005 = vpop.permute.xlu0 %1004
        %1007 = vset.pattern.permute.xlu0 1
        %1008 = vperm.xlu0 %1007, %v389
        %v1009 = vpop.permute.xlu0 %1008
        %1011 = vset.pattern.permute.xlu0 1
        %1012 = vperm.xlu0 %1011, %v390
        %v1013 = vpop.permute.xlu0 %1012
        %1015 = vset.pattern.permute.xlu0 1
        %1016 = vperm.xlu0 %1015, %v391
        %v1017 = vpop.permute.xlu0 %1016
        %1019 = vset.pattern.permute.xlu0 1
        %1020 = vperm.xlu0 %1019, %v392
        %v1021 = vpop.permute.xlu0 %1020
        %1023 = vset.pattern.permute.xlu0 1
        %1024 = vperm.xlu0 %1023, %v393
        %v1025 = vpop.permute.xlu0 %1024
        %1027 = vset.pattern.permute.xlu0 1
        %1028 = vperm.xlu0 %1027, %v394
        %v1029 = vpop.permute.xlu0 %1028
        %1031 = vset.pattern.permute.xlu0 1
        %1032 = vperm.xlu0 %1031, %v395
        %v1033 = vpop.permute.xlu0 %1032
        %1035 = vset.pattern.permute.xlu0 1
        %1036 = vperm.xlu0 %1035, %v396
        %v1037 = vpop.permute.xlu0 %1036
        %1039 = vset.pattern.permute.xlu0 1
        %1040 = vperm.xlu0 %1039, %v397
        %v1041 = vpop.permute.xlu0 %1040
        %v1043 = vlaneseq
        %v1044 = vshrl.u32 %v1043, 7
        %v1045 = vsub.s32 1, %v1044
        %v1046 = vrot.slane %v398, %v1045
        %v1047 = vmul.f32 %v789, %v1046
        %v1048 = vmul.f32 %v793, %v1046
        %v1049 = vmul.f32 %v797, %v1046
        %v1050 = vmul.f32 %v801, %v1046
        %v1051 = vmul.f32 %v805, %v1046
        %v1052 = vmul.f32 %v809, %v1046
        %v1053 = vmul.f32 %v813, %v1046
        %v1054 = vmul.f32 %v817, %v1046
        %v1055 = vmul.f32 %v821, %v1046
        %v1056 = vmul.f32 %v825, %v1046
        %v1057 = vmul.f32 %v829, %v1046
        %v1058 = vmul.f32 %v833, %v1046
        %v1059 = vmul.f32 %v837, %v1046
        %v1060 = vmul.f32 %v841, %v1046
        %v1061 = vmul.f32 %v845, %v1046
        %v1062 = vmul.f32 %v849, %v1046
        %v1063 = vmul.f32 %v853, %v1046
        %v1064 = vmul.f32 %v857, %v1046
        %v1065 = vmul.f32 %v861, %v1046
        %v1066 = vmul.f32 %v865, %v1046
        %v1067 = vmul.f32 %v869, %v1046
        %v1068 = vmul.f32 %v873, %v1046
        %v1069 = vmul.f32 %v877, %v1046
        %v1070 = vmul.f32 %v881, %v1046
        %v1071 = vmul.f32 %v885, %v1046
        %v1072 = vmul.f32 %v889, %v1046
        %v1073 = vmul.f32 %v893, %v1046
        %v1074 = vmul.f32 %v897, %v1046
        %v1075 = vmul.f32 %v901, %v1046
        %v1076 = vmul.f32 %v905, %v1046
        %v1077 = vmul.f32 %v909, %v1046
        %v1078 = vmul.f32 %v913, %v1046
        %v1079 = vmul.f32 %v917, %v1046
        %v1080 = vmul.f32 %v921, %v1046
        %v1081 = vmul.f32 %v925, %v1046
        %v1082 = vmul.f32 %v929, %v1046
        %v1083 = vmul.f32 %v933, %v1046
        %v1084 = vmul.f32 %v937, %v1046
        %v1085 = vmul.f32 %v941, %v1046
        %v1086 = vmul.f32 %v945, %v1046
        %v1087 = vmul.f32 %v949, %v1046
        %v1088 = vmul.f32 %v953, %v1046
        %v1089 = vmul.f32 %v957, %v1046
        %v1090 = vmul.f32 %v961, %v1046
        %v1091 = vmul.f32 %v965, %v1046
        %v1092 = vmul.f32 %v969, %v1046
        %v1093 = vmul.f32 %v973, %v1046
        %v1094 = vmul.f32 %v977, %v1046
        %v1095 = vmul.f32 %v981, %v1046
        %v1096 = vmul.f32 %v985, %v1046
        %v1097 = vmul.f32 %v989, %v1046
        %v1098 = vmul.f32 %v993, %v1046
        %v1099 = vmul.f32 %v997, %v1046
        %v1100 = vmul.f32 %v1001, %v1046
        %v1101 = vmul.f32 %v1005, %v1046
        %v1102 = vmul.f32 %v1009, %v1046
        %v1103 = vmul.f32 %v1013, %v1046
        %v1104 = vmul.f32 %v1017, %v1046
        %v1105 = vmul.f32 %v1021, %v1046
        %v1106 = vmul.f32 %v1025, %v1046
        %v1107 = vmul.f32 %v1029, %v1046
        %v1108 = vmul.f32 %v1033, %v1046
        %v1109 = vmul.f32 %v1037, %v1046
        %v1110 = vmul.f32 %v1041, %v1046
        %v1111 = vadd.f32 %v723, %v1047
        %v1112 = vadd.f32 %v724, %v1048
        %v1113 = vadd.f32 %v725, %v1049
        %v1114 = vadd.f32 %v726, %v1050
        %v1115 = vadd.f32 %v727, %v1051
        %v1116 = vadd.f32 %v728, %v1052
        %v1117 = vadd.f32 %v729, %v1053
        %v1118 = vadd.f32 %v730, %v1054
        %v1119 = vadd.f32 %v731, %v1055
        %v1120 = vadd.f32 %v732, %v1056
        %v1121 = vadd.f32 %v733, %v1057
        %v1122 = vadd.f32 %v734, %v1058
        %v1123 = vadd.f32 %v735, %v1059
        %v1124 = vadd.f32 %v736, %v1060
        %v1125 = vadd.f32 %v737, %v1061
        %v1126 = vadd.f32 %v738, %v1062
        %v1127 = vadd.f32 %v739, %v1063
        %v1128 = vadd.f32 %v740, %v1064
        %v1129 = vadd.f32 %v741, %v1065
        %v1130 = vadd.f32 %v742, %v1066
        %v1131 = vadd.f32 %v743, %v1067
        %v1132 = vadd.f32 %v744, %v1068
        %v1133 = vadd.f32 %v745, %v1069
        %v1134 = vadd.f32 %v746, %v1070
        %v1135 = vadd.f32 %v747, %v1071
        %v1136 = vadd.f32 %v748, %v1072
        %v1137 = vadd.f32 %v749, %v1073
        %v1138 = vadd.f32 %v750, %v1074
        %v1139 = vadd.f32 %v751, %v1075
        %v1140 = vadd.f32 %v752, %v1076
        %v1141 = vadd.f32 %v753, %v1077
        %v1142 = vadd.f32 %v754, %v1078
        %v1143 = vadd.f32 %v755, %v1079
        %v1144 = vadd.f32 %v756, %v1080
        %v1145 = vadd.f32 %v757, %v1081
        %v1146 = vadd.f32 %v758, %v1082
        %v1147 = vadd.f32 %v759, %v1083
        %v1148 = vadd.f32 %v760, %v1084
        %v1149 = vadd.f32 %v761, %v1085
        %v1150 = vadd.f32 %v762, %v1086
        %v1151 = vadd.f32 %v763, %v1087
        %v1152 = vadd.f32 %v764, %v1088
        %v1153 = vadd.f32 %v765, %v1089
        %v1154 = vadd.f32 %v766, %v1090
        %v1155 = vadd.f32 %v767, %v1091
        %v1156 = vadd.f32 %v768, %v1092
        %v1157 = vadd.f32 %v769, %v1093
        %v1158 = vadd.f32 %v770, %v1094
        %v1159 = vadd.f32 %v771, %v1095
        %v1160 = vadd.f32 %v772, %v1096
        %v1161 = vadd.f32 %v773, %v1097
        %v1162 = vadd.f32 %v774, %v1098
        %v1163 = vadd.f32 %v775, %v1099
        %v1164 = vadd.f32 %v776, %v1100
        %v1165 = vadd.f32 %v777, %v1101
        %v1166 = vadd.f32 %v778, %v1102
        %v1167 = vadd.f32 %v779, %v1103
        %v1168 = vadd.f32 %v780, %v1104
        %v1169 = vadd.f32 %v781, %v1105
        %v1170 = vadd.f32 %v782, %v1106
        %v1171 = vadd.f32 %v783, %v1107
        %v1172 = vadd.f32 %v784, %v1108
        %v1173 = vadd.f32 %v785, %v1109
        %v1174 = vadd.f32 %v786, %v1110
        %1175 = vset.pattern.permute.xlu0 2
        %1176 = vperm.xlu0 %1175, %v334
        %v1177 = vpop.permute.xlu0 %1176
        %1179 = vset.pattern.permute.xlu0 2
        %1180 = vperm.xlu0 %1179, %v335
        %v1181 = vpop.permute.xlu0 %1180
        %1183 = vset.pattern.permute.xlu0 2
        %1184 = vperm.xlu0 %1183, %v336
        %v1185 = vpop.permute.xlu0 %1184
        %1187 = vset.pattern.permute.xlu0 2
        %1188 = vperm.xlu0 %1187, %v337
        %v1189 = vpop.permute.xlu0 %1188
        %1191 = vset.pattern.permute.xlu0 2
        %1192 = vperm.xlu0 %1191, %v338
        %v1193 = vpop.permute.xlu0 %1192
        %1195 = vset.pattern.permute.xlu0 2
        %1196 = vperm.xlu0 %1195, %v339
        %v1197 = vpop.permute.xlu0 %1196
        %1199 = vset.pattern.permute.xlu0 2
        %1200 = vperm.xlu0 %1199, %v340
        %v1201 = vpop.permute.xlu0 %1200
        %1203 = vset.pattern.permute.xlu0 2
        %1204 = vperm.xlu0 %1203, %v341
        %v1205 = vpop.permute.xlu0 %1204
        %1207 = vset.pattern.permute.xlu0 2
        %1208 = vperm.xlu0 %1207, %v342
        %v1209 = vpop.permute.xlu0 %1208
        %1211 = vset.pattern.permute.xlu0 2
        %1212 = vperm.xlu0 %1211, %v343
        %v1213 = vpop.permute.xlu0 %1212
        %1215 = vset.pattern.permute.xlu0 2
        %1216 = vperm.xlu0 %1215, %v344
        %v1217 = vpop.permute.xlu0 %1216
        %1219 = vset.pattern.permute.xlu0 2
        %1220 = vperm.xlu0 %1219, %v345
        %v1221 = vpop.permute.xlu0 %1220
        %1223 = vset.pattern.permute.xlu0 2
        %1224 = vperm.xlu0 %1223, %v346
        %v1225 = vpop.permute.xlu0 %1224
        %1227 = vset.pattern.permute.xlu0 2
        %1228 = vperm.xlu0 %1227, %v347
        %v1229 = vpop.permute.xlu0 %1228
        %1231 = vset.pattern.permute.xlu0 2
        %1232 = vperm.xlu0 %1231, %v348
        %v1233 = vpop.permute.xlu0 %1232
        %1235 = vset.pattern.permute.xlu0 2
        %1236 = vperm.xlu0 %1235, %v349
        %v1237 = vpop.permute.xlu0 %1236
        %1239 = vset.pattern.permute.xlu0 2
        %1240 = vperm.xlu0 %1239, %v350
        %v1241 = vpop.permute.xlu0 %1240
        %1243 = vset.pattern.permute.xlu0 2
        %1244 = vperm.xlu0 %1243, %v351
        %v1245 = vpop.permute.xlu0 %1244
        %1247 = vset.pattern.permute.xlu0 2
        %1248 = vperm.xlu0 %1247, %v352
        %v1249 = vpop.permute.xlu0 %1248
        %1251 = vset.pattern.permute.xlu0 2
        %1252 = vperm.xlu0 %1251, %v353
        %v1253 = vpop.permute.xlu0 %1252
        %1255 = vset.pattern.permute.xlu0 2
        %1256 = vperm.xlu0 %1255, %v354
        %v1257 = vpop.permute.xlu0 %1256
        %1259 = vset.pattern.permute.xlu0 2
        %1260 = vperm.xlu0 %1259, %v355
        %v1261 = vpop.permute.xlu0 %1260
        %1263 = vset.pattern.permute.xlu0 2
        %1264 = vperm.xlu0 %1263, %v356
        %v1265 = vpop.permute.xlu0 %1264
        %1267 = vset.pattern.permute.xlu0 2
        %1268 = vperm.xlu0 %1267, %v357
        %v1269 = vpop.permute.xlu0 %1268
        %1271 = vset.pattern.permute.xlu0 2
        %1272 = vperm.xlu0 %1271, %v358
        %v1273 = vpop.permute.xlu0 %1272
        %1275 = vset.pattern.permute.xlu0 2
        %1276 = vperm.xlu0 %1275, %v359
        %v1277 = vpop.permute.xlu0 %1276
        %1279 = vset.pattern.permute.xlu0 2
        %1280 = vperm.xlu0 %1279, %v360
        %v1281 = vpop.permute.xlu0 %1280
        %1283 = vset.pattern.permute.xlu0 2
        %1284 = vperm.xlu0 %1283, %v361
        %v1285 = vpop.permute.xlu0 %1284
        %1287 = vset.pattern.permute.xlu0 2
        %1288 = vperm.xlu0 %1287, %v362
        %v1289 = vpop.permute.xlu0 %1288
        %1291 = vset.pattern.permute.xlu0 2
        %1292 = vperm.xlu0 %1291, %v363
        %v1293 = vpop.permute.xlu0 %1292
        %1295 = vset.pattern.permute.xlu0 2
        %1296 = vperm.xlu0 %1295, %v364
        %v1297 = vpop.permute.xlu0 %1296
        %1299 = vset.pattern.permute.xlu0 2
        %1300 = vperm.xlu0 %1299, %v365
        %v1301 = vpop.permute.xlu0 %1300
        %1303 = vset.pattern.permute.xlu0 2
        %1304 = vperm.xlu0 %1303, %v366
        %v1305 = vpop.permute.xlu0 %1304
        %1307 = vset.pattern.permute.xlu0 2
        %1308 = vperm.xlu0 %1307, %v367
        %v1309 = vpop.permute.xlu0 %1308
        %1311 = vset.pattern.permute.xlu0 2
        %1312 = vperm.xlu0 %1311, %v368
        %v1313 = vpop.permute.xlu0 %1312
        %1315 = vset.pattern.permute.xlu0 2
        %1316 = vperm.xlu0 %1315, %v369
        %v1317 = vpop.permute.xlu0 %1316
        %1319 = vset.pattern.permute.xlu0 2
        %1320 = vperm.xlu0 %1319, %v370
        %v1321 = vpop.permute.xlu0 %1320
        %1323 = vset.pattern.permute.xlu0 2
        %1324 = vperm.xlu0 %1323, %v371
        %v1325 = vpop.permute.xlu0 %1324
        %1327 = vset.pattern.permute.xlu0 2
        %1328 = vperm.xlu0 %1327, %v372
        %v1329 = vpop.permute.xlu0 %1328
        %1331 = vset.pattern.permute.xlu0 2
        %1332 = vperm.xlu0 %1331, %v373
        %v1333 = vpop.permute.xlu0 %1332
        %1335 = vset.pattern.permute.xlu0 2
        %1336 = vperm.xlu0 %1335, %v374
        %v1337 = vpop.permute.xlu0 %1336
        %1339 = vset.pattern.permute.xlu0 2
        %1340 = vperm.xlu0 %1339, %v375
        %v1341 = vpop.permute.xlu0 %1340
        %1343 = vset.pattern.permute.xlu0 2
        %1344 = vperm.xlu0 %1343, %v376
        %v1345 = vpop.permute.xlu0 %1344
        %1347 = vset.pattern.permute.xlu0 2
        %1348 = vperm.xlu0 %1347, %v377
        %v1349 = vpop.permute.xlu0 %1348
        %1351 = vset.pattern.permute.xlu0 2
        %1352 = vperm.xlu0 %1351, %v378
        %v1353 = vpop.permute.xlu0 %1352
        %1355 = vset.pattern.permute.xlu0 2
        %1356 = vperm.xlu0 %1355, %v379
        %v1357 = vpop.permute.xlu0 %1356
        %1359 = vset.pattern.permute.xlu0 2
        %1360 = vperm.xlu0 %1359, %v380
        %v1361 = vpop.permute.xlu0 %1360
        %1363 = vset.pattern.permute.xlu0 2
        %1364 = vperm.xlu0 %1363, %v381
        %v1365 = vpop.permute.xlu0 %1364
        %1367 = vset.pattern.permute.xlu0 2
        %1368 = vperm.xlu0 %1367, %v382
        %v1369 = vpop.permute.xlu0 %1368
        %1371 = vset.pattern.permute.xlu0 2
        %1372 = vperm.xlu0 %1371, %v383
        %v1373 = vpop.permute.xlu0 %1372
        %1375 = vset.pattern.permute.xlu0 2
        %1376 = vperm.xlu0 %1375, %v384
        %v1377 = vpop.permute.xlu0 %1376
        %1379 = vset.pattern.permute.xlu0 2
        %1380 = vperm.xlu0 %1379, %v385
        %v1381 = vpop.permute.xlu0 %1380
        %1383 = vset.pattern.permute.xlu0 2
        %1384 = vperm.xlu0 %1383, %v386
        %v1385 = vpop.permute.xlu0 %1384
        %1387 = vset.pattern.permute.xlu0 2
        %1388 = vperm.xlu0 %1387, %v387
        %v1389 = vpop.permute.xlu0 %1388
        %1391 = vset.pattern.permute.xlu0 2
        %1392 = vperm.xlu0 %1391, %v388
        %v1393 = vpop.permute.xlu0 %1392
        %1395 = vset.pattern.permute.xlu0 2
        %1396 = vperm.xlu0 %1395, %v389
        %v1397 = vpop.permute.xlu0 %1396
        %1399 = vset.pattern.permute.xlu0 2
        %1400 = vperm.xlu0 %1399, %v390
        %v1401 = vpop.permute.xlu0 %1400
        %1403 = vset.pattern.permute.xlu0 2
        %1404 = vperm.xlu0 %1403, %v391
        %v1405 = vpop.permute.xlu0 %1404
        %1407 = vset.pattern.permute.xlu0 2
        %1408 = vperm.xlu0 %1407, %v392
        %v1409 = vpop.permute.xlu0 %1408
        %1411 = vset.pattern.permute.xlu0 2
        %1412 = vperm.xlu0 %1411, %v393
        %v1413 = vpop.permute.xlu0 %1412
        %1415 = vset.pattern.permute.xlu0 2
        %1416 = vperm.xlu0 %1415, %v394
        %v1417 = vpop.permute.xlu0 %1416
        %1419 = vset.pattern.permute.xlu0 2
        %1420 = vperm.xlu0 %1419, %v395
        %v1421 = vpop.permute.xlu0 %1420
        %1423 = vset.pattern.permute.xlu0 2
        %1424 = vperm.xlu0 %1423, %v396
        %v1425 = vpop.permute.xlu0 %1424
        %1427 = vset.pattern.permute.xlu0 2
        %1428 = vperm.xlu0 %1427, %v397
        %v1429 = vpop.permute.xlu0 %1428
        %v1431 = vlaneseq
        %v1432 = vshrl.u32 %v1431, 7
        %v1433 = vsub.s32 2, %v1432
        %v1434 = vrot.slane %v398, %v1433
        %v1435 = vmul.f32 %v1177, %v1434
        %v1436 = vmul.f32 %v1181, %v1434
        %v1437 = vmul.f32 %v1185, %v1434
        %v1438 = vmul.f32 %v1189, %v1434
        %v1439 = vmul.f32 %v1193, %v1434
        %v1440 = vmul.f32 %v1197, %v1434
        %v1441 = vmul.f32 %v1201, %v1434
        %v1442 = vmul.f32 %v1205, %v1434
        %v1443 = vmul.f32 %v1209, %v1434
        %v1444 = vmul.f32 %v1213, %v1434
        %v1445 = vmul.f32 %v1217, %v1434
        %v1446 = vmul.f32 %v1221, %v1434
        %v1447 = vmul.f32 %v1225, %v1434
        %v1448 = vmul.f32 %v1229, %v1434
        %v1449 = vmul.f32 %v1233, %v1434
        %v1450 = vmul.f32 %v1237, %v1434
        %v1451 = vmul.f32 %v1241, %v1434
        %v1452 = vmul.f32 %v1245, %v1434
        %v1453 = vmul.f32 %v1249, %v1434
        %v1454 = vmul.f32 %v1253, %v1434
        %v1455 = vmul.f32 %v1257, %v1434
        %v1456 = vmul.f32 %v1261, %v1434
        %v1457 = vmul.f32 %v1265, %v1434
        %v1458 = vmul.f32 %v1269, %v1434
        %v1459 = vmul.f32 %v1273, %v1434
        %v1460 = vmul.f32 %v1277, %v1434
        %v1461 = vmul.f32 %v1281, %v1434
        %v1462 = vmul.f32 %v1285, %v1434
        %v1463 = vmul.f32 %v1289, %v1434
        %v1464 = vmul.f32 %v1293, %v1434
        %v1465 = vmul.f32 %v1297, %v1434
        %v1466 = vmul.f32 %v1301, %v1434
        %v1467 = vmul.f32 %v1305, %v1434
        %v1468 = vmul.f32 %v1309, %v1434
        %v1469 = vmul.f32 %v1313, %v1434
        %v1470 = vmul.f32 %v1317, %v1434
        %v1471 = vmul.f32 %v1321, %v1434
        %v1472 = vmul.f32 %v1325, %v1434
        %v1473 = vmul.f32 %v1329, %v1434
        %v1474 = vmul.f32 %v1333, %v1434
        %v1475 = vmul.f32 %v1337, %v1434
        %v1476 = vmul.f32 %v1341, %v1434
        %v1477 = vmul.f32 %v1345, %v1434
        %v1478 = vmul.f32 %v1349, %v1434
        %v1479 = vmul.f32 %v1353, %v1434
        %v1480 = vmul.f32 %v1357, %v1434
        %v1481 = vmul.f32 %v1361, %v1434
        %v1482 = vmul.f32 %v1365, %v1434
        %v1483 = vmul.f32 %v1369, %v1434
        %v1484 = vmul.f32 %v1373, %v1434
        %v1485 = vmul.f32 %v1377, %v1434
        %v1486 = vmul.f32 %v1381, %v1434
        %v1487 = vmul.f32 %v1385, %v1434
        %v1488 = vmul.f32 %v1389, %v1434
        %v1489 = vmul.f32 %v1393, %v1434
        %v1490 = vmul.f32 %v1397, %v1434
        %v1491 = vmul.f32 %v1401, %v1434
        %v1492 = vmul.f32 %v1405, %v1434
        %v1493 = vmul.f32 %v1409, %v1434
        %v1494 = vmul.f32 %v1413, %v1434
        %v1495 = vmul.f32 %v1417, %v1434
        %v1496 = vmul.f32 %v1421, %v1434
        %v1497 = vmul.f32 %v1425, %v1434
        %v1498 = vmul.f32 %v1429, %v1434
        %v1499 = vadd.f32 %v1111, %v1435
        %v1500 = vadd.f32 %v1112, %v1436
        %v1501 = vadd.f32 %v1113, %v1437
        %v1502 = vadd.f32 %v1114, %v1438
        %v1503 = vadd.f32 %v1115, %v1439
        %v1504 = vadd.f32 %v1116, %v1440
        %v1505 = vadd.f32 %v1117, %v1441
        %v1506 = vadd.f32 %v1118, %v1442
        %v1507 = vadd.f32 %v1119, %v1443
        %v1508 = vadd.f32 %v1120, %v1444
        %v1509 = vadd.f32 %v1121, %v1445
        %v1510 = vadd.f32 %v1122, %v1446
        %v1511 = vadd.f32 %v1123, %v1447
        %v1512 = vadd.f32 %v1124, %v1448
        %v1513 = vadd.f32 %v1125, %v1449
        %v1514 = vadd.f32 %v1126, %v1450
        %v1515 = vadd.f32 %v1127, %v1451
        %v1516 = vadd.f32 %v1128, %v1452
        %v1517 = vadd.f32 %v1129, %v1453
        %v1518 = vadd.f32 %v1130, %v1454
        %v1519 = vadd.f32 %v1131, %v1455
        %v1520 = vadd.f32 %v1132, %v1456
        %v1521 = vadd.f32 %v1133, %v1457
        %v1522 = vadd.f32 %v1134, %v1458
        %v1523 = vadd.f32 %v1135, %v1459
        %v1524 = vadd.f32 %v1136, %v1460
        %v1525 = vadd.f32 %v1137, %v1461
        %v1526 = vadd.f32 %v1138, %v1462
        %v1527 = vadd.f32 %v1139, %v1463
        %v1528 = vadd.f32 %v1140, %v1464
        %v1529 = vadd.f32 %v1141, %v1465
        %v1530 = vadd.f32 %v1142, %v1466
        %v1531 = vadd.f32 %v1143, %v1467
        %v1532 = vadd.f32 %v1144, %v1468
        %v1533 = vadd.f32 %v1145, %v1469
        %v1534 = vadd.f32 %v1146, %v1470
        %v1535 = vadd.f32 %v1147, %v1471
        %v1536 = vadd.f32 %v1148, %v1472
        %v1537 = vadd.f32 %v1149, %v1473
        %v1538 = vadd.f32 %v1150, %v1474
        %v1539 = vadd.f32 %v1151, %v1475
        %v1540 = vadd.f32 %v1152, %v1476
        %v1541 = vadd.f32 %v1153, %v1477
        %v1542 = vadd.f32 %v1154, %v1478
        %v1543 = vadd.f32 %v1155, %v1479
        %v1544 = vadd.f32 %v1156, %v1480
        %v1545 = vadd.f32 %v1157, %v1481
        %v1546 = vadd.f32 %v1158, %v1482
        %v1547 = vadd.f32 %v1159, %v1483
        %v1548 = vadd.f32 %v1160, %v1484
        %v1549 = vadd.f32 %v1161, %v1485
        %v1550 = vadd.f32 %v1162, %v1486
        %v1551 = vadd.f32 %v1163, %v1487
        %v1552 = vadd.f32 %v1164, %v1488
        %v1553 = vadd.f32 %v1165, %v1489
        %v1554 = vadd.f32 %v1166, %v1490
        %v1555 = vadd.f32 %v1167, %v1491
        %v1556 = vadd.f32 %v1168, %v1492
        %v1557 = vadd.f32 %v1169, %v1493
        %v1558 = vadd.f32 %v1170, %v1494
        %v1559 = vadd.f32 %v1171, %v1495
        %v1560 = vadd.f32 %v1172, %v1496
        %v1561 = vadd.f32 %v1173, %v1497
        %v1562 = vadd.f32 %v1174, %v1498
        %v1563 = vld [vmem:[%s2] sm:$0x1]
        %v1565 = vlaneseq
        %v1566 = vshrl.u32 %v1565, 7
        %v1567 = vsub.s32 0, %v1566
        %v1568 = vrot.slane %v1563, %v1567
        %v1570 = vadd.f32 %v1499, %v1568
        %v1571 = vadd.f32 %v1500, %v1568
        %v1572 = vadd.f32 %v1501, %v1568
        %v1573 = vadd.f32 %v1502, %v1568
        %v1574 = vadd.f32 %v1503, %v1568
        %v1575 = vadd.f32 %v1504, %v1568
        %v1576 = vadd.f32 %v1505, %v1568
        %v1577 = vadd.f32 %v1506, %v1568
        %v1578 = vadd.f32 %v1507, %v1568
        %v1579 = vadd.f32 %v1508, %v1568
        %v1580 = vadd.f32 %v1509, %v1568
        %v1581 = vadd.f32 %v1510, %v1568
        %v1582 = vadd.f32 %v1511, %v1568
        %v1583 = vadd.f32 %v1512, %v1568
        %v1584 = vadd.f32 %v1513, %v1568
        %v1585 = vadd.f32 %v1514, %v1568
        %v1586 = vadd.f32 %v1515, %v1568
        %v1587 = vadd.f32 %v1516, %v1568
        %v1588 = vadd.f32 %v1517, %v1568
        %v1589 = vadd.f32 %v1518, %v1568
        %v1590 = vadd.f32 %v1519, %v1568
        %v1591 = vadd.f32 %v1520, %v1568
        %v1592 = vadd.f32 %v1521, %v1568
        %v1593 = vadd.f32 %v1522, %v1568
        %v1594 = vadd.f32 %v1523, %v1568
        %v1595 = vadd.f32 %v1524, %v1568
        %v1596 = vadd.f32 %v1525, %v1568
        %v1597 = vadd.f32 %v1526, %v1568
        %v1598 = vadd.f32 %v1527, %v1568
        %v1599 = vadd.f32 %v1528, %v1568
        %v1600 = vadd.f32 %v1529, %v1568
        %v1601 = vadd.f32 %v1530, %v1568
        %v1602 = vadd.f32 %v1531, %v1568
        %v1603 = vadd.f32 %v1532, %v1568
        %v1604 = vadd.f32 %v1533, %v1568
        %v1605 = vadd.f32 %v1534, %v1568
        %v1606 = vadd.f32 %v1535, %v1568
        %v1607 = vadd.f32 %v1536, %v1568
        %v1608 = vadd.f32 %v1537, %v1568
        %v1609 = vadd.f32 %v1538, %v1568
        %v1610 = vadd.f32 %v1539, %v1568
        %v1611 = vadd.f32 %v1540, %v1568
        %v1612 = vadd.f32 %v1541, %v1568
        %v1613 = vadd.f32 %v1542, %v1568
        %v1614 = vadd.f32 %v1543, %v1568
        %v1615 = vadd.f32 %v1544, %v1568
        %v1616 = vadd.f32 %v1545, %v1568
        %v1617 = vadd.f32 %v1546, %v1568
        %v1618 = vadd.f32 %v1547, %v1568
        %v1619 = vadd.f32 %v1548, %v1568
        %v1620 = vadd.f32 %v1549, %v1568
        %v1621 = vadd.f32 %v1550, %v1568
        %v1622 = vadd.f32 %v1551, %v1568
        %v1623 = vadd.f32 %v1552, %v1568
        %v1624 = vadd.f32 %v1553, %v1568
        %v1625 = vadd.f32 %v1554, %v1568
        %v1626 = vadd.f32 %v1555, %v1568
        %v1627 = vadd.f32 %v1556, %v1568
        %v1628 = vadd.f32 %v1557, %v1568
        %v1629 = vadd.f32 %v1558, %v1568
        %v1630 = vadd.f32 %v1559, %v1568
        %v1631 = vadd.f32 %v1560, %v1568
        %v1632 = vadd.f32 %v1561, %v1568
        %v1633 = vadd.f32 %v1562, %v1568
        %v1634 = vmax.f32 %v1570, 0.0
        %v1635 = vmax.f32 %v1571, 0.0
        %v1636 = vmax.f32 %v1572, 0.0
        %v1637 = vmax.f32 %v1573, 0.0
        %v1638 = vmax.f32 %v1574, 0.0
        %v1639 = vmax.f32 %v1575, 0.0
        %v1640 = vmax.f32 %v1576, 0.0
        %v1641 = vmax.f32 %v1577, 0.0
        %v1642 = vmax.f32 %v1578, 0.0
        %v1643 = vmax.f32 %v1579, 0.0
        %v1644 = vmax.f32 %v1580, 0.0
        %v1645 = vmax.f32 %v1581, 0.0
        %v1646 = vmax.f32 %v1582, 0.0
        %v1647 = vmax.f32 %v1583, 0.0
        %v1648 = vmax.f32 %v1584, 0.0
        %v1649 = vmax.f32 %v1585, 0.0
        %v1650 = vmax.f32 %v1586, 0.0
        %v1651 = vmax.f32 %v1587, 0.0
        %v1652 = vmax.f32 %v1588, 0.0
        %v1653 = vmax.f32 %v1589, 0.0
        %v1654 = vmax.f32 %v1590, 0.0
        %v1655 = vmax.f32 %v1591, 0.0
        %v1656 = vmax.f32 %v1592, 0.0
        %v1657 = vmax.f32 %v1593, 0.0
        %v1658 = vmax.f32 %v1594, 0.0
        %v1659 = vmax.f32 %v1595, 0.0
        %v1660 = vmax.f32 %v1596, 0.0
        %v1661 = vmax.f32 %v1597, 0.0
        %v1662 = vmax.f32 %v1598, 0.0
        %v1663 = vmax.f32 %v1599, 0.0
        %v1664 = vmax.f32 %v1600, 0.0
        %v1665 = vmax.f32 %v1601, 0.0
        %v1666 = vmax.f32 %v1602, 0.0
        %v1667 = vmax.f32 %v1603, 0.0
        %v1668 = vmax.f32 %v1604, 0.0
        %v1669 = vmax.f32 %v1605, 0.0
        %v1670 = vmax.f32 %v1606, 0.0
        %v1671 = vmax.f32 %v1607, 0.0
        %v1672 = vmax.f32 %v1608, 0.0
        %v1673 = vmax.f32 %v1609, 0.0
        %v1674 = vmax.f32 %v1610, 0.0
        %v1675 = vmax.f32 %v1611, 0.0
        %v1676 = vmax.f32 %v1612, 0.0
        %v1677 = vmax.f32 %v1613, 0.0
        %v1678 = vmax.f32 %v1614, 0.0
        %v1679 = vmax.f32 %v1615, 0.0
        %v1680 = vmax.f32 %v1616, 0.0
        %v1681 = vmax.f32 %v1617, 0.0
        %v1682 = vmax.f32 %v1618, 0.0
        %v1683 = vmax.f32 %v1619, 0.0
        %v1684 = vmax.f32 %v1620, 0.0
        %v1685 = vmax.f32 %v1621, 0.0
        %v1686 = vmax.f32 %v1622, 0.0
        %v1687 = vmax.f32 %v1623, 0.0
        %v1688 = vmax.f32 %v1624, 0.0
        %v1689 = vmax.f32 %v1625, 0.0
        %v1690 = vmax.f32 %v1626, 0.0
        %v1691 = vmax.f32 %v1627, 0.0
        %v1692 = vmax.f32 %v1628, 0.0
        %v1693 = vmax.f32 %v1629, 0.0
        %v1694 = vmax.f32 %v1630, 0.0
        %v1695 = vmax.f32 %v1631, 0.0
        %v1696 = vmax.f32 %v1632, 0.0
        %v1697 = vmax.f32 %v1633, 0.0
        %v1698 = vpack.c.bf16 %v1635, %v1634
        %v1699 = vpack.c.bf16 %v1637, %v1636
        %v1700 = vpack.c.bf16 %v1639, %v1638
        %v1701 = vpack.c.bf16 %v1641, %v1640
        %v1702 = vpack.c.bf16 %v1643, %v1642
        %v1703 = vpack.c.bf16 %v1645, %v1644
        %v1704 = vpack.c.bf16 %v1647, %v1646
        %v1705 = vpack.c.bf16 %v1649, %v1648
        %v1706 = vpack.c.bf16 %v1651, %v1650
        %v1707 = vpack.c.bf16 %v1653, %v1652
        %v1708 = vpack.c.bf16 %v1655, %v1654
        %v1709 = vpack.c.bf16 %v1657, %v1656
        %v1710 = vpack.c.bf16 %v1659, %v1658
        %v1711 = vpack.c.bf16 %v1661, %v1660
        %v1712 = vpack.c.bf16 %v1663, %v1662
        %v1713 = vpack.c.bf16 %v1665, %v1664
        %v1714 = vpack.c.bf16 %v1667, %v1666
        %v1715 = vpack.c.bf16 %v1669, %v1668
        %v1716 = vpack.c.bf16 %v1671, %v1670
        %v1717 = vpack.c.bf16 %v1673, %v1672
        %v1718 = vpack.c.bf16 %v1675, %v1674
        %v1719 = vpack.c.bf16 %v1677, %v1676
        %v1720 = vpack.c.bf16 %v1679, %v1678
        %v1721 = vpack.c.bf16 %v1681, %v1680
        %v1722 = vpack.c.bf16 %v1683, %v1682
        %v1723 = vpack.c.bf16 %v1685, %v1684
        %v1724 = vpack.c.bf16 %v1687, %v1686
        %v1725 = vpack.c.bf16 %v1689, %v1688
        %v1726 = vpack.c.bf16 %v1691, %v1690
        %v1727 = vpack.c.bf16 %v1693, %v1692
        %v1728 = vpack.c.bf16 %v1695, %v1694
        %v1729 = vpack.c.bf16 %v1697, %v1696
        %v1730 = vld [vmem:[%s3] sm:$0xf]
        %v1731 = vld [vmem:[%s3 + $0x4] sm:$0xf]
        %v1732 = vld [vmem:[%s3 + $0x8] sm:$0xf]
        %v1733 = vld [vmem:[%s3 + $0xc] sm:$0xf]
        %v1734 = vld [vmem:[%s3 + $0x10] sm:$0xf]
        %v1735 = vld [vmem:[%s3 + $0x14] sm:$0xf]
        %v1736 = vld [vmem:[%s3 + $0x18] sm:$0xf]
        %v1737 = vld [vmem:[%s3 + $0x1c] sm:$0xf]
        %v1738 = vld [vmem:[%s4] sm:$0x1]
        %v1740 = vlaneseq
        %v1741 = vshrl.u32 %v1740, 7
        %v1742 = vsub.s32 0, %v1741
        %v1743 = vrot.slane %v1738, %v1742
        %v1753 = vunpack.c.l.b16 %v1730
        %v1754 = vunpack.c.l.b16 %v1731
        %v1755 = vunpack.c.l.b16 %v1732
        %v1756 = vunpack.c.l.b16 %v1733
        %v1757 = vunpack.c.l.b16 %v1734
        %v1758 = vunpack.c.l.b16 %v1735
        %v1759 = vunpack.c.l.b16 %v1736
        %v1760 = vunpack.c.l.b16 %v1737
        %v1761 = vpack.c.b16 %v1754, %v1753
        %v1762 = vpack.c.b16 %v1756, %v1755
        %v1763 = vpack.c.b16 %v1758, %v1757
        %v1764 = vpack.c.b16 %v1760, %v1759
        %vm1769 = vcmask 523264
        %v1771 = vsel %vm1769, %v1698, 0
        %v1774 = vsel %vm1769, %v1699, 0
        %v1777 = vsel %vm1769, %v1700, 0
        %v1780 = vsel %vm1769, %v1701, 0
        %v1783 = vsel %vm1769, %v1702, 0
        %v1786 = vsel %vm1769, %v1703, 0
        %v1789 = vsel %vm1769, %v1704, 0
        %v1792 = vsel %vm1769, %v1705, 0
        %v1795 = vsel %vm1769, %v1706, 0
        %v1798 = vsel %vm1769, %v1707, 0
        %v1801 = vsel %vm1769, %v1708, 0
        %v1804 = vsel %vm1769, %v1709, 0
        %v1807 = vsel %vm1769, %v1710, 0
        %v1810 = vsel %vm1769, %v1711, 0
        %v1813 = vsel %vm1769, %v1712, 0
        %v1816 = vsel %vm1769, %v1713, 0
        %v1819 = vsel %vm1769, %v1714, 0
        %v1822 = vsel %vm1769, %v1715, 0
        %v1825 = vsel %vm1769, %v1716, 0
        %v1828 = vsel %vm1769, %v1717, 0
        %v1831 = vsel %vm1769, %v1718, 0
        %v1834 = vsel %vm1769, %v1719, 0
        %v1837 = vsel %vm1769, %v1720, 0
        %v1840 = vsel %vm1769, %v1721, 0
        %v1843 = vsel %vm1769, %v1722, 0
        %v1846 = vsel %vm1769, %v1723, 0
        %v1849 = vsel %vm1769, %v1724, 0
        %v1852 = vsel %vm1769, %v1725, 0
        %v1855 = vsel %vm1769, %v1726, 0
        %v1858 = vsel %vm1769, %v1727, 0
        %v1861 = vsel %vm1769, %v1728, 0
        %v1864 = vsel %vm1769, %v1729, 0
        %1866 = vmatprep.subr.bf16.mxu0 0
        %1867 = vmatpush1.bf16.msra.mxu0 %v1761
        %1868 = vmatprep.subr.bf16.mxu0 0
        %1869 = vmatpush1.bf16.msra.mxu0 %v1762
        %1870 = vmatprep.subr.bf16.mxu0 0
        %1871 = vmatpush1.bf16.msra.mxu0 %v1763
        %1872 = vmatprep.subr.bf16.mxu0 0
        %1873 = vmatpush1.bf16.msra.mxu0 %v1764
        %1874 = vmatprep.subr.bf16.mxu0 0
        %1875 = vmatpush1.bf16.msra.mxu0 0
        %1876 = vmatprep.subr.bf16.mxu0 0
        %1877 = vmatpush1.bf16.msra.mxu0 0
        %1878 = vmatprep.subr.bf16.mxu0 0
        %1879 = vmatpush1.bf16.msra.mxu0 0
        %1880 = vmatprep.subr.bf16.mxu0 0
        %1881 = vmatpush1.bf16.msra.mxu0 0
        %1882 = vmatprep.subr.bf16.mxu0 0
        %1883 = vmatpush1.bf16.msra.mxu0 0
        %1884 = vmatprep.subr.bf16.mxu0 0
        %1885 = vmatpush1.bf16.msra.mxu0 0
        %1886 = vmatprep.subr.bf16.mxu0 0
        %1887 = vmatpush1.bf16.msra.mxu0 0
        %1888 = vmatprep.subr.bf16.mxu0 0
        %1889 = vmatpush1.bf16.msra.mxu0 0
        %1890 = vmatprep.subr.bf16.mxu0 0
        %1891 = vmatpush1.bf16.msra.mxu0 0
        %1892 = vmatprep.subr.bf16.mxu0 0
        %1893 = vmatpush1.bf16.msra.mxu0 0
        %1894 = vmatprep.subr.bf16.mxu0 0
        %1895 = vmatpush1.bf16.msra.mxu0 0
        %1896 = vmatprep.subr.bf16.mxu0 0
        %1897 = vmatpush1.bf16.msra.mxu0 0
        %1898 = vmatprep.mubr.bf16.mxu0 0
        %1899 = vmatmul.mubr.bf16.gmra.mrb[0].mxu0 %v1771
        %v1900 = vpop.f32.mrb[0].mxu0
        %v1901 = vadd.f32 %v1743, %v1900
        %v1902 = vpop.f32.mrb[0].mxu0
        %v1903 = vpop.f32.mrb[0].mxu0
        %v1904 = vadd.f32 %v1743, %v1903
        %v1905 = vpop.f32.mrb[0].mxu0
        %1906 = vmatprep.mubr.bf16.mxu0 0
        %1907 = vmatmul.mubr.bf16.gmra.mrb[0].mxu0 %v1774
        %v1908 = vpop.f32.mrb[0].mxu0
        %v1909 = vadd.f32 %v1743, %v1908
        %v1910 = vpop.f32.mrb[0].mxu0
        %v1911 = vpop.f32.mrb[0].mxu0
        %v1912 = vadd.f32 %v1743, %v1911
        %v1913 = vpop.f32.mrb[0].mxu0
        %1914 = vmatprep.mubr.bf16.mxu0 0
        %1915 = vmatmul.mubr.bf16.gmra.mrb[0].mxu0 %v1777
        %v1916 = vpop.f32.mrb[0].mxu0
        %v1917 = vadd.f32 %v1743, %v1916
        %v1918 = vpop.f32.mrb[0].mxu0
        %v1919 = vpop.f32.mrb[0].mxu0
        %v1920 = vadd.f32 %v1743, %v1919
        %v1921 = vpop.f32.mrb[0].mxu0
        %1922 = vmatprep.mubr.bf16.mxu0 0
        %1923 = vmatmul.mubr.bf16.gmra.mrb[0].mxu0 %v1780
        %v1924 = vpop.f32.mrb[0].mxu0
        %v1925 = vadd.f32 %v1743, %v1924
        %v1926 = vpop.f32.mrb[0].mxu0
        %v1927 = vpop.f32.mrb[0].mxu0
        %v1928 = vadd.f32 %v1743, %v1927
        %v1929 = vpop.f32.mrb[0].mxu0
        %1930 = vmatprep.mubr.bf16.mxu0 0
        %1931 = vmatmul.mubr.bf16.gmra.mrb[0].mxu0 %v1783
        %v1932 = vpop.f32.mrb[0].mxu0
        %v1933 = vadd.f32 %v1743, %v1932
        %v1934 = vpop.f32.mrb[0].mxu0
        %v1935 = vpop.f32.mrb[0].mxu0
        %v1936 = vadd.f32 %v1743, %v1935
        %v1937 = vpop.f32.mrb[0].mxu0
        %1938 = vmatprep.mubr.bf16.mxu0 0
        %1939 = vmatmul.mubr.bf16.gmra.mrb[0].mxu0 %v1786
        %v1940 = vpop.f32.mrb[0].mxu0
        %v1941 = vadd.f32 %v1743, %v1940
        %v1942 = vpop.f32.mrb[0].mxu0
        %v1943 = vpop.f32.mrb[0].mxu0
        %v1944 = vadd.f32 %v1743, %v1943
        %v1945 = vpop.f32.mrb[0].mxu0
        %1946 = vmatprep.mubr.bf16.mxu0 0
        %1947 = vmatmul.mubr.bf16.gmra.mrb[0].mxu0 %v1789
        %v1948 = vpop.f32.mrb[0].mxu0
        %v1949 = vadd.f32 %v1743, %v1948
        %v1950 = vpop.f32.mrb[0].mxu0
        %v1951 = vpop.f32.mrb[0].mxu0
        %v1952 = vadd.f32 %v1743, %v1951
        %v1953 = vpop.f32.mrb[0].mxu0
        %1954 = vmatprep.mubr.bf16.mxu0 0
        %1955 = vmatmul.mubr.bf16.gmra.mrb[0].mxu0 %v1792
        %v1956 = vpop.f32.mrb[0].mxu0
        %v1957 = vadd.f32 %v1743, %v1956
        %v1958 = vpop.f32.mrb[0].mxu0
        %v1959 = vpop.f32.mrb[0].mxu0
        %v1960 = vadd.f32 %v1743, %v1959
        %v1961 = vpop.f32.mrb[0].mxu0
        %1962 = vmatprep.mubr.bf16.mxu0 0
        %1963 = vmatmul.mubr.bf16.gmra.mrb[0].mxu0 %v1795
        %v1964 = vpop.f32.mrb[0].mxu0
        %v1965 = vadd.f32 %v1743, %v1964
        %v1966 = vpop.f32.mrb[0].mxu0
        %v1967 = vpop.f32.mrb[0].mxu0
        %v1968 = vadd.f32 %v1743, %v1967
        %v1969 = vpop.f32.mrb[0].mxu0
        %1970 = vmatprep.mubr.bf16.mxu0 0
        %1971 = vmatmul.mubr.bf16.gmra.mrb[0].mxu0 %v1798
        %v1972 = vpop.f32.mrb[0].mxu0
        %v1973 = vadd.f32 %v1743, %v1972
        %v1974 = vpop.f32.mrb[0].mxu0
        %v1975 = vpop.f32.mrb[0].mxu0
        %v1976 = vadd.f32 %v1743, %v1975
        %v1977 = vpop.f32.mrb[0].mxu0
        %1978 = vmatprep.mubr.bf16.mxu0 0
        %1979 = vmatmul.mubr.bf16.gmra.mrb[0].mxu0 %v1801
        %v1980 = vpop.f32.mrb[0].mxu0
        %v1981 = vadd.f32 %v1743, %v1980
        %v1982 = vpop.f32.mrb[0].mxu0
        %v1983 = vpop.f32.mrb[0].mxu0
        %v1984 = vadd.f32 %v1743, %v1983
        %v1985 = vpop.f32.mrb[0].mxu0
        %1986 = vmatprep.mubr.bf16.mxu0 0
        %1987 = vmatmul.mubr.bf16.gmra.mrb[0].mxu0 %v1804
        %v1988 = vpop.f32.mrb[0].mxu0
        %v1989 = vadd.f32 %v1743, %v1988
        %v1990 = vpop.f32.mrb[0].mxu0
        %v1991 = vpop.f32.mrb[0].mxu0
        %v1992 = vadd.f32 %v1743, %v1991
        %v1993 = vpop.f32.mrb[0].mxu0
        %1994 = vmatprep.mubr.bf16.mxu0 0
        %1995 = vmatmul.mubr.bf16.gmra.mrb[0].mxu0 %v1807
        %v1996 = vpop.f32.mrb[0].mxu0
        %v1997 = vadd.f32 %v1743, %v1996
        %v1998 = vpop.f32.mrb[0].mxu0
        %v1999 = vpop.f32.mrb[0].mxu0
        %v2000 = vadd.f32 %v1743, %v1999
        %v2001 = vpop.f32.mrb[0].mxu0
        %2002 = vmatprep.mubr.bf16.mxu0 0
        %2003 = vmatmul.mubr.bf16.gmra.mrb[0].mxu0 %v1810
        %v2004 = vpop.f32.mrb[0].mxu0
        %v2005 = vadd.f32 %v1743, %v2004
        %v2006 = vpop.f32.mrb[0].mxu0
        %v2007 = vpop.f32.mrb[0].mxu0
        %v2008 = vadd.f32 %v1743, %v2007
        %v2009 = vpop.f32.mrb[0].mxu0
        %2010 = vmatprep.mubr.bf16.mxu0 0
        %2011 = vmatmul.mubr.bf16.gmra.mrb[0].mxu0 %v1813
        %v2012 = vpop.f32.mrb[0].mxu0
        %v2013 = vadd.f32 %v1743, %v2012
        %v2014 = vpop.f32.mrb[0].mxu0
        %v2015 = vpop.f32.mrb[0].mxu0
        %v2016 = vadd.f32 %v1743, %v2015
        %v2017 = vpop.f32.mrb[0].mxu0
        %2018 = vmatprep.mubr.bf16.mxu0 0
        %2019 = vmatmul.mubr.bf16.gmra.mrb[0].mxu0 %v1816
        %v2020 = vpop.f32.mrb[0].mxu0
        %v2021 = vadd.f32 %v1743, %v2020
        %v2022 = vpop.f32.mrb[0].mxu0
        %v2023 = vpop.f32.mrb[0].mxu0
        %v2024 = vadd.f32 %v1743, %v2023
        %v2025 = vpop.f32.mrb[0].mxu0
        %2026 = vmatprep.mubr.bf16.mxu0 0
        %2027 = vmatmul.mubr.bf16.gmra.mrb[0].mxu0 %v1819
        %v2028 = vpop.f32.mrb[0].mxu0
        %v2029 = vadd.f32 %v1743, %v2028
        %v2030 = vpop.f32.mrb[0].mxu0
        %v2031 = vpop.f32.mrb[0].mxu0
        %v2032 = vadd.f32 %v1743, %v2031
        %v2033 = vpop.f32.mrb[0].mxu0
        %2034 = vmatprep.mubr.bf16.mxu0 0
        %2035 = vmatmul.mubr.bf16.gmra.mrb[0].mxu0 %v1822
        %v2036 = vpop.f32.mrb[0].mxu0
        %v2037 = vadd.f32 %v1743, %v2036
        %v2038 = vpop.f32.mrb[0].mxu0
        %v2039 = vpop.f32.mrb[0].mxu0
        %v2040 = vadd.f32 %v1743, %v2039
        %v2041 = vpop.f32.mrb[0].mxu0
        %2042 = vmatprep.mubr.bf16.mxu0 0
        %2043 = vmatmul.mubr.bf16.gmra.mrb[0].mxu0 %v1825
        %v2044 = vpop.f32.mrb[0].mxu0
        %v2045 = vadd.f32 %v1743, %v2044
        %v2046 = vpop.f32.mrb[0].mxu0
        %v2047 = vpop.f32.mrb[0].mxu0
        %v2048 = vadd.f32 %v1743, %v2047
        %v2049 = vpop.f32.mrb[0].mxu0
        %2050 = vmatprep.mubr.bf16.mxu0 0
        %2051 = vmatmul.mubr.bf16.gmra.mrb[0].mxu0 %v1828
        %v2052 = vpop.f32.mrb[0].mxu0
        %v2053 = vadd.f32 %v1743, %v2052
        %v2054 = vpop.f32.mrb[0].mxu0
        %v2055 = vpop.f32.mrb[0].mxu0
        %v2056 = vadd.f32 %v1743, %v2055
        %v2057 = vpop.f32.mrb[0].mxu0
        %2058 = vmatprep.mubr.bf16.mxu0 0
        %2059 = vmatmul.mubr.bf16.gmra.mrb[0].mxu0 %v1831
        %v2060 = vpop.f32.mrb[0].mxu0
        %v2061 = vadd.f32 %v1743, %v2060
        %v2062 = vpop.f32.mrb[0].mxu0
        %v2063 = vpop.f32.mrb[0].mxu0
        %v2064 = vadd.f32 %v1743, %v2063
        %v2065 = vpop.f32.mrb[0].mxu0
        %2066 = vmatprep.mubr.bf16.mxu0 0
        %2067 = vmatmul.mubr.bf16.gmra.mrb[0].mxu0 %v1834
        %v2068 = vpop.f32.mrb[0].mxu0
        %v2069 = vadd.f32 %v1743, %v2068
        %v2070 = vpop.f32.mrb[0].mxu0
        %v2071 = vpop.f32.mrb[0].mxu0
        %v2072 = vadd.f32 %v1743, %v2071
        %v2073 = vpop.f32.mrb[0].mxu0
        %2074 = vmatprep.mubr.bf16.mxu0 0
        %2075 = vmatmul.mubr.bf16.gmra.mrb[0].mxu0 %v1837
        %v2076 = vpop.f32.mrb[0].mxu0
        %v2077 = vadd.f32 %v1743, %v2076
        %v2078 = vpop.f32.mrb[0].mxu0
        %v2079 = vpop.f32.mrb[0].mxu0
        %v2080 = vadd.f32 %v1743, %v2079
        %v2081 = vpop.f32.mrb[0].mxu0
        %2082 = vmatprep.mubr.bf16.mxu0 0
        %2083 = vmatmul.mubr.bf16.gmra.mrb[0].mxu0 %v1840
        %v2084 = vpop.f32.mrb[0].mxu0
        %v2085 = vadd.f32 %v1743, %v2084
        %v2086 = vpop.f32.mrb[0].mxu0
        %v2087 = vpop.f32.mrb[0].mxu0
        %v2088 = vadd.f32 %v1743, %v2087
        %v2089 = vpop.f32.mrb[0].mxu0
        %2090 = vmatprep.mubr.bf16.mxu0 0
        %2091 = vmatmul.mubr.bf16.gmra.mrb[0].mxu0 %v1843
        %v2092 = vpop.f32.mrb[0].mxu0
        %v2093 = vadd.f32 %v1743, %v2092
        %v2094 = vpop.f32.mrb[0].mxu0
        %v2095 = vpop.f32.mrb[0].mxu0
        %v2096 = vadd.f32 %v1743, %v2095
        %v2097 = vpop.f32.mrb[0].mxu0
        %2098 = vmatprep.mubr.bf16.mxu0 0
        %2099 = vmatmul.mubr.bf16.gmra.mrb[0].mxu0 %v1846
        %v2100 = vpop.f32.mrb[0].mxu0
        %v2101 = vadd.f32 %v1743, %v2100
        %v2102 = vpop.f32.mrb[0].mxu0
        %v2103 = vpop.f32.mrb[0].mxu0
        %v2104 = vadd.f32 %v1743, %v2103
        %v2105 = vpop.f32.mrb[0].mxu0
        %2106 = vmatprep.mubr.bf16.mxu0 0
        %2107 = vmatmul.mubr.bf16.gmra.mrb[0].mxu0 %v1849
        %v2108 = vpop.f32.mrb[0].mxu0
        %v2109 = vadd.f32 %v1743, %v2108
        %v2110 = vpop.f32.mrb[0].mxu0
        %v2111 = vpop.f32.mrb[0].mxu0
        %v2112 = vadd.f32 %v1743, %v2111
        %v2113 = vpop.f32.mrb[0].mxu0
        %2114 = vmatprep.mubr.bf16.mxu0 0
        %2115 = vmatmul.mubr.bf16.gmra.mrb[0].mxu0 %v1852
        %v2116 = vpop.f32.mrb[0].mxu0
        %v2117 = vadd.f32 %v1743, %v2116
        %v2118 = vpop.f32.mrb[0].mxu0
        %v2119 = vpop.f32.mrb[0].mxu0
        %v2120 = vadd.f32 %v1743, %v2119
        %v2121 = vpop.f32.mrb[0].mxu0
        %2122 = vmatprep.mubr.bf16.mxu0 0
        %2123 = vmatmul.mubr.bf16.gmra.mrb[0].mxu0 %v1855
        %v2124 = vpop.f32.mrb[0].mxu0
        %v2125 = vadd.f32 %v1743, %v2124
        %v2126 = vpop.f32.mrb[0].mxu0
        %v2127 = vpop.f32.mrb[0].mxu0
        %v2128 = vadd.f32 %v1743, %v2127
        %v2129 = vpop.f32.mrb[0].mxu0
        %2130 = vmatprep.mubr.bf16.mxu0 0
        %2131 = vmatmul.mubr.bf16.gmra.mrb[0].mxu0 %v1858
        %v2132 = vpop.f32.mrb[0].mxu0
        %v2133 = vadd.f32 %v1743, %v2132
        %v2134 = vpop.f32.mrb[0].mxu0
        %v2135 = vpop.f32.mrb[0].mxu0
        %v2136 = vadd.f32 %v1743, %v2135
        %v2137 = vpop.f32.mrb[0].mxu0
        %2138 = vmatprep.mubr.bf16.mxu0 0
        %2139 = vmatmul.mubr.bf16.gmra.mrb[0].mxu0 %v1861
        %v2140 = vpop.f32.mrb[0].mxu0
        %v2141 = vadd.f32 %v1743, %v2140
        %v2142 = vpop.f32.mrb[0].mxu0
        %v2143 = vpop.f32.mrb[0].mxu0
        %v2144 = vadd.f32 %v1743, %v2143
        %v2145 = vpop.f32.mrb[0].mxu0
        %2146 = vmatprep.mubr.bf16.mxu0 0
        %2147 = vmatmul.mubr.bf16.gmra.mrb[0].mxu0 %v1864
        %v2148 = vpop.f32.mrb[0].mxu0
        %v2149 = vadd.f32 %v1743, %v2148
        %v2150 = vpop.f32.mrb[0].mxu0
        %v2151 = vpop.f32.mrb[0].mxu0
        %v2152 = vadd.f32 %v1743, %v2151
        %v2153 = vpop.f32.mrb[0].mxu0
        %2154 = vdwg.mxu0
        %v2155 = vmax.f32 %v1901, 0.0
        %v2156 = vmax.f32 %v1904, 0.0
        %v2157 = vmax.f32 %v1909, 0.0
        %v2158 = vmax.f32 %v1912, 0.0
        %v2159 = vmax.f32 %v1917, 0.0
        %v2160 = vmax.f32 %v1920, 0.0
        %v2161 = vmax.f32 %v1925, 0.0
        %v2162 = vmax.f32 %v1928, 0.0
        %v2163 = vmax.f32 %v1933, 0.0
        %v2164 = vmax.f32 %v1936, 0.0
        %v2165 = vmax.f32 %v1941, 0.0
        %v2166 = vmax.f32 %v1944, 0.0
        %v2167 = vmax.f32 %v1949, 0.0
        %v2168 = vmax.f32 %v1952, 0.0
        %v2169 = vmax.f32 %v1957, 0.0
        %v2170 = vmax.f32 %v1960, 0.0
        %v2171 = vmax.f32 %v1965, 0.0
        %v2172 = vmax.f32 %v1968, 0.0
        %v2173 = vmax.f32 %v1973, 0.0
        %v2174 = vmax.f32 %v1976, 0.0
        %v2175 = vmax.f32 %v1981, 0.0
        %v2176 = vmax.f32 %v1984, 0.0
        %v2177 = vmax.f32 %v1989, 0.0
        %v2178 = vmax.f32 %v1992, 0.0
        %v2179 = vmax.f32 %v1997, 0.0
        %v2180 = vmax.f32 %v2000, 0.0
        %v2181 = vmax.f32 %v2005, 0.0
        %v2182 = vmax.f32 %v2008, 0.0
        %v2183 = vmax.f32 %v2013, 0.0
        %v2184 = vmax.f32 %v2016, 0.0
        %v2185 = vmax.f32 %v2021, 0.0
        %v2186 = vmax.f32 %v2024, 0.0
        %v2187 = vmax.f32 %v2029, 0.0
        %v2188 = vmax.f32 %v2032, 0.0
        %v2189 = vmax.f32 %v2037, 0.0
        %v2190 = vmax.f32 %v2040, 0.0
        %v2191 = vmax.f32 %v2045, 0.0
        %v2192 = vmax.f32 %v2048, 0.0
        %v2193 = vmax.f32 %v2053, 0.0
        %v2194 = vmax.f32 %v2056, 0.0
        %v2195 = vmax.f32 %v2061, 0.0
        %v2196 = vmax.f32 %v2064, 0.0
        %v2197 = vmax.f32 %v2069, 0.0
        %v2198 = vmax.f32 %v2072, 0.0
        %v2199 = vmax.f32 %v2077, 0.0
        %v2200 = vmax.f32 %v2080, 0.0
        %v2201 = vmax.f32 %v2085, 0.0
        %v2202 = vmax.f32 %v2088, 0.0
        %v2203 = vmax.f32 %v2093, 0.0
        %v2204 = vmax.f32 %v2096, 0.0
        %v2205 = vmax.f32 %v2101, 0.0
        %v2206 = vmax.f32 %v2104, 0.0
        %v2207 = vmax.f32 %v2109, 0.0
        %v2208 = vmax.f32 %v2112, 0.0
        %v2209 = vmax.f32 %v2117, 0.0
        %v2210 = vmax.f32 %v2120, 0.0
        %v2211 = vmax.f32 %v2125, 0.0
        %v2212 = vmax.f32 %v2128, 0.0
        %v2213 = vmax.f32 %v2133, 0.0
        %v2214 = vmax.f32 %v2136, 0.0
        %v2215 = vmax.f32 %v2141, 0.0
        %v2216 = vmax.f32 %v2144, 0.0
        %v2217 = vmax.f32 %v2149, 0.0
        %v2218 = vmax.f32 %v2152, 0.0
        %v2219 = vpack.c.bf16 %v2156, %v2155
        %v2220 = vpack.c.bf16 %v2158, %v2157
        %v2221 = vpack.c.bf16 %v2160, %v2159
        %v2222 = vpack.c.bf16 %v2162, %v2161
        %v2223 = vpack.c.bf16 %v2164, %v2163
        %v2224 = vpack.c.bf16 %v2166, %v2165
        %v2225 = vpack.c.bf16 %v2168, %v2167
        %v2226 = vpack.c.bf16 %v2170, %v2169
        %v2227 = vpack.c.bf16 %v2172, %v2171
        %v2228 = vpack.c.bf16 %v2174, %v2173
        %v2229 = vpack.c.bf16 %v2176, %v2175
        %v2230 = vpack.c.bf16 %v2178, %v2177
        %v2231 = vpack.c.bf16 %v2180, %v2179
        %v2232 = vpack.c.bf16 %v2182, %v2181
        %v2233 = vpack.c.bf16 %v2184, %v2183
        %v2234 = vpack.c.bf16 %v2186, %v2185
        %v2235 = vpack.c.bf16 %v2188, %v2187
        %v2236 = vpack.c.bf16 %v2190, %v2189
        %v2237 = vpack.c.bf16 %v2192, %v2191
        %v2238 = vpack.c.bf16 %v2194, %v2193
        %v2239 = vpack.c.bf16 %v2196, %v2195
        %v2240 = vpack.c.bf16 %v2198, %v2197
        %v2241 = vpack.c.bf16 %v2200, %v2199
        %v2242 = vpack.c.bf16 %v2202, %v2201
        %v2243 = vpack.c.bf16 %v2204, %v2203
        %v2244 = vpack.c.bf16 %v2206, %v2205
        %v2245 = vpack.c.bf16 %v2208, %v2207
        %v2246 = vpack.c.bf16 %v2210, %v2209
        %v2247 = vpack.c.bf16 %v2212, %v2211
        %v2248 = vpack.c.bf16 %v2214, %v2213
        %v2249 = vpack.c.bf16 %v2216, %v2215
        %v2250 = vpack.c.bf16 %v2218, %v2217
        %v2251 = vld [vmem:[%s5] sm:$0xff]
        %v2252 = vld [vmem:[%s5 + $0x8] sm:$0xff]
        %v2253 = vld [vmem:[%s5 + $0x10] sm:$0xff]
        %v2254 = vld [vmem:[%s5 + $0x18] sm:$0xff]
        %v2255 = vld [vmem:[%s5 + $0x20] sm:$0xff]
        %v2256 = vld [vmem:[%s5 + $0x28] sm:$0xff]
        %v2257 = vld [vmem:[%s5 + $0x30] sm:$0xff]
        %v2258 = vld [vmem:[%s5 + $0x38] sm:$0xff]
        %v2259 = vld [vmem:[%s5 + $0x40] sm:$0xff]
        %v2260 = vld [vmem:[%s5 + $0x48] sm:$0xff]
        %v2261 = vld [vmem:[%s5 + $0x50] sm:$0xff]
        %v2262 = vld [vmem:[%s5 + $0x58] sm:$0xff]
        %v2263 = vld [vmem:[%s5 + $0x60] sm:$0xff]
        %v2264 = vld [vmem:[%s5 + $0x68] sm:$0xff]
        %v2265 = vld [vmem:[%s5 + $0x70] sm:$0xff]
        %v2266 = vld [vmem:[%s5 + $0x78] sm:$0xff]
        %v2267 = vld [vmem:[%s5 + $0x80] sm:$0xff]
        %v2268 = vld [vmem:[%s5 + $0x88] sm:$0xff]
        %v2269 = vld [vmem:[%s5 + $0x90] sm:$0xff]
        %v2270 = vld [vmem:[%s5 + $0x98] sm:$0xff]
        %v2271 = vld [vmem:[%s5 + $0xa0] sm:$0xff]
        %v2272 = vld [vmem:[%s5 + $0xa8] sm:$0xff]
        %v2273 = vld [vmem:[%s5 + $0xb0] sm:$0xff]
        %v2274 = vld [vmem:[%s5 + $0xb8] sm:$0xff]
        %v2275 = vld [vmem:[%s5 + $0xc0] sm:$0xff]
        %v2276 = vld [vmem:[%s5 + $0xc8] sm:$0xff]
        %v2277 = vld [vmem:[%s5 + $0xd0] sm:$0xff]
        %v2278 = vld [vmem:[%s5 + $0xd8] sm:$0xff]
        %v2279 = vld [vmem:[%s5 + $0xe0] sm:$0xff]
        %v2280 = vld [vmem:[%s5 + $0xe8] sm:$0xff]
        %v2281 = vld [vmem:[%s5 + $0xf0] sm:$0xff]
        %v2282 = vld [vmem:[%s5 + $0xf8] sm:$0xff]
        %v2283 = vld [vmem:[%s5 + $0x100] sm:$0xff]
        %v2284 = vld [vmem:[%s5 + $0x108] sm:$0xff]
        %v2285 = vld [vmem:[%s5 + $0x110] sm:$0xff]
        %v2286 = vld [vmem:[%s5 + $0x118] sm:$0xff]
        %v2287 = vld [vmem:[%s5 + $0x120] sm:$0xff]
        %v2288 = vld [vmem:[%s5 + $0x128] sm:$0xff]
        %v2289 = vld [vmem:[%s5 + $0x130] sm:$0xff]
        %v2290 = vld [vmem:[%s5 + $0x138] sm:$0xff]
        %v2291 = vld [vmem:[%s5 + $0x140] sm:$0xff]
        %v2292 = vld [vmem:[%s5 + $0x148] sm:$0xff]
        %v2293 = vld [vmem:[%s5 + $0x150] sm:$0xff]
        %v2294 = vld [vmem:[%s5 + $0x158] sm:$0xff]
        %v2295 = vld [vmem:[%s5 + $0x160] sm:$0xff]
        %v2296 = vld [vmem:[%s5 + $0x168] sm:$0xff]
        %v2297 = vld [vmem:[%s5 + $0x170] sm:$0xff]
        %v2298 = vld [vmem:[%s5 + $0x178] sm:$0xff]
        %v2299 = vld [vmem:[%s5 + $0x180] sm:$0xff]
        %v2300 = vld [vmem:[%s5 + $0x188] sm:$0xff]
        %v2301 = vld [vmem:[%s5 + $0x190] sm:$0xff]
        %v2302 = vld [vmem:[%s5 + $0x198] sm:$0xff]
        %v2303 = vld [vmem:[%s5 + $0x1a0] sm:$0xff]
        %v2304 = vld [vmem:[%s5 + $0x1a8] sm:$0xff]
        %v2305 = vld [vmem:[%s5 + $0x1b0] sm:$0xff]
        %v2306 = vld [vmem:[%s5 + $0x1b8] sm:$0xff]
        %v2307 = vld [vmem:[%s5 + $0x1c0] sm:$0xff]
        %v2308 = vld [vmem:[%s5 + $0x1c8] sm:$0xff]
        %v2309 = vld [vmem:[%s5 + $0x1d0] sm:$0xff]
        %v2310 = vld [vmem:[%s5 + $0x1d8] sm:$0xff]
        %v2311 = vld [vmem:[%s5 + $0x1e0] sm:$0xff]
        %v2312 = vld [vmem:[%s5 + $0x1e8] sm:$0xff]
        %v2313 = vld [vmem:[%s5 + $0x1f0] sm:$0xff]
        %v2314 = vld [vmem:[%s5 + $0x1f8] sm:$0xff]
        %v2315 = vld [vmem:[%s6] sm:$0xff]
        %v2317 = vlaneseq
        %v2318 = vshrl.u32 %v2317, 7
        %v2319 = vsub.s32 0, %v2318
        %v2320 = vrot.slane %v2315, %v2319
        %v2321 = vlaneseq
        %v2322 = vshrl.u32 %v2321, 7
        %v2323 = vsub.s32 1, %v2322
        %v2324 = vrot.slane %v2315, %v2323
        %v2325 = vlaneseq
        %v2326 = vshrl.u32 %v2325, 7
        %v2327 = vsub.s32 2, %v2326
        %v2328 = vrot.slane %v2315, %v2327
        %v2329 = vlaneseq
        %v2330 = vshrl.u32 %v2329, 7
        %v2331 = vsub.s32 3, %v2330
        %v2332 = vrot.slane %v2315, %v2331
        %v2333 = vlaneseq
        %v2334 = vshrl.u32 %v2333, 7
        %v2335 = vsub.s32 4, %v2334
        %v2336 = vrot.slane %v2315, %v2335
        %v2337 = vlaneseq
        %v2338 = vshrl.u32 %v2337, 7
        %v2339 = vsub.s32 5, %v2338
        %v2340 = vrot.slane %v2315, %v2339
        %v2341 = vlaneseq
        %v2342 = vshrl.u32 %v2341, 7
        %v2343 = vsub.s32 6, %v2342
        %v2344 = vrot.slane %v2315, %v2343
        %v2345 = vlaneseq
        %v2346 = vshrl.u32 %v2345, 7
        %v2347 = vsub.s32 7, %v2346
        %v2348 = vrot.slane %v2315, %v2347
        %v2421 = vunpack.c.l.b16 %v2251
        %v2422 = vunpack.c.h.b16 %v2251
        %v2423 = vunpack.c.l.b16 %v2252
        %v2424 = vunpack.c.h.b16 %v2252
        %v2425 = vunpack.c.l.b16 %v2253
        %v2426 = vunpack.c.h.b16 %v2253
        %v2427 = vunpack.c.l.b16 %v2254
        %v2428 = vunpack.c.h.b16 %v2254
        %v2429 = vunpack.c.l.b16 %v2255
        %v2430 = vunpack.c.h.b16 %v2255
        %v2431 = vunpack.c.l.b16 %v2256
        %v2432 = vunpack.c.h.b16 %v2256
        %v2433 = vunpack.c.l.b16 %v2257
        %v2434 = vunpack.c.h.b16 %v2257
        %v2435 = vunpack.c.l.b16 %v2258
        %v2436 = vunpack.c.h.b16 %v2258
        %v2437 = vunpack.c.l.b16 %v2259
        %v2438 = vunpack.c.h.b16 %v2259
        %v2439 = vunpack.c.l.b16 %v2260
        %v2440 = vunpack.c.h.b16 %v2260
        %v2441 = vunpack.c.l.b16 %v2261
        %v2442 = vunpack.c.h.b16 %v2261
        %v2443 = vunpack.c.l.b16 %v2262
        %v2444 = vunpack.c.h.b16 %v2262
        %v2445 = vunpack.c.l.b16 %v2263
        %v2446 = vunpack.c.h.b16 %v2263
        %v2447 = vunpack.c.l.b16 %v2264
        %v2448 = vunpack.c.h.b16 %v2264
        %v2449 = vunpack.c.l.b16 %v2265
        %v2450 = vunpack.c.h.b16 %v2265
        %v2451 = vunpack.c.l.b16 %v2266
        %v2452 = vunpack.c.h.b16 %v2266
        %v2453 = vunpack.c.l.b16 %v2267
        %v2454 = vunpack.c.h.b16 %v2267
        %v2455 = vunpack.c.l.b16 %v2268
        %v2456 = vunpack.c.h.b16 %v2268
        %v2457 = vunpack.c.l.b16 %v2269
        %v2458 = vunpack.c.h.b16 %v2269
        %v2459 = vunpack.c.l.b16 %v2270
        %v2460 = vunpack.c.h.b16 %v2270
        %v2461 = vunpack.c.l.b16 %v2271
        %v2462 = vunpack.c.h.b16 %v2271
        %v2463 = vunpack.c.l.b16 %v2272
        %v2464 = vunpack.c.h.b16 %v2272
        %v2465 = vunpack.c.l.b16 %v2273
        %v2466 = vunpack.c.h.b16 %v2273
        %v2467 = vunpack.c.l.b16 %v2274
        %v2468 = vunpack.c.h.b16 %v2274
        %v2469 = vunpack.c.l.b16 %v2275
        %v2470 = vunpack.c.h.b16 %v2275
        %v2471 = vunpack.c.l.b16 %v2276
        %v2472 = vunpack.c.h.b16 %v2276
        %v2473 = vunpack.c.l.b16 %v2277
        %v2474 = vunpack.c.h.b16 %v2277
        %v2475 = vunpack.c.l.b16 %v2278
        %v2476 = vunpack.c.h.b16 %v2278
        %v2477 = vunpack.c.l.b16 %v2279
        %v2478 = vunpack.c.h.b16 %v2279
        %v2479 = vunpack.c.l.b16 %v2280
        %v2480 = vunpack.c.h.b16 %v2280
        %v2481 = vunpack.c.l.b16 %v2281
        %v2482 = vunpack.c.h.b16 %v2281
        %v2483 = vunpack.c.l.b16 %v2282
        %v2484 = vunpack.c.h.b16 %v2282
        %v2485 = vunpack.c.l.b16 %v2283
        %v2486 = vunpack.c.h.b16 %v2283
        %v2487 = vunpack.c.l.b16 %v2284
        %v2488 = vunpack.c.h.b16 %v2284
        %v2489 = vunpack.c.l.b16 %v2285
        %v2490 = vunpack.c.h.b16 %v2285
        %v2491 = vunpack.c.l.b16 %v2286
        %v2492 = vunpack.c.h.b16 %v2286
        %v2493 = vunpack.c.l.b16 %v2287
        %v2494 = vunpack.c.h.b16 %v2287
        %v2495 = vunpack.c.l.b16 %v2288
        %v2496 = vunpack.c.h.b16 %v2288
        %v2497 = vunpack.c.l.b16 %v2289
        %v2498 = vunpack.c.h.b16 %v2289
        %v2499 = vunpack.c.l.b16 %v2290
        %v2500 = vunpack.c.h.b16 %v2290
        %v2501 = vunpack.c.l.b16 %v2291
        %v2502 = vunpack.c.h.b16 %v2291
        %v2503 = vunpack.c.l.b16 %v2292
        %v2504 = vunpack.c.h.b16 %v2292
        %v2505 = vunpack.c.l.b16 %v2293
        %v2506 = vunpack.c.h.b16 %v2293
        %v2507 = vunpack.c.l.b16 %v2294
        %v2508 = vunpack.c.h.b16 %v2294
        %v2509 = vunpack.c.l.b16 %v2295
        %v2510 = vunpack.c.h.b16 %v2295
        %v2511 = vunpack.c.l.b16 %v2296
        %v2512 = vunpack.c.h.b16 %v2296
        %v2513 = vunpack.c.l.b16 %v2297
        %v2514 = vunpack.c.h.b16 %v2297
        %v2515 = vunpack.c.l.b16 %v2298
        %v2516 = vunpack.c.h.b16 %v2298
        %v2517 = vunpack.c.l.b16 %v2299
        %v2518 = vunpack.c.h.b16 %v2299
        %v2519 = vunpack.c.l.b16 %v2300
        %v2520 = vunpack.c.h.b16 %v2300
        %v2521 = vunpack.c.l.b16 %v2301
        %v2522 = vunpack.c.h.b16 %v2301
        %v2523 = vunpack.c.l.b16 %v2302
        %v2524 = vunpack.c.h.b16 %v2302
        %v2525 = vunpack.c.l.b16 %v2303
        %v2526 = vunpack.c.h.b16 %v2303
        %v2527 = vunpack.c.l.b16 %v2304
        %v2528 = vunpack.c.h.b16 %v2304
        %v2529 = vunpack.c.l.b16 %v2305
        %v2530 = vunpack.c.h.b16 %v2305
        %v2531 = vunpack.c.l.b16 %v2306
        %v2532 = vunpack.c.h.b16 %v2306
        %v2533 = vunpack.c.l.b16 %v2307
        %v2534 = vunpack.c.h.b16 %v2307
        %v2535 = vunpack.c.l.b16 %v2308
        %v2536 = vunpack.c.h.b16 %v2308
        %v2537 = vunpack.c.l.b16 %v2309
        %v2538 = vunpack.c.h.b16 %v2309
        %v2539 = vunpack.c.l.b16 %v2310
        %v2540 = vunpack.c.h.b16 %v2310
        %v2541 = vunpack.c.l.b16 %v2311
        %v2542 = vunpack.c.h.b16 %v2311
        %v2543 = vunpack.c.l.b16 %v2312
        %v2544 = vunpack.c.h.b16 %v2312
        %v2545 = vunpack.c.l.b16 %v2313
        %v2546 = vunpack.c.h.b16 %v2313
        %v2547 = vunpack.c.l.b16 %v2314
        %v2548 = vunpack.c.h.b16 %v2314
        %v2549 = vpack.c.b16 %v2429, %v2421
        %v2550 = vpack.c.b16 %v2430, %v2422
        %v2551 = vpack.c.b16 %v2431, %v2423
        %v2552 = vpack.c.b16 %v2432, %v2424
        %v2553 = vpack.c.b16 %v2433, %v2425
        %v2554 = vpack.c.b16 %v2434, %v2426
        %v2555 = vpack.c.b16 %v2435, %v2427
        %v2556 = vpack.c.b16 %v2436, %v2428
        %v2557 = vpack.c.b16 %v2445, %v2437
        %v2558 = vpack.c.b16 %v2446, %v2438
        %v2559 = vpack.c.b16 %v2447, %v2439
        %v2560 = vpack.c.b16 %v2448, %v2440
        %v2561 = vpack.c.b16 %v2449, %v2441
        %v2562 = vpack.c.b16 %v2450, %v2442
        %v2563 = vpack.c.b16 %v2451, %v2443
        %v2564 = vpack.c.b16 %v2452, %v2444
        %v2565 = vpack.c.b16 %v2461, %v2453
        %v2566 = vpack.c.b16 %v2462, %v2454
        %v2567 = vpack.c.b16 %v2463, %v2455
        %v2568 = vpack.c.b16 %v2464, %v2456
        %v2569 = vpack.c.b16 %v2465, %v2457
        %v2570 = vpack.c.b16 %v2466, %v2458
        %v2571 = vpack.c.b16 %v2467, %v2459
        %v2572 = vpack.c.b16 %v2468, %v2460
        %v2573 = vpack.c.b16 %v2477, %v2469
        %v2574 = vpack.c.b16 %v2478, %v2470
        %v2575 = vpack.c.b16 %v2479, %v2471
        %v2576 = vpack.c.b16 %v2480, %v2472
        %v2577 = vpack.c.b16 %v2481, %v2473
        %v2578 = vpack.c.b16 %v2482, %v2474
        %v2579 = vpack.c.b16 %v2483, %v2475
        %v2580 = vpack.c.b16 %v2484, %v2476
        %v2581 = vpack.c.b16 %v2493, %v2485
        %v2582 = vpack.c.b16 %v2494, %v2486
        %v2583 = vpack.c.b16 %v2495, %v2487
        %v2584 = vpack.c.b16 %v2496, %v2488
        %v2585 = vpack.c.b16 %v2497, %v2489
        %v2586 = vpack.c.b16 %v2498, %v2490
        %v2587 = vpack.c.b16 %v2499, %v2491
        %v2588 = vpack.c.b16 %v2500, %v2492
        %v2589 = vpack.c.b16 %v2509, %v2501
        %v2590 = vpack.c.b16 %v2510, %v2502
        %v2591 = vpack.c.b16 %v2511, %v2503
        %v2592 = vpack.c.b16 %v2512, %v2504
        %v2593 = vpack.c.b16 %v2513, %v2505
        %v2594 = vpack.c.b16 %v2514, %v2506
        %v2595 = vpack.c.b16 %v2515, %v2507
        %v2596 = vpack.c.b16 %v2516, %v2508
        %v2597 = vpack.c.b16 %v2525, %v2517
        %v2598 = vpack.c.b16 %v2526, %v2518
        %v2599 = vpack.c.b16 %v2527, %v2519
        %v2600 = vpack.c.b16 %v2528, %v2520
        %v2601 = vpack.c.b16 %v2529, %v2521
        %v2602 = vpack.c.b16 %v2530, %v2522
        %v2603 = vpack.c.b16 %v2531, %v2523
        %v2604 = vpack.c.b16 %v2532, %v2524
        %v2605 = vpack.c.b16 %v2541, %v2533
        %v2606 = vpack.c.b16 %v2542, %v2534
        %v2607 = vpack.c.b16 %v2543, %v2535
        %v2608 = vpack.c.b16 %v2544, %v2536
        %v2609 = vpack.c.b16 %v2545, %v2537
        %v2610 = vpack.c.b16 %v2546, %v2538
        %v2611 = vpack.c.b16 %v2547, %v2539
        %v2612 = vpack.c.b16 %v2548, %v2540
        %2677 = vmatprep.subr.bf16.mxu0 %v2550
        %2678 = vmatpush1.bf16.msra.mxu0 %v2549
        %2679 = vmatprep.subr.bf16.mxu0 %v2558
        %2680 = vmatpush1.bf16.msra.mxu0 %v2557
        %2681 = vmatprep.subr.bf16.mxu0 %v2566
        %2682 = vmatpush1.bf16.msra.mxu0 %v2565
        %2683 = vmatprep.subr.bf16.mxu0 %v2574
        %2684 = vmatpush1.bf16.msra.mxu0 %v2573
        %2685 = vmatprep.subr.bf16.mxu0 %v2582
        %2686 = vmatpush1.bf16.msra.mxu0 %v2581
        %2687 = vmatprep.subr.bf16.mxu0 %v2590
        %2688 = vmatpush1.bf16.msra.mxu0 %v2589
        %2689 = vmatprep.subr.bf16.mxu0 %v2598
        %2690 = vmatpush1.bf16.msra.mxu0 %v2597
        %2691 = vmatprep.subr.bf16.mxu0 %v2606
        %2692 = vmatpush1.bf16.msra.mxu0 %v2605
        %2693 = vmatprep.subr.bf16.mxu0 0
        %2694 = vmatpush1.bf16.msra.mxu0 0
        %2695 = vmatprep.subr.bf16.mxu0 0
        %2696 = vmatpush1.bf16.msra.mxu0 0
        %2697 = vmatprep.subr.bf16.mxu0 0
        %2698 = vmatpush1.bf16.msra.mxu0 0
        %2699 = vmatprep.subr.bf16.mxu0 0
        %2700 = vmatpush1.bf16.msra.mxu0 0
        %2701 = vmatprep.subr.bf16.mxu0 0
        %2702 = vmatpush1.bf16.msra.mxu0 0
        %2703 = vmatprep.subr.bf16.mxu0 0
        %2704 = vmatpush1.bf16.msra.mxu0 0
        %2705 = vmatprep.subr.bf16.mxu0 0
        %2706 = vmatpush1.bf16.msra.mxu0 0
        %2707 = vmatprep.subr.bf16.mxu0 0
        %2708 = vmatpush1.bf16.msra.mxu0 0
        %2709 = vmatprep.mubr.bf16.mxu0 0
        %2710 = vmatmul.mubr.bf16.gmra.mrb[0].mxu0 %v2219
        %v2711 = vpop.f32.mrb[0].mxu0
        %v2712 = vadd.f32 %v2320, %v2711
        %v2713 = vpop.f32.mrb[0].mxu0
        %v2714 = vadd.f32 %v2324, %v2713
        %v2715 = vpop.f32.mrb[0].mxu0
        %v2716 = vadd.f32 %v2320, %v2715
        %v2717 = vpop.f32.mrb[0].mxu0
        %v2718 = vadd.f32 %v2324, %v2717
        %2719 = vmatprep.mubr.bf16.mxu0 0
        %2720 = vmatmul.mubr.bf16.gmra.mrb[0].mxu0 %v2220
        %v2721 = vpop.f32.mrb[0].mxu0
        %v2722 = vadd.f32 %v2320, %v2721
        %v2723 = vpop.f32.mrb[0].mxu0
        %v2724 = vadd.f32 %v2324, %v2723
        %v2725 = vpop.f32.mrb[0].mxu0
        %v2726 = vadd.f32 %v2320, %v2725
        %v2727 = vpop.f32.mrb[0].mxu0
        %v2728 = vadd.f32 %v2324, %v2727
        %2729 = vmatprep.mubr.bf16.mxu0 0
        %2730 = vmatmul.mubr.bf16.gmra.mrb[0].mxu0 %v2221
        %v2731 = vpop.f32.mrb[0].mxu0
        %v2732 = vadd.f32 %v2320, %v2731
        %v2733 = vpop.f32.mrb[0].mxu0
        %v2734 = vadd.f32 %v2324, %v2733
        %v2735 = vpop.f32.mrb[0].mxu0
        %v2736 = vadd.f32 %v2320, %v2735
        %v2737 = vpop.f32.mrb[0].mxu0
        %v2738 = vadd.f32 %v2324, %v2737
        %2739 = vmatprep.mubr.bf16.mxu0 0
        %2740 = vmatmul.mubr.bf16.gmra.mrb[0].mxu0 %v2222
        %v2741 = vpop.f32.mrb[0].mxu0
        %v2742 = vadd.f32 %v2320, %v2741
        %v2743 = vpop.f32.mrb[0].mxu0
        %v2744 = vadd.f32 %v2324, %v2743
        %v2745 = vpop.f32.mrb[0].mxu0
        %v2746 = vadd.f32 %v2320, %v2745
        %v2747 = vpop.f32.mrb[0].mxu0
        %v2748 = vadd.f32 %v2324, %v2747
        %2749 = vmatprep.mubr.bf16.mxu0 0
        %2750 = vmatmul.mubr.bf16.gmra.mrb[0].mxu0 %v2223
        %v2751 = vpop.f32.mrb[0].mxu0
        %v2752 = vadd.f32 %v2320, %v2751
        %v2753 = vpop.f32.mrb[0].mxu0
        %v2754 = vadd.f32 %v2324, %v2753
        %v2755 = vpop.f32.mrb[0].mxu0
        %v2756 = vadd.f32 %v2320, %v2755
        %v2757 = vpop.f32.mrb[0].mxu0
        %v2758 = vadd.f32 %v2324, %v2757
        %2759 = vmatprep.mubr.bf16.mxu0 0
        %2760 = vmatmul.mubr.bf16.gmra.mrb[0].mxu0 %v2224
        %v2761 = vpop.f32.mrb[0].mxu0
        %v2762 = vadd.f32 %v2320, %v2761
        %v2763 = vpop.f32.mrb[0].mxu0
        %v2764 = vadd.f32 %v2324, %v2763
        %v2765 = vpop.f32.mrb[0].mxu0
        %v2766 = vadd.f32 %v2320, %v2765
        %v2767 = vpop.f32.mrb[0].mxu0
        %v2768 = vadd.f32 %v2324, %v2767
        %2769 = vmatprep.mubr.bf16.mxu0 0
        %2770 = vmatmul.mubr.bf16.gmra.mrb[0].mxu0 %v2225
        %v2771 = vpop.f32.mrb[0].mxu0
        %v2772 = vadd.f32 %v2320, %v2771
        %v2773 = vpop.f32.mrb[0].mxu0
        %v2774 = vadd.f32 %v2324, %v2773
        %v2775 = vpop.f32.mrb[0].mxu0
        %v2776 = vadd.f32 %v2320, %v2775
        %v2777 = vpop.f32.mrb[0].mxu0
        %v2778 = vadd.f32 %v2324, %v2777
        %2779 = vmatprep.mubr.bf16.mxu0 0
        %2780 = vmatmul.mubr.bf16.gmra.mrb[0].mxu0 %v2226
        %v2781 = vpop.f32.mrb[0].mxu0
        %v2782 = vadd.f32 %v2320, %v2781
        %v2783 = vpop.f32.mrb[0].mxu0
        %v2784 = vadd.f32 %v2324, %v2783
        %v2785 = vpop.f32.mrb[0].mxu0
        %v2786 = vadd.f32 %v2320, %v2785
        %v2787 = vpop.f32.mrb[0].mxu0
        %v2788 = vadd.f32 %v2324, %v2787
        %2789 = vmatprep.mubr.bf16.mxu0 0
        %2790 = vmatmul.mubr.bf16.gmra.mrb[0].mxu0 %v2227
        %v2791 = vpop.f32.mrb[0].mxu0
        %v2792 = vadd.f32 %v2320, %v2791
        %v2793 = vpop.f32.mrb[0].mxu0
        %v2794 = vadd.f32 %v2324, %v2793
        %v2795 = vpop.f32.mrb[0].mxu0
        %v2796 = vadd.f32 %v2320, %v2795
        %v2797 = vpop.f32.mrb[0].mxu0
        %v2798 = vadd.f32 %v2324, %v2797
        %2799 = vmatprep.mubr.bf16.mxu0 0
        %2800 = vmatmul.mubr.bf16.gmra.mrb[0].mxu0 %v2228
        %v2801 = vpop.f32.mrb[0].mxu0
        %v2802 = vadd.f32 %v2320, %v2801
        %v2803 = vpop.f32.mrb[0].mxu0
        %v2804 = vadd.f32 %v2324, %v2803
        %v2805 = vpop.f32.mrb[0].mxu0
        %v2806 = vadd.f32 %v2320, %v2805
        %v2807 = vpop.f32.mrb[0].mxu0
        %v2808 = vadd.f32 %v2324, %v2807
        %2809 = vmatprep.mubr.bf16.mxu0 0
        %2810 = vmatmul.mubr.bf16.gmra.mrb[0].mxu0 %v2229
        %v2811 = vpop.f32.mrb[0].mxu0
        %v2812 = vadd.f32 %v2320, %v2811
        %v2813 = vpop.f32.mrb[0].mxu0
        %v2814 = vadd.f32 %v2324, %v2813
        %v2815 = vpop.f32.mrb[0].mxu0
        %v2816 = vadd.f32 %v2320, %v2815
        %v2817 = vpop.f32.mrb[0].mxu0
        %v2818 = vadd.f32 %v2324, %v2817
        %2819 = vmatprep.mubr.bf16.mxu0 0
        %2820 = vmatmul.mubr.bf16.gmra.mrb[0].mxu0 %v2230
        %v2821 = vpop.f32.mrb[0].mxu0
        %v2822 = vadd.f32 %v2320, %v2821
        %v2823 = vpop.f32.mrb[0].mxu0
        %v2824 = vadd.f32 %v2324, %v2823
        %v2825 = vpop.f32.mrb[0].mxu0
        %v2826 = vadd.f32 %v2320, %v2825
        %v2827 = vpop.f32.mrb[0].mxu0
        %v2828 = vadd.f32 %v2324, %v2827
        %2829 = vmatprep.mubr.bf16.mxu0 0
        %2830 = vmatmul.mubr.bf16.gmra.mrb[0].mxu0 %v2231
        %v2831 = vpop.f32.mrb[0].mxu0
        %v2832 = vadd.f32 %v2320, %v2831
        %v2833 = vpop.f32.mrb[0].mxu0
        %v2834 = vadd.f32 %v2324, %v2833
        %v2835 = vpop.f32.mrb[0].mxu0
        %v2836 = vadd.f32 %v2320, %v2835
        %v2837 = vpop.f32.mrb[0].mxu0
        %v2838 = vadd.f32 %v2324, %v2837
        %2839 = vmatprep.mubr.bf16.mxu0 0
        %2840 = vmatmul.mubr.bf16.gmra.mrb[0].mxu0 %v2232
        %v2841 = vpop.f32.mrb[0].mxu0
        %v2842 = vadd.f32 %v2320, %v2841
        %v2843 = vpop.f32.mrb[0].mxu0
        %v2844 = vadd.f32 %v2324, %v2843
        %v2845 = vpop.f32.mrb[0].mxu0
        %v2846 = vadd.f32 %v2320, %v2845
        %v2847 = vpop.f32.mrb[0].mxu0
        %v2848 = vadd.f32 %v2324, %v2847
        %2849 = vmatprep.mubr.bf16.mxu0 0
        %2850 = vmatmul.mubr.bf16.gmra.mrb[0].mxu0 %v2233
        %v2851 = vpop.f32.mrb[0].mxu0
        %v2852 = vadd.f32 %v2320, %v2851
        %v2853 = vpop.f32.mrb[0].mxu0
        %v2854 = vadd.f32 %v2324, %v2853
        %v2855 = vpop.f32.mrb[0].mxu0
        %v2856 = vadd.f32 %v2320, %v2855
        %v2857 = vpop.f32.mrb[0].mxu0
        %v2858 = vadd.f32 %v2324, %v2857
        %2859 = vmatprep.mubr.bf16.mxu0 0
        %2860 = vmatmul.mubr.bf16.gmra.mrb[0].mxu0 %v2234
        %v2861 = vpop.f32.mrb[0].mxu0
        %v2862 = vadd.f32 %v2320, %v2861
        %v2863 = vpop.f32.mrb[0].mxu0
        %v2864 = vadd.f32 %v2324, %v2863
        %v2865 = vpop.f32.mrb[0].mxu0
        %v2866 = vadd.f32 %v2320, %v2865
        %v2867 = vpop.f32.mrb[0].mxu0
        %v2868 = vadd.f32 %v2324, %v2867
        %2869 = vmatprep.mubr.bf16.mxu0 0
        %2870 = vmatmul.mubr.bf16.gmra.mrb[0].mxu0 %v2235
        %v2871 = vpop.f32.mrb[0].mxu0
        %v2872 = vadd.f32 %v2320, %v2871
        %v2873 = vpop.f32.mrb[0].mxu0
        %v2874 = vadd.f32 %v2324, %v2873
        %v2875 = vpop.f32.mrb[0].mxu0
        %v2876 = vadd.f32 %v2320, %v2875
        %v2877 = vpop.f32.mrb[0].mxu0
        %v2878 = vadd.f32 %v2324, %v2877
        %2879 = vmatprep.mubr.bf16.mxu0 0
        %2880 = vmatmul.mubr.bf16.gmra.mrb[0].mxu0 %v2236
        %v2881 = vpop.f32.mrb[0].mxu0
        %v2882 = vadd.f32 %v2320, %v2881
        %v2883 = vpop.f32.mrb[0].mxu0
        %v2884 = vadd.f32 %v2324, %v2883
        %v2885 = vpop.f32.mrb[0].mxu0
        %v2886 = vadd.f32 %v2320, %v2885
        %v2887 = vpop.f32.mrb[0].mxu0
        %v2888 = vadd.f32 %v2324, %v2887
        %2889 = vmatprep.mubr.bf16.mxu0 0
        %2890 = vmatmul.mubr.bf16.gmra.mrb[0].mxu0 %v2237
        %v2891 = vpop.f32.mrb[0].mxu0
        %v2892 = vadd.f32 %v2320, %v2891
        %v2893 = vpop.f32.mrb[0].mxu0
        %v2894 = vadd.f32 %v2324, %v2893
        %v2895 = vpop.f32.mrb[0].mxu0
        %v2896 = vadd.f32 %v2320, %v2895
        %v2897 = vpop.f32.mrb[0].mxu0
        %v2898 = vadd.f32 %v2324, %v2897
        %2899 = vmatprep.mubr.bf16.mxu0 0
        %2900 = vmatmul.mubr.bf16.gmra.mrb[0].mxu0 %v2238
        %v2901 = vpop.f32.mrb[0].mxu0
        %v2902 = vadd.f32 %v2320, %v2901
        %v2903 = vpop.f32.mrb[0].mxu0
        %v2904 = vadd.f32 %v2324, %v2903
        %v2905 = vpop.f32.mrb[0].mxu0
        %v2906 = vadd.f32 %v2320, %v2905
        %v2907 = vpop.f32.mrb[0].mxu0
        %v2908 = vadd.f32 %v2324, %v2907
        %2909 = vmatprep.mubr.bf16.mxu0 0
        %2910 = vmatmul.mubr.bf16.gmra.mrb[0].mxu0 %v2239
        %v2911 = vpop.f32.mrb[0].mxu0
        %v2912 = vadd.f32 %v2320, %v2911
        %v2913 = vpop.f32.mrb[0].mxu0
        %v2914 = vadd.f32 %v2324, %v2913
        %v2915 = vpop.f32.mrb[0].mxu0
        %v2916 = vadd.f32 %v2320, %v2915
        %v2917 = vpop.f32.mrb[0].mxu0
        %v2918 = vadd.f32 %v2324, %v2917
        %2919 = vmatprep.mubr.bf16.mxu0 0
        %2920 = vmatmul.mubr.bf16.gmra.mrb[0].mxu0 %v2240
        %v2921 = vpop.f32.mrb[0].mxu0
        %v2922 = vadd.f32 %v2320, %v2921
        %v2923 = vpop.f32.mrb[0].mxu0
        %v2924 = vadd.f32 %v2324, %v2923
        %v2925 = vpop.f32.mrb[0].mxu0
        %v2926 = vadd.f32 %v2320, %v2925
        %v2927 = vpop.f32.mrb[0].mxu0
        %v2928 = vadd.f32 %v2324, %v2927
        %2929 = vmatprep.mubr.bf16.mxu0 0
        %2930 = vmatmul.mubr.bf16.gmra.mrb[0].mxu0 %v2241
        %v2931 = vpop.f32.mrb[0].mxu0
        %v2932 = vadd.f32 %v2320, %v2931
        %v2933 = vpop.f32.mrb[0].mxu0
        %v2934 = vadd.f32 %v2324, %v2933
        %v2935 = vpop.f32.mrb[0].mxu0
        %v2936 = vadd.f32 %v2320, %v2935
        %v2937 = vpop.f32.mrb[0].mxu0
        %v2938 = vadd.f32 %v2324, %v2937
        %2939 = vmatprep.mubr.bf16.mxu0 0
        %2940 = vmatmul.mubr.bf16.gmra.mrb[0].mxu0 %v2242
        %v2941 = vpop.f32.mrb[0].mxu0
        %v2942 = vadd.f32 %v2320, %v2941
        %v2943 = vpop.f32.mrb[0].mxu0
        %v2944 = vadd.f32 %v2324, %v2943
        %v2945 = vpop.f32.mrb[0].mxu0
        %v2946 = vadd.f32 %v2320, %v2945
        %v2947 = vpop.f32.mrb[0].mxu0
        %v2948 = vadd.f32 %v2324, %v2947
        %2949 = vmatprep.mubr.bf16.mxu0 0
        %2950 = vmatmul.mubr.bf16.gmra.mrb[0].mxu0 %v2243
        %v2951 = vpop.f32.mrb[0].mxu0
        %v2952 = vadd.f32 %v2320, %v2951
        %v2953 = vpop.f32.mrb[0].mxu0
        %v2954 = vadd.f32 %v2324, %v2953
        %v2955 = vpop.f32.mrb[0].mxu0
        %v2956 = vadd.f32 %v2320, %v2955
        %v2957 = vpop.f32.mrb[0].mxu0
        %v2958 = vadd.f32 %v2324, %v2957
        %2959 = vmatprep.mubr.bf16.mxu0 0
        %2960 = vmatmul.mubr.bf16.gmra.mrb[0].mxu0 %v2244
        %v2961 = vpop.f32.mrb[0].mxu0
        %v2962 = vadd.f32 %v2320, %v2961
        %v2963 = vpop.f32.mrb[0].mxu0
        %v2964 = vadd.f32 %v2324, %v2963
        %v2965 = vpop.f32.mrb[0].mxu0
        %v2966 = vadd.f32 %v2320, %v2965
        %v2967 = vpop.f32.mrb[0].mxu0
        %v2968 = vadd.f32 %v2324, %v2967
        %2969 = vmatprep.mubr.bf16.mxu0 0
        %2970 = vmatmul.mubr.bf16.gmra.mrb[0].mxu0 %v2245
        %v2971 = vpop.f32.mrb[0].mxu0
        %v2972 = vadd.f32 %v2320, %v2971
        %v2973 = vpop.f32.mrb[0].mxu0
        %v2974 = vadd.f32 %v2324, %v2973
        %v2975 = vpop.f32.mrb[0].mxu0
        %v2976 = vadd.f32 %v2320, %v2975
        %v2977 = vpop.f32.mrb[0].mxu0
        %v2978 = vadd.f32 %v2324, %v2977
        %2979 = vmatprep.mubr.bf16.mxu0 0
        %2980 = vmatmul.mubr.bf16.gmra.mrb[0].mxu0 %v2246
        %v2981 = vpop.f32.mrb[0].mxu0
        %v2982 = vadd.f32 %v2320, %v2981
        %v2983 = vpop.f32.mrb[0].mxu0
        %v2984 = vadd.f32 %v2324, %v2983
        %v2985 = vpop.f32.mrb[0].mxu0
        %v2986 = vadd.f32 %v2320, %v2985
        %v2987 = vpop.f32.mrb[0].mxu0
        %v2988 = vadd.f32 %v2324, %v2987
        %2989 = vmatprep.mubr.bf16.mxu0 0
        %2990 = vmatmul.mubr.bf16.gmra.mrb[0].mxu0 %v2247
        %v2991 = vpop.f32.mrb[0].mxu0
        %v2992 = vadd.f32 %v2320, %v2991
        %v2993 = vpop.f32.mrb[0].mxu0
        %v2994 = vadd.f32 %v2324, %v2993
        %v2995 = vpop.f32.mrb[0].mxu0
        %v2996 = vadd.f32 %v2320, %v2995
        %v2997 = vpop.f32.mrb[0].mxu0
        %v2998 = vadd.f32 %v2324, %v2997
        %2999 = vmatprep.mubr.bf16.mxu0 0
        %3000 = vmatmul.mubr.bf16.gmra.mrb[0].mxu0 %v2248
        %v3001 = vpop.f32.mrb[0].mxu0
        %v3002 = vadd.f32 %v2320, %v3001
        %v3003 = vpop.f32.mrb[0].mxu0
        %v3004 = vadd.f32 %v2324, %v3003
        %v3005 = vpop.f32.mrb[0].mxu0
        %v3006 = vadd.f32 %v2320, %v3005
        %v3007 = vpop.f32.mrb[0].mxu0
        %v3008 = vadd.f32 %v2324, %v3007
        %3009 = vmatprep.mubr.bf16.mxu0 0
        %3010 = vmatmul.mubr.bf16.gmra.mrb[0].mxu0 %v2249
        %v3011 = vpop.f32.mrb[0].mxu0
        %v3012 = vadd.f32 %v2320, %v3011
        %v3013 = vpop.f32.mrb[0].mxu0
        %v3014 = vadd.f32 %v2324, %v3013
        %v3015 = vpop.f32.mrb[0].mxu0
        %v3016 = vadd.f32 %v2320, %v3015
        %v3017 = vpop.f32.mrb[0].mxu0
        %v3018 = vadd.f32 %v2324, %v3017
        %3019 = vmatprep.mubr.bf16.mxu0 0
        %3020 = vmatmul.mubr.bf16.gmra.mrb[0].mxu0 %v2250
        %v3021 = vpop.f32.mrb[0].mxu0
        %v3022 = vadd.f32 %v2320, %v3021
        %v3023 = vpop.f32.mrb[0].mxu0
        %v3024 = vadd.f32 %v2324, %v3023
        %v3025 = vpop.f32.mrb[0].mxu0
        %v3026 = vadd.f32 %v2320, %v3025
        %v3027 = vpop.f32.mrb[0].mxu0
        %v3028 = vadd.f32 %v2324, %v3027
        %3029 = vdwg.mxu0
        %3030 = vmatprep.subr.bf16.mxu0 %v2552
        %3031 = vmatpush1.bf16.msra.mxu0 %v2551
        %3032 = vmatprep.subr.bf16.mxu0 %v2560
        %3033 = vmatpush1.bf16.msra.mxu0 %v2559
        %3034 = vmatprep.subr.bf16.mxu0 %v2568
        %3035 = vmatpush1.bf16.msra.mxu0 %v2567
        %3036 = vmatprep.subr.bf16.mxu0 %v2576
        %3037 = vmatpush1.bf16.msra.mxu0 %v2575
        %3038 = vmatprep.subr.bf16.mxu0 %v2584
        %3039 = vmatpush1.bf16.msra.mxu0 %v2583
        %3040 = vmatprep.subr.bf16.mxu0 %v2592
        %3041 = vmatpush1.bf16.msra.mxu0 %v2591
        %3042 = vmatprep.subr.bf16.mxu0 %v2600
        %3043 = vmatpush1.bf16.msra.mxu0 %v2599
        %3044 = vmatprep.subr.bf16.mxu0 %v2608
        %3045 = vmatpush1.bf16.msra.mxu0 %v2607
        %3046 = vmatprep.subr.bf16.mxu0 0
        %3047 = vmatpush1.bf16.msra.mxu0 0
        %3048 = vmatprep.subr.bf16.mxu0 0
        %3049 = vmatpush1.bf16.msra.mxu0 0
        %3050 = vmatprep.subr.bf16.mxu0 0
        %3051 = vmatpush1.bf16.msra.mxu0 0
        %3052 = vmatprep.subr.bf16.mxu0 0
        %3053 = vmatpush1.bf16.msra.mxu0 0
        %3054 = vmatprep.subr.bf16.mxu0 0
        %3055 = vmatpush1.bf16.msra.mxu0 0
        %3056 = vmatprep.subr.bf16.mxu0 0
        %3057 = vmatpush1.bf16.msra.mxu0 0
        %3058 = vmatprep.subr.bf16.mxu0 0
        %3059 = vmatpush1.bf16.msra.mxu0 0
        %3060 = vmatprep.subr.bf16.mxu0 0
        %3061 = vmatpush1.bf16.msra.mxu0 0
        %3062 = vmatprep.mubr.bf16.mxu0 0
        %3063 = vmatmul.mubr.bf16.gmra.mrb[0].mxu0 %v2219
        %v3064 = vpop.f32.mrb[0].mxu0
        %v3065 = vadd.f32 %v2328, %v3064
        %v3066 = vpop.f32.mrb[0].mxu0
        %v3067 = vadd.f32 %v2332, %v3066
        %v3068 = vpop.f32.mrb[0].mxu0
        %v3069 = vadd.f32 %v2328, %v3068
        %v3070 = vpop.f32.mrb[0].mxu0
        %v3071 = vadd.f32 %v2332, %v3070
        %3072 = vmatprep.mubr.bf16.mxu0 0
        %3073 = vmatmul.mubr.bf16.gmra.mrb[0].mxu0 %v2220
        %v3074 = vpop.f32.mrb[0].mxu0
        %v3075 = vadd.f32 %v2328, %v3074
        %v3076 = vpop.f32.mrb[0].mxu0
        %v3077 = vadd.f32 %v2332, %v3076
        %v3078 = vpop.f32.mrb[0].mxu0
        %v3079 = vadd.f32 %v2328, %v3078
        %v3080 = vpop.f32.mrb[0].mxu0
        %v3081 = vadd.f32 %v2332, %v3080
        %3082 = vmatprep.mubr.bf16.mxu0 0
        %3083 = vmatmul.mubr.bf16.gmra.mrb[0].mxu0 %v2221
        %v3084 = vpop.f32.mrb[0].mxu0
        %v3085 = vadd.f32 %v2328, %v3084
        %v3086 = vpop.f32.mrb[0].mxu0
        %v3087 = vadd.f32 %v2332, %v3086
        %v3088 = vpop.f32.mrb[0].mxu0
        %v3089 = vadd.f32 %v2328, %v3088
        %v3090 = vpop.f32.mrb[0].mxu0
        %v3091 = vadd.f32 %v2332, %v3090
        %3092 = vmatprep.mubr.bf16.mxu0 0
        %3093 = vmatmul.mubr.bf16.gmra.mrb[0].mxu0 %v2222
        %v3094 = vpop.f32.mrb[0].mxu0
        %v3095 = vadd.f32 %v2328, %v3094
        %v3096 = vpop.f32.mrb[0].mxu0
        %v3097 = vadd.f32 %v2332, %v3096
        %v3098 = vpop.f32.mrb[0].mxu0
        %v3099 = vadd.f32 %v2328, %v3098
        %v3100 = vpop.f32.mrb[0].mxu0
        %v3101 = vadd.f32 %v2332, %v3100
        %3102 = vmatprep.mubr.bf16.mxu0 0
        %3103 = vmatmul.mubr.bf16.gmra.mrb[0].mxu0 %v2223
        %v3104 = vpop.f32.mrb[0].mxu0
        %v3105 = vadd.f32 %v2328, %v3104
        %v3106 = vpop.f32.mrb[0].mxu0
        %v3107 = vadd.f32 %v2332, %v3106
        %v3108 = vpop.f32.mrb[0].mxu0
        %v3109 = vadd.f32 %v2328, %v3108
        %v3110 = vpop.f32.mrb[0].mxu0
        %v3111 = vadd.f32 %v2332, %v3110
        %3112 = vmatprep.mubr.bf16.mxu0 0
        %3113 = vmatmul.mubr.bf16.gmra.mrb[0].mxu0 %v2224
        %v3114 = vpop.f32.mrb[0].mxu0
        %v3115 = vadd.f32 %v2328, %v3114
        %v3116 = vpop.f32.mrb[0].mxu0
        %v3117 = vadd.f32 %v2332, %v3116
        %v3118 = vpop.f32.mrb[0].mxu0
        %v3119 = vadd.f32 %v2328, %v3118
        %v3120 = vpop.f32.mrb[0].mxu0
        %v3121 = vadd.f32 %v2332, %v3120
        %3122 = vmatprep.mubr.bf16.mxu0 0
        %3123 = vmatmul.mubr.bf16.gmra.mrb[0].mxu0 %v2225
        %v3124 = vpop.f32.mrb[0].mxu0
        %v3125 = vadd.f32 %v2328, %v3124
        %v3126 = vpop.f32.mrb[0].mxu0
        %v3127 = vadd.f32 %v2332, %v3126
        %v3128 = vpop.f32.mrb[0].mxu0
        %v3129 = vadd.f32 %v2328, %v3128
        %v3130 = vpop.f32.mrb[0].mxu0
        %v3131 = vadd.f32 %v2332, %v3130
        %3132 = vmatprep.mubr.bf16.mxu0 0
        %3133 = vmatmul.mubr.bf16.gmra.mrb[0].mxu0 %v2226
        %v3134 = vpop.f32.mrb[0].mxu0
        %v3135 = vadd.f32 %v2328, %v3134
        %v3136 = vpop.f32.mrb[0].mxu0
        %v3137 = vadd.f32 %v2332, %v3136
        %v3138 = vpop.f32.mrb[0].mxu0
        %v3139 = vadd.f32 %v2328, %v3138
        %v3140 = vpop.f32.mrb[0].mxu0
        %v3141 = vadd.f32 %v2332, %v3140
        %3142 = vmatprep.mubr.bf16.mxu0 0
        %3143 = vmatmul.mubr.bf16.gmra.mrb[0].mxu0 %v2227
        %v3144 = vpop.f32.mrb[0].mxu0
        %v3145 = vadd.f32 %v2328, %v3144
        %v3146 = vpop.f32.mrb[0].mxu0
        %v3147 = vadd.f32 %v2332, %v3146
        %v3148 = vpop.f32.mrb[0].mxu0
        %v3149 = vadd.f32 %v2328, %v3148
        %v3150 = vpop.f32.mrb[0].mxu0
        %v3151 = vadd.f32 %v2332, %v3150
        %3152 = vmatprep.mubr.bf16.mxu0 0
        %3153 = vmatmul.mubr.bf16.gmra.mrb[0].mxu0 %v2228
        %v3154 = vpop.f32.mrb[0].mxu0
        %v3155 = vadd.f32 %v2328, %v3154
        %v3156 = vpop.f32.mrb[0].mxu0
        %v3157 = vadd.f32 %v2332, %v3156
        %v3158 = vpop.f32.mrb[0].mxu0
        %v3159 = vadd.f32 %v2328, %v3158
        %v3160 = vpop.f32.mrb[0].mxu0
        %v3161 = vadd.f32 %v2332, %v3160
        %3162 = vmatprep.mubr.bf16.mxu0 0
        %3163 = vmatmul.mubr.bf16.gmra.mrb[0].mxu0 %v2229
        %v3164 = vpop.f32.mrb[0].mxu0
        %v3165 = vadd.f32 %v2328, %v3164
        %v3166 = vpop.f32.mrb[0].mxu0
        %v3167 = vadd.f32 %v2332, %v3166
        %v3168 = vpop.f32.mrb[0].mxu0
        %v3169 = vadd.f32 %v2328, %v3168
        %v3170 = vpop.f32.mrb[0].mxu0
        %v3171 = vadd.f32 %v2332, %v3170
        %3172 = vmatprep.mubr.bf16.mxu0 0
        %3173 = vmatmul.mubr.bf16.gmra.mrb[0].mxu0 %v2230
        %v3174 = vpop.f32.mrb[0].mxu0
        %v3175 = vadd.f32 %v2328, %v3174
        %v3176 = vpop.f32.mrb[0].mxu0
        %v3177 = vadd.f32 %v2332, %v3176
        %v3178 = vpop.f32.mrb[0].mxu0
        %v3179 = vadd.f32 %v2328, %v3178
        %v3180 = vpop.f32.mrb[0].mxu0
        %v3181 = vadd.f32 %v2332, %v3180
        %3182 = vmatprep.mubr.bf16.mxu0 0
        %3183 = vmatmul.mubr.bf16.gmra.mrb[0].mxu0 %v2231
        %v3184 = vpop.f32.mrb[0].mxu0
        %v3185 = vadd.f32 %v2328, %v3184
        %v3186 = vpop.f32.mrb[0].mxu0
        %v3187 = vadd.f32 %v2332, %v3186
        %v3188 = vpop.f32.mrb[0].mxu0
        %v3189 = vadd.f32 %v2328, %v3188
        %v3190 = vpop.f32.mrb[0].mxu0
        %v3191 = vadd.f32 %v2332, %v3190
        %3192 = vmatprep.mubr.bf16.mxu0 0
        %3193 = vmatmul.mubr.bf16.gmra.mrb[0].mxu0 %v2232
        %v3194 = vpop.f32.mrb[0].mxu0
        %v3195 = vadd.f32 %v2328, %v3194
        %v3196 = vpop.f32.mrb[0].mxu0
        %v3197 = vadd.f32 %v2332, %v3196
        %v3198 = vpop.f32.mrb[0].mxu0
        %v3199 = vadd.f32 %v2328, %v3198
        %v3200 = vpop.f32.mrb[0].mxu0
        %v3201 = vadd.f32 %v2332, %v3200
        %3202 = vmatprep.mubr.bf16.mxu0 0
        %3203 = vmatmul.mubr.bf16.gmra.mrb[0].mxu0 %v2233
        %v3204 = vpop.f32.mrb[0].mxu0
        %v3205 = vadd.f32 %v2328, %v3204
        %v3206 = vpop.f32.mrb[0].mxu0
        %v3207 = vadd.f32 %v2332, %v3206
        %v3208 = vpop.f32.mrb[0].mxu0
        %v3209 = vadd.f32 %v2328, %v3208
        %v3210 = vpop.f32.mrb[0].mxu0
        %v3211 = vadd.f32 %v2332, %v3210
        %3212 = vmatprep.mubr.bf16.mxu0 0
        %3213 = vmatmul.mubr.bf16.gmra.mrb[0].mxu0 %v2234
        %v3214 = vpop.f32.mrb[0].mxu0
        %v3215 = vadd.f32 %v2328, %v3214
        %v3216 = vpop.f32.mrb[0].mxu0
        %v3217 = vadd.f32 %v2332, %v3216
        %v3218 = vpop.f32.mrb[0].mxu0
        %v3219 = vadd.f32 %v2328, %v3218
        %v3220 = vpop.f32.mrb[0].mxu0
        %v3221 = vadd.f32 %v2332, %v3220
        %3222 = vmatprep.mubr.bf16.mxu0 0
        %3223 = vmatmul.mubr.bf16.gmra.mrb[0].mxu0 %v2235
        %v3224 = vpop.f32.mrb[0].mxu0
        %v3225 = vadd.f32 %v2328, %v3224
        %v3226 = vpop.f32.mrb[0].mxu0
        %v3227 = vadd.f32 %v2332, %v3226
        %v3228 = vpop.f32.mrb[0].mxu0
        %v3229 = vadd.f32 %v2328, %v3228
        %v3230 = vpop.f32.mrb[0].mxu0
        %v3231 = vadd.f32 %v2332, %v3230
        %3232 = vmatprep.mubr.bf16.mxu0 0
        %3233 = vmatmul.mubr.bf16.gmra.mrb[0].mxu0 %v2236
        %v3234 = vpop.f32.mrb[0].mxu0
        %v3235 = vadd.f32 %v2328, %v3234
        %v3236 = vpop.f32.mrb[0].mxu0
        %v3237 = vadd.f32 %v2332, %v3236
        %v3238 = vpop.f32.mrb[0].mxu0
        %v3239 = vadd.f32 %v2328, %v3238
        %v3240 = vpop.f32.mrb[0].mxu0
        %v3241 = vadd.f32 %v2332, %v3240
        %3242 = vmatprep.mubr.bf16.mxu0 0
        %3243 = vmatmul.mubr.bf16.gmra.mrb[0].mxu0 %v2237
        %v3244 = vpop.f32.mrb[0].mxu0
        %v3245 = vadd.f32 %v2328, %v3244
        %v3246 = vpop.f32.mrb[0].mxu0
        %v3247 = vadd.f32 %v2332, %v3246
        %v3248 = vpop.f32.mrb[0].mxu0
        %v3249 = vadd.f32 %v2328, %v3248
        %v3250 = vpop.f32.mrb[0].mxu0
        %v3251 = vadd.f32 %v2332, %v3250
        %3252 = vmatprep.mubr.bf16.mxu0 0
        %3253 = vmatmul.mubr.bf16.gmra.mrb[0].mxu0 %v2238
        %v3254 = vpop.f32.mrb[0].mxu0
        %v3255 = vadd.f32 %v2328, %v3254
        %v3256 = vpop.f32.mrb[0].mxu0
        %v3257 = vadd.f32 %v2332, %v3256
        %v3258 = vpop.f32.mrb[0].mxu0
        %v3259 = vadd.f32 %v2328, %v3258
        %v3260 = vpop.f32.mrb[0].mxu0
        %v3261 = vadd.f32 %v2332, %v3260
        %3262 = vmatprep.mubr.bf16.mxu0 0
        %3263 = vmatmul.mubr.bf16.gmra.mrb[0].mxu0 %v2239
        %v3264 = vpop.f32.mrb[0].mxu0
        %v3265 = vadd.f32 %v2328, %v3264
        %v3266 = vpop.f32.mrb[0].mxu0
        %v3267 = vadd.f32 %v2332, %v3266
        %v3268 = vpop.f32.mrb[0].mxu0
        %v3269 = vadd.f32 %v2328, %v3268
        %v3270 = vpop.f32.mrb[0].mxu0
        %v3271 = vadd.f32 %v2332, %v3270
        %3272 = vmatprep.mubr.bf16.mxu0 0
        %3273 = vmatmul.mubr.bf16.gmra.mrb[0].mxu0 %v2240
        %v3274 = vpop.f32.mrb[0].mxu0
        %v3275 = vadd.f32 %v2328, %v3274
        %v3276 = vpop.f32.mrb[0].mxu0
        %v3277 = vadd.f32 %v2332, %v3276
        %v3278 = vpop.f32.mrb[0].mxu0
        %v3279 = vadd.f32 %v2328, %v3278
        %v3280 = vpop.f32.mrb[0].mxu0
        %v3281 = vadd.f32 %v2332, %v3280
        %3282 = vmatprep.mubr.bf16.mxu0 0
        %3283 = vmatmul.mubr.bf16.gmra.mrb[0].mxu0 %v2241
        %v3284 = vpop.f32.mrb[0].mxu0
        %v3285 = vadd.f32 %v2328, %v3284
        %v3286 = vpop.f32.mrb[0].mxu0
        %v3287 = vadd.f32 %v2332, %v3286
        %v3288 = vpop.f32.mrb[0].mxu0
        %v3289 = vadd.f32 %v2328, %v3288
        %v3290 = vpop.f32.mrb[0].mxu0
        %v3291 = vadd.f32 %v2332, %v3290
        %3292 = vmatprep.mubr.bf16.mxu0 0
        %3293 = vmatmul.mubr.bf16.gmra.mrb[0].mxu0 %v2242
        %v3294 = vpop.f32.mrb[0].mxu0
        %v3295 = vadd.f32 %v2328, %v3294
        %v3296 = vpop.f32.mrb[0].mxu0
        %v3297 = vadd.f32 %v2332, %v3296
        %v3298 = vpop.f32.mrb[0].mxu0
        %v3299 = vadd.f32 %v2328, %v3298
        %v3300 = vpop.f32.mrb[0].mxu0
        %v3301 = vadd.f32 %v2332, %v3300
        %3302 = vmatprep.mubr.bf16.mxu0 0
        %3303 = vmatmul.mubr.bf16.gmra.mrb[0].mxu0 %v2243
        %v3304 = vpop.f32.mrb[0].mxu0
        %v3305 = vadd.f32 %v2328, %v3304
        %v3306 = vpop.f32.mrb[0].mxu0
        %v3307 = vadd.f32 %v2332, %v3306
        %v3308 = vpop.f32.mrb[0].mxu0
        %v3309 = vadd.f32 %v2328, %v3308
        %v3310 = vpop.f32.mrb[0].mxu0
        %v3311 = vadd.f32 %v2332, %v3310
        %3312 = vmatprep.mubr.bf16.mxu0 0
        %3313 = vmatmul.mubr.bf16.gmra.mrb[0].mxu0 %v2244
        %v3314 = vpop.f32.mrb[0].mxu0
        %v3315 = vadd.f32 %v2328, %v3314
        %v3316 = vpop.f32.mrb[0].mxu0
        %v3317 = vadd.f32 %v2332, %v3316
        %v3318 = vpop.f32.mrb[0].mxu0
        %v3319 = vadd.f32 %v2328, %v3318
        %v3320 = vpop.f32.mrb[0].mxu0
        %v3321 = vadd.f32 %v2332, %v3320
        %3322 = vmatprep.mubr.bf16.mxu0 0
        %3323 = vmatmul.mubr.bf16.gmra.mrb[0].mxu0 %v2245
        %v3324 = vpop.f32.mrb[0].mxu0
        %v3325 = vadd.f32 %v2328, %v3324
        %v3326 = vpop.f32.mrb[0].mxu0
        %v3327 = vadd.f32 %v2332, %v3326
        %v3328 = vpop.f32.mrb[0].mxu0
        %v3329 = vadd.f32 %v2328, %v3328
        %v3330 = vpop.f32.mrb[0].mxu0
        %v3331 = vadd.f32 %v2332, %v3330
        %3332 = vmatprep.mubr.bf16.mxu0 0
        %3333 = vmatmul.mubr.bf16.gmra.mrb[0].mxu0 %v2246
        %v3334 = vpop.f32.mrb[0].mxu0
        %v3335 = vadd.f32 %v2328, %v3334
        %v3336 = vpop.f32.mrb[0].mxu0
        %v3337 = vadd.f32 %v2332, %v3336
        %v3338 = vpop.f32.mrb[0].mxu0
        %v3339 = vadd.f32 %v2328, %v3338
        %v3340 = vpop.f32.mrb[0].mxu0
        %v3341 = vadd.f32 %v2332, %v3340
        %3342 = vmatprep.mubr.bf16.mxu0 0
        %3343 = vmatmul.mubr.bf16.gmra.mrb[0].mxu0 %v2247
        %v3344 = vpop.f32.mrb[0].mxu0
        %v3345 = vadd.f32 %v2328, %v3344
        %v3346 = vpop.f32.mrb[0].mxu0
        %v3347 = vadd.f32 %v2332, %v3346
        %v3348 = vpop.f32.mrb[0].mxu0
        %v3349 = vadd.f32 %v2328, %v3348
        %v3350 = vpop.f32.mrb[0].mxu0
        %v3351 = vadd.f32 %v2332, %v3350
        %3352 = vmatprep.mubr.bf16.mxu0 0
        %3353 = vmatmul.mubr.bf16.gmra.mrb[0].mxu0 %v2248
        %v3354 = vpop.f32.mrb[0].mxu0
        %v3355 = vadd.f32 %v2328, %v3354
        %v3356 = vpop.f32.mrb[0].mxu0
        %v3357 = vadd.f32 %v2332, %v3356
        %v3358 = vpop.f32.mrb[0].mxu0
        %v3359 = vadd.f32 %v2328, %v3358
        %v3360 = vpop.f32.mrb[0].mxu0
        %v3361 = vadd.f32 %v2332, %v3360
        %3362 = vmatprep.mubr.bf16.mxu0 0
        %3363 = vmatmul.mubr.bf16.gmra.mrb[0].mxu0 %v2249
        %v3364 = vpop.f32.mrb[0].mxu0
        %v3365 = vadd.f32 %v2328, %v3364
        %v3366 = vpop.f32.mrb[0].mxu0
        %v3367 = vadd.f32 %v2332, %v3366
        %v3368 = vpop.f32.mrb[0].mxu0
        %v3369 = vadd.f32 %v2328, %v3368
        %v3370 = vpop.f32.mrb[0].mxu0
        %v3371 = vadd.f32 %v2332, %v3370
        %3372 = vmatprep.mubr.bf16.mxu0 0
        %3373 = vmatmul.mubr.bf16.gmra.mrb[0].mxu0 %v2250
        %v3374 = vpop.f32.mrb[0].mxu0
        %v3375 = vadd.f32 %v2328, %v3374
        %v3376 = vpop.f32.mrb[0].mxu0
        %v3377 = vadd.f32 %v2332, %v3376
        %v3378 = vpop.f32.mrb[0].mxu0
        %v3379 = vadd.f32 %v2328, %v3378
        %v3380 = vpop.f32.mrb[0].mxu0
        %v3381 = vadd.f32 %v2332, %v3380
        %3382 = vdwg.mxu0
        %3383 = vmatprep.subr.bf16.mxu0 %v2554
        %3384 = vmatpush1.bf16.msra.mxu0 %v2553
        %3385 = vmatprep.subr.bf16.mxu0 %v2562
        %3386 = vmatpush1.bf16.msra.mxu0 %v2561
        %3387 = vmatprep.subr.bf16.mxu0 %v2570
        %3388 = vmatpush1.bf16.msra.mxu0 %v2569
        %3389 = vmatprep.subr.bf16.mxu0 %v2578
        %3390 = vmatpush1.bf16.msra.mxu0 %v2577
        %3391 = vmatprep.subr.bf16.mxu0 %v2586
        %3392 = vmatpush1.bf16.msra.mxu0 %v2585
        %3393 = vmatprep.subr.bf16.mxu0 %v2594
        %3394 = vmatpush1.bf16.msra.mxu0 %v2593
        %3395 = vmatprep.subr.bf16.mxu0 %v2602
        %3396 = vmatpush1.bf16.msra.mxu0 %v2601
        %3397 = vmatprep.subr.bf16.mxu0 %v2610
        %3398 = vmatpush1.bf16.msra.mxu0 %v2609
        %3399 = vmatprep.subr.bf16.mxu0 0
        %3400 = vmatpush1.bf16.msra.mxu0 0
        %3401 = vmatprep.subr.bf16.mxu0 0
        %3402 = vmatpush1.bf16.msra.mxu0 0
        %3403 = vmatprep.subr.bf16.mxu0 0
        %3404 = vmatpush1.bf16.msra.mxu0 0
        %3405 = vmatprep.subr.bf16.mxu0 0
        %3406 = vmatpush1.bf16.msra.mxu0 0
        %3407 = vmatprep.subr.bf16.mxu0 0
        %3408 = vmatpush1.bf16.msra.mxu0 0
        %3409 = vmatprep.subr.bf16.mxu0 0
        %3410 = vmatpush1.bf16.msra.mxu0 0
        %3411 = vmatprep.subr.bf16.mxu0 0
        %3412 = vmatpush1.bf16.msra.mxu0 0
        %3413 = vmatprep.subr.bf16.mxu0 0
        %3414 = vmatpush1.bf16.msra.mxu0 0
        %3415 = vmatprep.mubr.bf16.mxu0 0
        %3416 = vmatmul.mubr.bf16.gmra.mrb[0].mxu0 %v2219
        %v3417 = vpop.f32.mrb[0].mxu0
        %v3418 = vadd.f32 %v2336, %v3417
        %v3419 = vpop.f32.mrb[0].mxu0
        %v3420 = vadd.f32 %v2340, %v3419
        %v3421 = vpop.f32.mrb[0].mxu0
        %v3422 = vadd.f32 %v2336, %v3421
        %v3423 = vpop.f32.mrb[0].mxu0
        %v3424 = vadd.f32 %v2340, %v3423
        %3425 = vmatprep.mubr.bf16.mxu0 0
        %3426 = vmatmul.mubr.bf16.gmra.mrb[0].mxu0 %v2220
        %v3427 = vpop.f32.mrb[0].mxu0
        %v3428 = vadd.f32 %v2336, %v3427
        %v3429 = vpop.f32.mrb[0].mxu0
        %v3430 = vadd.f32 %v2340, %v3429
        %v3431 = vpop.f32.mrb[0].mxu0
        %v3432 = vadd.f32 %v2336, %v3431
        %v3433 = vpop.f32.mrb[0].mxu0
        %v3434 = vadd.f32 %v2340, %v3433
        %3435 = vmatprep.mubr.bf16.mxu0 0
        %3436 = vmatmul.mubr.bf16.gmra.mrb[0].mxu0 %v2221
        %v3437 = vpop.f32.mrb[0].mxu0
        %v3438 = vadd.f32 %v2336, %v3437
        %v3439 = vpop.f32.mrb[0].mxu0
        %v3440 = vadd.f32 %v2340, %v3439
        %v3441 = vpop.f32.mrb[0].mxu0
        %v3442 = vadd.f32 %v2336, %v3441
        %v3443 = vpop.f32.mrb[0].mxu0
        %v3444 = vadd.f32 %v2340, %v3443
        %3445 = vmatprep.mubr.bf16.mxu0 0
        %3446 = vmatmul.mubr.bf16.gmra.mrb[0].mxu0 %v2222
        %v3447 = vpop.f32.mrb[0].mxu0
        %v3448 = vadd.f32 %v2336, %v3447
        %v3449 = vpop.f32.mrb[0].mxu0
        %v3450 = vadd.f32 %v2340, %v3449
        %v3451 = vpop.f32.mrb[0].mxu0
        %v3452 = vadd.f32 %v2336, %v3451
        %v3453 = vpop.f32.mrb[0].mxu0
        %v3454 = vadd.f32 %v2340, %v3453
        %3455 = vmatprep.mubr.bf16.mxu0 0
        %3456 = vmatmul.mubr.bf16.gmra.mrb[0].mxu0 %v2223
        %v3457 = vpop.f32.mrb[0].mxu0
        %v3458 = vadd.f32 %v2336, %v3457
        %v3459 = vpop.f32.mrb[0].mxu0
        %v3460 = vadd.f32 %v2340, %v3459
        %v3461 = vpop.f32.mrb[0].mxu0
        %v3462 = vadd.f32 %v2336, %v3461
        %v3463 = vpop.f32.mrb[0].mxu0
        %v3464 = vadd.f32 %v2340, %v3463
        %3465 = vmatprep.mubr.bf16.mxu0 0
        %3466 = vmatmul.mubr.bf16.gmra.mrb[0].mxu0 %v2224
        %v3467 = vpop.f32.mrb[0].mxu0
        %v3468 = vadd.f32 %v2336, %v3467
        %v3469 = vpop.f32.mrb[0].mxu0
        %v3470 = vadd.f32 %v2340, %v3469
        %v3471 = vpop.f32.mrb[0].mxu0
        %v3472 = vadd.f32 %v2336, %v3471
        %v3473 = vpop.f32.mrb[0].mxu0
        %v3474 = vadd.f32 %v2340, %v3473
        %3475 = vmatprep.mubr.bf16.mxu0 0
        %3476 = vmatmul.mubr.bf16.gmra.mrb[0].mxu0 %v2225
        %v3477 = vpop.f32.mrb[0].mxu0
        %v3478 = vadd.f32 %v2336, %v3477
        %v3479 = vpop.f32.mrb[0].mxu0
        %v3480 = vadd.f32 %v2340, %v3479
        %v3481 = vpop.f32.mrb[0].mxu0
        %v3482 = vadd.f32 %v2336, %v3481
        %v3483 = vpop.f32.mrb[0].mxu0
        %v3484 = vadd.f32 %v2340, %v3483
        %3485 = vmatprep.mubr.bf16.mxu0 0
        %3486 = vmatmul.mubr.bf16.gmra.mrb[0].mxu0 %v2226
        %v3487 = vpop.f32.mrb[0].mxu0
        %v3488 = vadd.f32 %v2336, %v3487
        %v3489 = vpop.f32.mrb[0].mxu0
        %v3490 = vadd.f32 %v2340, %v3489
        %v3491 = vpop.f32.mrb[0].mxu0
        %v3492 = vadd.f32 %v2336, %v3491
        %v3493 = vpop.f32.mrb[0].mxu0
        %v3494 = vadd.f32 %v2340, %v3493
        %3495 = vmatprep.mubr.bf16.mxu0 0
        %3496 = vmatmul.mubr.bf16.gmra.mrb[0].mxu0 %v2227
        %v3497 = vpop.f32.mrb[0].mxu0
        %v3498 = vadd.f32 %v2336, %v3497
        %v3499 = vpop.f32.mrb[0].mxu0
        %v3500 = vadd.f32 %v2340, %v3499
        %v3501 = vpop.f32.mrb[0].mxu0
        %v3502 = vadd.f32 %v2336, %v3501
        %v3503 = vpop.f32.mrb[0].mxu0
        %v3504 = vadd.f32 %v2340, %v3503
        %3505 = vmatprep.mubr.bf16.mxu0 0
        %3506 = vmatmul.mubr.bf16.gmra.mrb[0].mxu0 %v2228
        %v3507 = vpop.f32.mrb[0].mxu0
        %v3508 = vadd.f32 %v2336, %v3507
        %v3509 = vpop.f32.mrb[0].mxu0
        %v3510 = vadd.f32 %v2340, %v3509
        %v3511 = vpop.f32.mrb[0].mxu0
        %v3512 = vadd.f32 %v2336, %v3511
        %v3513 = vpop.f32.mrb[0].mxu0
        %v3514 = vadd.f32 %v2340, %v3513
        %3515 = vmatprep.mubr.bf16.mxu0 0
        %3516 = vmatmul.mubr.bf16.gmra.mrb[0].mxu0 %v2229
        %v3517 = vpop.f32.mrb[0].mxu0
        %v3518 = vadd.f32 %v2336, %v3517
        %v3519 = vpop.f32.mrb[0].mxu0
        %v3520 = vadd.f32 %v2340, %v3519
        %v3521 = vpop.f32.mrb[0].mxu0
        %v3522 = vadd.f32 %v2336, %v3521
        %v3523 = vpop.f32.mrb[0].mxu0
        %v3524 = vadd.f32 %v2340, %v3523
        %3525 = vmatprep.mubr.bf16.mxu0 0
        %3526 = vmatmul.mubr.bf16.gmra.mrb[0].mxu0 %v2230
        %v3527 = vpop.f32.mrb[0].mxu0
        %v3528 = vadd.f32 %v2336, %v3527
        %v3529 = vpop.f32.mrb[0].mxu0
        %v3530 = vadd.f32 %v2340, %v3529
        %v3531 = vpop.f32.mrb[0].mxu0
        %v3532 = vadd.f32 %v2336, %v3531
        %v3533 = vpop.f32.mrb[0].mxu0
        %v3534 = vadd.f32 %v2340, %v3533
        %3535 = vmatprep.mubr.bf16.mxu0 0
        %3536 = vmatmul.mubr.bf16.gmra.mrb[0].mxu0 %v2231
        %v3537 = vpop.f32.mrb[0].mxu0
        %v3538 = vadd.f32 %v2336, %v3537
        %v3539 = vpop.f32.mrb[0].mxu0
        %v3540 = vadd.f32 %v2340, %v3539
        %v3541 = vpop.f32.mrb[0].mxu0
        %v3542 = vadd.f32 %v2336, %v3541
        %v3543 = vpop.f32.mrb[0].mxu0
        %v3544 = vadd.f32 %v2340, %v3543
        %3545 = vmatprep.mubr.bf16.mxu0 0
        %3546 = vmatmul.mubr.bf16.gmra.mrb[0].mxu0 %v2232
        %v3547 = vpop.f32.mrb[0].mxu0
        %v3548 = vadd.f32 %v2336, %v3547
        %v3549 = vpop.f32.mrb[0].mxu0
        %v3550 = vadd.f32 %v2340, %v3549
        %v3551 = vpop.f32.mrb[0].mxu0
        %v3552 = vadd.f32 %v2336, %v3551
        %v3553 = vpop.f32.mrb[0].mxu0
        %v3554 = vadd.f32 %v2340, %v3553
        %3555 = vmatprep.mubr.bf16.mxu0 0
        %3556 = vmatmul.mubr.bf16.gmra.mrb[0].mxu0 %v2233
        %v3557 = vpop.f32.mrb[0].mxu0
        %v3558 = vadd.f32 %v2336, %v3557
        %v3559 = vpop.f32.mrb[0].mxu0
        %v3560 = vadd.f32 %v2340, %v3559
        %v3561 = vpop.f32.mrb[0].mxu0
        %v3562 = vadd.f32 %v2336, %v3561
        %v3563 = vpop.f32.mrb[0].mxu0
        %v3564 = vadd.f32 %v2340, %v3563
        %3565 = vmatprep.mubr.bf16.mxu0 0
        %3566 = vmatmul.mubr.bf16.gmra.mrb[0].mxu0 %v2234
        %v3567 = vpop.f32.mrb[0].mxu0
        %v3568 = vadd.f32 %v2336, %v3567
        %v3569 = vpop.f32.mrb[0].mxu0
        %v3570 = vadd.f32 %v2340, %v3569
        %v3571 = vpop.f32.mrb[0].mxu0
        %v3572 = vadd.f32 %v2336, %v3571
        %v3573 = vpop.f32.mrb[0].mxu0
        %v3574 = vadd.f32 %v2340, %v3573
        %3575 = vmatprep.mubr.bf16.mxu0 0
        %3576 = vmatmul.mubr.bf16.gmra.mrb[0].mxu0 %v2235
        %v3577 = vpop.f32.mrb[0].mxu0
        %v3578 = vadd.f32 %v2336, %v3577
        %v3579 = vpop.f32.mrb[0].mxu0
        %v3580 = vadd.f32 %v2340, %v3579
        %v3581 = vpop.f32.mrb[0].mxu0
        %v3582 = vadd.f32 %v2336, %v3581
        %v3583 = vpop.f32.mrb[0].mxu0
        %v3584 = vadd.f32 %v2340, %v3583
        %3585 = vmatprep.mubr.bf16.mxu0 0
        %3586 = vmatmul.mubr.bf16.gmra.mrb[0].mxu0 %v2236
        %v3587 = vpop.f32.mrb[0].mxu0
        %v3588 = vadd.f32 %v2336, %v3587
        %v3589 = vpop.f32.mrb[0].mxu0
        %v3590 = vadd.f32 %v2340, %v3589
        %v3591 = vpop.f32.mrb[0].mxu0
        %v3592 = vadd.f32 %v2336, %v3591
        %v3593 = vpop.f32.mrb[0].mxu0
        %v3594 = vadd.f32 %v2340, %v3593
        %3595 = vmatprep.mubr.bf16.mxu0 0
        %3596 = vmatmul.mubr.bf16.gmra.mrb[0].mxu0 %v2237
        %v3597 = vpop.f32.mrb[0].mxu0
        %v3598 = vadd.f32 %v2336, %v3597
        %v3599 = vpop.f32.mrb[0].mxu0
        %v3600 = vadd.f32 %v2340, %v3599
        %v3601 = vpop.f32.mrb[0].mxu0
        %v3602 = vadd.f32 %v2336, %v3601
        %v3603 = vpop.f32.mrb[0].mxu0
        %v3604 = vadd.f32 %v2340, %v3603
        %3605 = vmatprep.mubr.bf16.mxu0 0
        %3606 = vmatmul.mubr.bf16.gmra.mrb[0].mxu0 %v2238
        %v3607 = vpop.f32.mrb[0].mxu0
        %v3608 = vadd.f32 %v2336, %v3607
        %v3609 = vpop.f32.mrb[0].mxu0
        %v3610 = vadd.f32 %v2340, %v3609
        %v3611 = vpop.f32.mrb[0].mxu0
        %v3612 = vadd.f32 %v2336, %v3611
        %v3613 = vpop.f32.mrb[0].mxu0
        %v3614 = vadd.f32 %v2340, %v3613
        %3615 = vmatprep.mubr.bf16.mxu0 0
        %3616 = vmatmul.mubr.bf16.gmra.mrb[0].mxu0 %v2239
        %v3617 = vpop.f32.mrb[0].mxu0
        %v3618 = vadd.f32 %v2336, %v3617
        %v3619 = vpop.f32.mrb[0].mxu0
        %v3620 = vadd.f32 %v2340, %v3619
        %v3621 = vpop.f32.mrb[0].mxu0
        %v3622 = vadd.f32 %v2336, %v3621
        %v3623 = vpop.f32.mrb[0].mxu0
        %v3624 = vadd.f32 %v2340, %v3623
        %3625 = vmatprep.mubr.bf16.mxu0 0
        %3626 = vmatmul.mubr.bf16.gmra.mrb[0].mxu0 %v2240
        %v3627 = vpop.f32.mrb[0].mxu0
        %v3628 = vadd.f32 %v2336, %v3627
        %v3629 = vpop.f32.mrb[0].mxu0
        %v3630 = vadd.f32 %v2340, %v3629
        %v3631 = vpop.f32.mrb[0].mxu0
        %v3632 = vadd.f32 %v2336, %v3631
        %v3633 = vpop.f32.mrb[0].mxu0
        %v3634 = vadd.f32 %v2340, %v3633
        %3635 = vmatprep.mubr.bf16.mxu0 0
        %3636 = vmatmul.mubr.bf16.gmra.mrb[0].mxu0 %v2241
        %v3637 = vpop.f32.mrb[0].mxu0
        %v3638 = vadd.f32 %v2336, %v3637
        %v3639 = vpop.f32.mrb[0].mxu0
        %v3640 = vadd.f32 %v2340, %v3639
        %v3641 = vpop.f32.mrb[0].mxu0
        %v3642 = vadd.f32 %v2336, %v3641
        %v3643 = vpop.f32.mrb[0].mxu0
        %v3644 = vadd.f32 %v2340, %v3643
        %3645 = vmatprep.mubr.bf16.mxu0 0
        %3646 = vmatmul.mubr.bf16.gmra.mrb[0].mxu0 %v2242
        %v3647 = vpop.f32.mrb[0].mxu0
        %v3648 = vadd.f32 %v2336, %v3647
        %v3649 = vpop.f32.mrb[0].mxu0
        %v3650 = vadd.f32 %v2340, %v3649
        %v3651 = vpop.f32.mrb[0].mxu0
        %v3652 = vadd.f32 %v2336, %v3651
        %v3653 = vpop.f32.mrb[0].mxu0
        %v3654 = vadd.f32 %v2340, %v3653
        %3655 = vmatprep.mubr.bf16.mxu0 0
        %3656 = vmatmul.mubr.bf16.gmra.mrb[0].mxu0 %v2243
        %v3657 = vpop.f32.mrb[0].mxu0
        %v3658 = vadd.f32 %v2336, %v3657
        %v3659 = vpop.f32.mrb[0].mxu0
        %v3660 = vadd.f32 %v2340, %v3659
        %v3661 = vpop.f32.mrb[0].mxu0
        %v3662 = vadd.f32 %v2336, %v3661
        %v3663 = vpop.f32.mrb[0].mxu0
        %v3664 = vadd.f32 %v2340, %v3663
        %3665 = vmatprep.mubr.bf16.mxu0 0
        %3666 = vmatmul.mubr.bf16.gmra.mrb[0].mxu0 %v2244
        %v3667 = vpop.f32.mrb[0].mxu0
        %v3668 = vadd.f32 %v2336, %v3667
        %v3669 = vpop.f32.mrb[0].mxu0
        %v3670 = vadd.f32 %v2340, %v3669
        %v3671 = vpop.f32.mrb[0].mxu0
        %v3672 = vadd.f32 %v2336, %v3671
        %v3673 = vpop.f32.mrb[0].mxu0
        %v3674 = vadd.f32 %v2340, %v3673
        %3675 = vmatprep.mubr.bf16.mxu0 0
        %3676 = vmatmul.mubr.bf16.gmra.mrb[0].mxu0 %v2245
        %v3677 = vpop.f32.mrb[0].mxu0
        %v3678 = vadd.f32 %v2336, %v3677
        %v3679 = vpop.f32.mrb[0].mxu0
        %v3680 = vadd.f32 %v2340, %v3679
        %v3681 = vpop.f32.mrb[0].mxu0
        %v3682 = vadd.f32 %v2336, %v3681
        %v3683 = vpop.f32.mrb[0].mxu0
        %v3684 = vadd.f32 %v2340, %v3683
        %3685 = vmatprep.mubr.bf16.mxu0 0
        %3686 = vmatmul.mubr.bf16.gmra.mrb[0].mxu0 %v2246
        %v3687 = vpop.f32.mrb[0].mxu0
        %v3688 = vadd.f32 %v2336, %v3687
        %v3689 = vpop.f32.mrb[0].mxu0
        %v3690 = vadd.f32 %v2340, %v3689
        %v3691 = vpop.f32.mrb[0].mxu0
        %v3692 = vadd.f32 %v2336, %v3691
        %v3693 = vpop.f32.mrb[0].mxu0
        %v3694 = vadd.f32 %v2340, %v3693
        %3695 = vmatprep.mubr.bf16.mxu0 0
        %3696 = vmatmul.mubr.bf16.gmra.mrb[0].mxu0 %v2247
        %v3697 = vpop.f32.mrb[0].mxu0
        %v3698 = vadd.f32 %v2336, %v3697
        %v3699 = vpop.f32.mrb[0].mxu0
        %v3700 = vadd.f32 %v2340, %v3699
        %v3701 = vpop.f32.mrb[0].mxu0
        %v3702 = vadd.f32 %v2336, %v3701
        %v3703 = vpop.f32.mrb[0].mxu0
        %v3704 = vadd.f32 %v2340, %v3703
        %3705 = vmatprep.mubr.bf16.mxu0 0
        %3706 = vmatmul.mubr.bf16.gmra.mrb[0].mxu0 %v2248
        %v3707 = vpop.f32.mrb[0].mxu0
        %v3708 = vadd.f32 %v2336, %v3707
        %v3709 = vpop.f32.mrb[0].mxu0
        %v3710 = vadd.f32 %v2340, %v3709
        %v3711 = vpop.f32.mrb[0].mxu0
        %v3712 = vadd.f32 %v2336, %v3711
        %v3713 = vpop.f32.mrb[0].mxu0
        %v3714 = vadd.f32 %v2340, %v3713
        %3715 = vmatprep.mubr.bf16.mxu0 0
        %3716 = vmatmul.mubr.bf16.gmra.mrb[0].mxu0 %v2249
        %v3717 = vpop.f32.mrb[0].mxu0
        %v3718 = vadd.f32 %v2336, %v3717
        %v3719 = vpop.f32.mrb[0].mxu0
        %v3720 = vadd.f32 %v2340, %v3719
        %v3721 = vpop.f32.mrb[0].mxu0
        %v3722 = vadd.f32 %v2336, %v3721
        %v3723 = vpop.f32.mrb[0].mxu0
        %v3724 = vadd.f32 %v2340, %v3723
        %3725 = vmatprep.mubr.bf16.mxu0 0
        %3726 = vmatmul.mubr.bf16.gmra.mrb[0].mxu0 %v2250
        %v3727 = vpop.f32.mrb[0].mxu0
        %v3728 = vadd.f32 %v2336, %v3727
        %v3729 = vpop.f32.mrb[0].mxu0
        %v3730 = vadd.f32 %v2340, %v3729
        %v3731 = vpop.f32.mrb[0].mxu0
        %v3732 = vadd.f32 %v2336, %v3731
        %v3733 = vpop.f32.mrb[0].mxu0
        %v3734 = vadd.f32 %v2340, %v3733
        %3735 = vdwg.mxu0
        %3736 = vmatprep.subr.bf16.mxu0 %v2556
        %3737 = vmatpush1.bf16.msra.mxu0 %v2555
        %3738 = vmatprep.subr.bf16.mxu0 %v2564
        %3739 = vmatpush1.bf16.msra.mxu0 %v2563
        %3740 = vmatprep.subr.bf16.mxu0 %v2572
        %3741 = vmatpush1.bf16.msra.mxu0 %v2571
        %3742 = vmatprep.subr.bf16.mxu0 %v2580
        %3743 = vmatpush1.bf16.msra.mxu0 %v2579
        %3744 = vmatprep.subr.bf16.mxu0 %v2588
        %3745 = vmatpush1.bf16.msra.mxu0 %v2587
        %3746 = vmatprep.subr.bf16.mxu0 %v2596
        %3747 = vmatpush1.bf16.msra.mxu0 %v2595
        %3748 = vmatprep.subr.bf16.mxu0 %v2604
        %3749 = vmatpush1.bf16.msra.mxu0 %v2603
        %3750 = vmatprep.subr.bf16.mxu0 %v2612
        %3751 = vmatpush1.bf16.msra.mxu0 %v2611
        %3752 = vmatprep.subr.bf16.mxu0 0
        %3753 = vmatpush1.bf16.msra.mxu0 0
        %3754 = vmatprep.subr.bf16.mxu0 0
        %3755 = vmatpush1.bf16.msra.mxu0 0
        %3756 = vmatprep.subr.bf16.mxu0 0
        %3757 = vmatpush1.bf16.msra.mxu0 0
        %3758 = vmatprep.subr.bf16.mxu0 0
        %3759 = vmatpush1.bf16.msra.mxu0 0
        %3760 = vmatprep.subr.bf16.mxu0 0
        %3761 = vmatpush1.bf16.msra.mxu0 0
        %3762 = vmatprep.subr.bf16.mxu0 0
        %3763 = vmatpush1.bf16.msra.mxu0 0
        %3764 = vmatprep.subr.bf16.mxu0 0
        %3765 = vmatpush1.bf16.msra.mxu0 0
        %3766 = vmatprep.subr.bf16.mxu0 0
        %3767 = vmatpush1.bf16.msra.mxu0 0
        %3768 = vmatprep.mubr.bf16.mxu0 0
        %3769 = vmatmul.mubr.bf16.gmra.mrb[0].mxu0 %v2219
        %v3770 = vpop.f32.mrb[0].mxu0
        %v3771 = vadd.f32 %v2344, %v3770
        %v3772 = vpop.f32.mrb[0].mxu0
        %v3773 = vadd.f32 %v2348, %v3772
        %v3774 = vpop.f32.mrb[0].mxu0
        %v3775 = vadd.f32 %v2344, %v3774
        %v3776 = vpop.f32.mrb[0].mxu0
        %v3777 = vadd.f32 %v2348, %v3776
        %3778 = vmatprep.mubr.bf16.mxu0 0
        %3779 = vmatmul.mubr.bf16.gmra.mrb[0].mxu0 %v2220
        %v3780 = vpop.f32.mrb[0].mxu0
        %v3781 = vadd.f32 %v2344, %v3780
        %v3782 = vpop.f32.mrb[0].mxu0
        %v3783 = vadd.f32 %v2348, %v3782
        %v3784 = vpop.f32.mrb[0].mxu0
        %v3785 = vadd.f32 %v2344, %v3784
        %v3786 = vpop.f32.mrb[0].mxu0
        %v3787 = vadd.f32 %v2348, %v3786
        %3788 = vmatprep.mubr.bf16.mxu0 0
        %3789 = vmatmul.mubr.bf16.gmra.mrb[0].mxu0 %v2221
        %v3790 = vpop.f32.mrb[0].mxu0
        %v3791 = vadd.f32 %v2344, %v3790
        %v3792 = vpop.f32.mrb[0].mxu0
        %v3793 = vadd.f32 %v2348, %v3792
        %v3794 = vpop.f32.mrb[0].mxu0
        %v3795 = vadd.f32 %v2344, %v3794
        %v3796 = vpop.f32.mrb[0].mxu0
        %v3797 = vadd.f32 %v2348, %v3796
        %3798 = vmatprep.mubr.bf16.mxu0 0
        %3799 = vmatmul.mubr.bf16.gmra.mrb[0].mxu0 %v2222
        %v3800 = vpop.f32.mrb[0].mxu0
        %v3801 = vadd.f32 %v2344, %v3800
        %v3802 = vpop.f32.mrb[0].mxu0
        %v3803 = vadd.f32 %v2348, %v3802
        %v3804 = vpop.f32.mrb[0].mxu0
        %v3805 = vadd.f32 %v2344, %v3804
        %v3806 = vpop.f32.mrb[0].mxu0
        %v3807 = vadd.f32 %v2348, %v3806
        %3808 = vmatprep.mubr.bf16.mxu0 0
        %3809 = vmatmul.mubr.bf16.gmra.mrb[0].mxu0 %v2223
        %v3810 = vpop.f32.mrb[0].mxu0
        %v3811 = vadd.f32 %v2344, %v3810
        %v3812 = vpop.f32.mrb[0].mxu0
        %v3813 = vadd.f32 %v2348, %v3812
        %v3814 = vpop.f32.mrb[0].mxu0
        %v3815 = vadd.f32 %v2344, %v3814
        %v3816 = vpop.f32.mrb[0].mxu0
        %v3817 = vadd.f32 %v2348, %v3816
        %3818 = vmatprep.mubr.bf16.mxu0 0
        %3819 = vmatmul.mubr.bf16.gmra.mrb[0].mxu0 %v2224
        %v3820 = vpop.f32.mrb[0].mxu0
        %v3821 = vadd.f32 %v2344, %v3820
        %v3822 = vpop.f32.mrb[0].mxu0
        %v3823 = vadd.f32 %v2348, %v3822
        %v3824 = vpop.f32.mrb[0].mxu0
        %v3825 = vadd.f32 %v2344, %v3824
        %v3826 = vpop.f32.mrb[0].mxu0
        %v3827 = vadd.f32 %v2348, %v3826
        %3828 = vmatprep.mubr.bf16.mxu0 0
        %3829 = vmatmul.mubr.bf16.gmra.mrb[0].mxu0 %v2225
        %v3830 = vpop.f32.mrb[0].mxu0
        %v3831 = vadd.f32 %v2344, %v3830
        %v3832 = vpop.f32.mrb[0].mxu0
        %v3833 = vadd.f32 %v2348, %v3832
        %v3834 = vpop.f32.mrb[0].mxu0
        %v3835 = vadd.f32 %v2344, %v3834
        %v3836 = vpop.f32.mrb[0].mxu0
        %v3837 = vadd.f32 %v2348, %v3836
        %3838 = vmatprep.mubr.bf16.mxu0 0
        %3839 = vmatmul.mubr.bf16.gmra.mrb[0].mxu0 %v2226
        %v3840 = vpop.f32.mrb[0].mxu0
        %v3841 = vadd.f32 %v2344, %v3840
        %v3842 = vpop.f32.mrb[0].mxu0
        %v3843 = vadd.f32 %v2348, %v3842
        %v3844 = vpop.f32.mrb[0].mxu0
        %v3845 = vadd.f32 %v2344, %v3844
        %v3846 = vpop.f32.mrb[0].mxu0
        %v3847 = vadd.f32 %v2348, %v3846
        %3848 = vmatprep.mubr.bf16.mxu0 0
        %3849 = vmatmul.mubr.bf16.gmra.mrb[0].mxu0 %v2227
        %v3850 = vpop.f32.mrb[0].mxu0
        %v3851 = vadd.f32 %v2344, %v3850
        %v3852 = vpop.f32.mrb[0].mxu0
        %v3853 = vadd.f32 %v2348, %v3852
        %v3854 = vpop.f32.mrb[0].mxu0
        %v3855 = vadd.f32 %v2344, %v3854
        %v3856 = vpop.f32.mrb[0].mxu0
        %v3857 = vadd.f32 %v2348, %v3856
        %3858 = vmatprep.mubr.bf16.mxu0 0
        %3859 = vmatmul.mubr.bf16.gmra.mrb[0].mxu0 %v2228
        %v3860 = vpop.f32.mrb[0].mxu0
        %v3861 = vadd.f32 %v2344, %v3860
        %v3862 = vpop.f32.mrb[0].mxu0
        %v3863 = vadd.f32 %v2348, %v3862
        %v3864 = vpop.f32.mrb[0].mxu0
        %v3865 = vadd.f32 %v2344, %v3864
        %v3866 = vpop.f32.mrb[0].mxu0
        %v3867 = vadd.f32 %v2348, %v3866
        %3868 = vmatprep.mubr.bf16.mxu0 0
        %3869 = vmatmul.mubr.bf16.gmra.mrb[0].mxu0 %v2229
        %v3870 = vpop.f32.mrb[0].mxu0
        %v3871 = vadd.f32 %v2344, %v3870
        %v3872 = vpop.f32.mrb[0].mxu0
        %v3873 = vadd.f32 %v2348, %v3872
        %v3874 = vpop.f32.mrb[0].mxu0
        %v3875 = vadd.f32 %v2344, %v3874
        %v3876 = vpop.f32.mrb[0].mxu0
        %v3877 = vadd.f32 %v2348, %v3876
        %3878 = vmatprep.mubr.bf16.mxu0 0
        %3879 = vmatmul.mubr.bf16.gmra.mrb[0].mxu0 %v2230
        %v3880 = vpop.f32.mrb[0].mxu0
        %v3881 = vadd.f32 %v2344, %v3880
        %v3882 = vpop.f32.mrb[0].mxu0
        %v3883 = vadd.f32 %v2348, %v3882
        %v3884 = vpop.f32.mrb[0].mxu0
        %v3885 = vadd.f32 %v2344, %v3884
        %v3886 = vpop.f32.mrb[0].mxu0
        %v3887 = vadd.f32 %v2348, %v3886
        %3888 = vmatprep.mubr.bf16.mxu0 0
        %3889 = vmatmul.mubr.bf16.gmra.mrb[0].mxu0 %v2231
        %v3890 = vpop.f32.mrb[0].mxu0
        %v3891 = vadd.f32 %v2344, %v3890
        %v3892 = vpop.f32.mrb[0].mxu0
        %v3893 = vadd.f32 %v2348, %v3892
        %v3894 = vpop.f32.mrb[0].mxu0
        %v3895 = vadd.f32 %v2344, %v3894
        %v3896 = vpop.f32.mrb[0].mxu0
        %v3897 = vadd.f32 %v2348, %v3896
        %3898 = vmatprep.mubr.bf16.mxu0 0
        %3899 = vmatmul.mubr.bf16.gmra.mrb[0].mxu0 %v2232
        %v3900 = vpop.f32.mrb[0].mxu0
        %v3901 = vadd.f32 %v2344, %v3900
        %v3902 = vpop.f32.mrb[0].mxu0
        %v3903 = vadd.f32 %v2348, %v3902
        %v3904 = vpop.f32.mrb[0].mxu0
        %v3905 = vadd.f32 %v2344, %v3904
        %v3906 = vpop.f32.mrb[0].mxu0
        %v3907 = vadd.f32 %v2348, %v3906
        %3908 = vmatprep.mubr.bf16.mxu0 0
        %3909 = vmatmul.mubr.bf16.gmra.mrb[0].mxu0 %v2233
        %v3910 = vpop.f32.mrb[0].mxu0
        %v3911 = vadd.f32 %v2344, %v3910
        %v3912 = vpop.f32.mrb[0].mxu0
        %v3913 = vadd.f32 %v2348, %v3912
        %v3914 = vpop.f32.mrb[0].mxu0
        %v3915 = vadd.f32 %v2344, %v3914
        %v3916 = vpop.f32.mrb[0].mxu0
        %v3917 = vadd.f32 %v2348, %v3916
        %3918 = vmatprep.mubr.bf16.mxu0 0
        %3919 = vmatmul.mubr.bf16.gmra.mrb[0].mxu0 %v2234
        %v3920 = vpop.f32.mrb[0].mxu0
        %v3921 = vadd.f32 %v2344, %v3920
        %v3922 = vpop.f32.mrb[0].mxu0
        %v3923 = vadd.f32 %v2348, %v3922
        %v3924 = vpop.f32.mrb[0].mxu0
        %v3925 = vadd.f32 %v2344, %v3924
        %v3926 = vpop.f32.mrb[0].mxu0
        %v3927 = vadd.f32 %v2348, %v3926
        %3928 = vmatprep.mubr.bf16.mxu0 0
        %3929 = vmatmul.mubr.bf16.gmra.mrb[0].mxu0 %v2235
        %v3930 = vpop.f32.mrb[0].mxu0
        %v3931 = vadd.f32 %v2344, %v3930
        %v3932 = vpop.f32.mrb[0].mxu0
        %v3933 = vadd.f32 %v2348, %v3932
        %v3934 = vpop.f32.mrb[0].mxu0
        %v3935 = vadd.f32 %v2344, %v3934
        %v3936 = vpop.f32.mrb[0].mxu0
        %v3937 = vadd.f32 %v2348, %v3936
        %3938 = vmatprep.mubr.bf16.mxu0 0
        %3939 = vmatmul.mubr.bf16.gmra.mrb[0].mxu0 %v2236
        %v3940 = vpop.f32.mrb[0].mxu0
        %v3941 = vadd.f32 %v2344, %v3940
        %v3942 = vpop.f32.mrb[0].mxu0
        %v3943 = vadd.f32 %v2348, %v3942
        %v3944 = vpop.f32.mrb[0].mxu0
        %v3945 = vadd.f32 %v2344, %v3944
        %v3946 = vpop.f32.mrb[0].mxu0
        %v3947 = vadd.f32 %v2348, %v3946
        %3948 = vmatprep.mubr.bf16.mxu0 0
        %3949 = vmatmul.mubr.bf16.gmra.mrb[0].mxu0 %v2237
        %v3950 = vpop.f32.mrb[0].mxu0
        %v3951 = vadd.f32 %v2344, %v3950
        %v3952 = vpop.f32.mrb[0].mxu0
        %v3953 = vadd.f32 %v2348, %v3952
        %v3954 = vpop.f32.mrb[0].mxu0
        %v3955 = vadd.f32 %v2344, %v3954
        %v3956 = vpop.f32.mrb[0].mxu0
        %v3957 = vadd.f32 %v2348, %v3956
        %3958 = vmatprep.mubr.bf16.mxu0 0
        %3959 = vmatmul.mubr.bf16.gmra.mrb[0].mxu0 %v2238
        %v3960 = vpop.f32.mrb[0].mxu0
        %v3961 = vadd.f32 %v2344, %v3960
        %v3962 = vpop.f32.mrb[0].mxu0
        %v3963 = vadd.f32 %v2348, %v3962
        %v3964 = vpop.f32.mrb[0].mxu0
        %v3965 = vadd.f32 %v2344, %v3964
        %v3966 = vpop.f32.mrb[0].mxu0
        %v3967 = vadd.f32 %v2348, %v3966
        %3968 = vmatprep.mubr.bf16.mxu0 0
        %3969 = vmatmul.mubr.bf16.gmra.mrb[0].mxu0 %v2239
        %v3970 = vpop.f32.mrb[0].mxu0
        %v3971 = vadd.f32 %v2344, %v3970
        %v3972 = vpop.f32.mrb[0].mxu0
        %v3973 = vadd.f32 %v2348, %v3972
        %v3974 = vpop.f32.mrb[0].mxu0
        %v3975 = vadd.f32 %v2344, %v3974
        %v3976 = vpop.f32.mrb[0].mxu0
        %v3977 = vadd.f32 %v2348, %v3976
        %3978 = vmatprep.mubr.bf16.mxu0 0
        %3979 = vmatmul.mubr.bf16.gmra.mrb[0].mxu0 %v2240
        %v3980 = vpop.f32.mrb[0].mxu0
        %v3981 = vadd.f32 %v2344, %v3980
        %v3982 = vpop.f32.mrb[0].mxu0
        %v3983 = vadd.f32 %v2348, %v3982
        %v3984 = vpop.f32.mrb[0].mxu0
        %v3985 = vadd.f32 %v2344, %v3984
        %v3986 = vpop.f32.mrb[0].mxu0
        %v3987 = vadd.f32 %v2348, %v3986
        %3988 = vmatprep.mubr.bf16.mxu0 0
        %3989 = vmatmul.mubr.bf16.gmra.mrb[0].mxu0 %v2241
        %v3990 = vpop.f32.mrb[0].mxu0
        %v3991 = vadd.f32 %v2344, %v3990
        %v3992 = vpop.f32.mrb[0].mxu0
        %v3993 = vadd.f32 %v2348, %v3992
        %v3994 = vpop.f32.mrb[0].mxu0
        %v3995 = vadd.f32 %v2344, %v3994
        %v3996 = vpop.f32.mrb[0].mxu0
        %v3997 = vadd.f32 %v2348, %v3996
        %3998 = vmatprep.mubr.bf16.mxu0 0
        %3999 = vmatmul.mubr.bf16.gmra.mrb[0].mxu0 %v2242
        %v4000 = vpop.f32.mrb[0].mxu0
        %v4001 = vadd.f32 %v2344, %v4000
        %v4002 = vpop.f32.mrb[0].mxu0
        %v4003 = vadd.f32 %v2348, %v4002
        %v4004 = vpop.f32.mrb[0].mxu0
        %v4005 = vadd.f32 %v2344, %v4004
        %v4006 = vpop.f32.mrb[0].mxu0
        %v4007 = vadd.f32 %v2348, %v4006
        %4008 = vmatprep.mubr.bf16.mxu0 0
        %4009 = vmatmul.mubr.bf16.gmra.mrb[0].mxu0 %v2243
        %v4010 = vpop.f32.mrb[0].mxu0
        %v4011 = vadd.f32 %v2344, %v4010
        %v4012 = vpop.f32.mrb[0].mxu0
        %v4013 = vadd.f32 %v2348, %v4012
        %v4014 = vpop.f32.mrb[0].mxu0
        %v4015 = vadd.f32 %v2344, %v4014
        %v4016 = vpop.f32.mrb[0].mxu0
        %v4017 = vadd.f32 %v2348, %v4016
        %4018 = vmatprep.mubr.bf16.mxu0 0
        %4019 = vmatmul.mubr.bf16.gmra.mrb[0].mxu0 %v2244
        %v4020 = vpop.f32.mrb[0].mxu0
        %v4021 = vadd.f32 %v2344, %v4020
        %v4022 = vpop.f32.mrb[0].mxu0
        %v4023 = vadd.f32 %v2348, %v4022
        %v4024 = vpop.f32.mrb[0].mxu0
        %v4025 = vadd.f32 %v2344, %v4024
        %v4026 = vpop.f32.mrb[0].mxu0
        %v4027 = vadd.f32 %v2348, %v4026
        %4028 = vmatprep.mubr.bf16.mxu0 0
        %4029 = vmatmul.mubr.bf16.gmra.mrb[0].mxu0 %v2245
        %v4030 = vpop.f32.mrb[0].mxu0
        %v4031 = vadd.f32 %v2344, %v4030
        %v4032 = vpop.f32.mrb[0].mxu0
        %v4033 = vadd.f32 %v2348, %v4032
        %v4034 = vpop.f32.mrb[0].mxu0
        %v4035 = vadd.f32 %v2344, %v4034
        %v4036 = vpop.f32.mrb[0].mxu0
        %v4037 = vadd.f32 %v2348, %v4036
        %4038 = vmatprep.mubr.bf16.mxu0 0
        %4039 = vmatmul.mubr.bf16.gmra.mrb[0].mxu0 %v2246
        %v4040 = vpop.f32.mrb[0].mxu0
        %v4041 = vadd.f32 %v2344, %v4040
        %v4042 = vpop.f32.mrb[0].mxu0
        %v4043 = vadd.f32 %v2348, %v4042
        %v4044 = vpop.f32.mrb[0].mxu0
        %v4045 = vadd.f32 %v2344, %v4044
        %v4046 = vpop.f32.mrb[0].mxu0
        %v4047 = vadd.f32 %v2348, %v4046
        %4048 = vmatprep.mubr.bf16.mxu0 0
        %4049 = vmatmul.mubr.bf16.gmra.mrb[0].mxu0 %v2247
        %v4050 = vpop.f32.mrb[0].mxu0
        %v4051 = vadd.f32 %v2344, %v4050
        %v4052 = vpop.f32.mrb[0].mxu0
        %v4053 = vadd.f32 %v2348, %v4052
        %v4054 = vpop.f32.mrb[0].mxu0
        %v4055 = vadd.f32 %v2344, %v4054
        %v4056 = vpop.f32.mrb[0].mxu0
        %v4057 = vadd.f32 %v2348, %v4056
        %4058 = vmatprep.mubr.bf16.mxu0 0
        %4059 = vmatmul.mubr.bf16.gmra.mrb[0].mxu0 %v2248
        %v4060 = vpop.f32.mrb[0].mxu0
        %v4061 = vadd.f32 %v2344, %v4060
        %v4062 = vpop.f32.mrb[0].mxu0
        %v4063 = vadd.f32 %v2348, %v4062
        %v4064 = vpop.f32.mrb[0].mxu0
        %v4065 = vadd.f32 %v2344, %v4064
        %v4066 = vpop.f32.mrb[0].mxu0
        %v4067 = vadd.f32 %v2348, %v4066
        %4068 = vmatprep.mubr.bf16.mxu0 0
        %4069 = vmatmul.mubr.bf16.gmra.mrb[0].mxu0 %v2249
        %v4070 = vpop.f32.mrb[0].mxu0
        %v4071 = vadd.f32 %v2344, %v4070
        %v4072 = vpop.f32.mrb[0].mxu0
        %v4073 = vadd.f32 %v2348, %v4072
        %v4074 = vpop.f32.mrb[0].mxu0
        %v4075 = vadd.f32 %v2344, %v4074
        %v4076 = vpop.f32.mrb[0].mxu0
        %v4077 = vadd.f32 %v2348, %v4076
        %4078 = vmatprep.mubr.bf16.mxu0 0
        %4079 = vmatmul.mubr.bf16.gmra.mrb[0].mxu0 %v2250
        %v4080 = vpop.f32.mrb[0].mxu0
        %v4081 = vadd.f32 %v2344, %v4080
        %v4082 = vpop.f32.mrb[0].mxu0
        %v4083 = vadd.f32 %v2348, %v4082
        %v4084 = vpop.f32.mrb[0].mxu0
        %v4085 = vadd.f32 %v2344, %v4084
        %v4086 = vpop.f32.mrb[0].mxu0
        %v4087 = vadd.f32 %v2348, %v4086
        %4088 = vdwg.mxu0
        %v4089 = vld [vmem:[#allocation2] sm:$0xff]
        %v4090 = vld [vmem:[#allocation2 + $0x8] sm:$0xff]
        %v4091 = vld [vmem:[#allocation2 + $0x10] sm:$0xff]
        %v4092 = vld [vmem:[#allocation2 + $0x18] sm:$0xff]
        %v4093 = vld [vmem:[#allocation2 + $0x20] sm:$0xff]
        %v4094 = vld [vmem:[#allocation2 + $0x28] sm:$0xff]
        %v4095 = vld [vmem:[#allocation2 + $0x30] sm:$0xff]
        %v4096 = vld [vmem:[#allocation2 + $0x38] sm:$0xff]
        %v4097 = vmax.f32 %v2712, %v2716
        %v4098 = vmax.f32 %v4097, %v2722
        %v4099 = vmax.f32 %v4098, %v2726
        %v4100 = vmax.f32 %v4099, %v2732
        %v4101 = vmax.f32 %v4100, %v2736
        %v4102 = vmax.f32 %v4101, %v2742
        %v4103 = vmax.f32 %v4102, %v2746
        %v4104 = vmax.f32 %v4103, %v2752
        %v4105 = vmax.f32 %v4104, %v2756
        %v4106 = vmax.f32 %v4105, %v2762
        %v4107 = vmax.f32 %v4106, %v2766
        %v4108 = vmax.f32 %v4107, %v2772
        %v4109 = vmax.f32 %v4108, %v2776
        %v4110 = vmax.f32 %v4109, %v2782
        %v4111 = vmax.f32 %v4110, %v2786
        %v4112 = vmax.f32 %v4111, %v2792
        %v4113 = vmax.f32 %v4112, %v2796
        %v4114 = vmax.f32 %v4113, %v2802
        %v4115 = vmax.f32 %v4114, %v2806
        %v4116 = vmax.f32 %v4115, %v2812
        %v4117 = vmax.f32 %v4116, %v2816
        %v4118 = vmax.f32 %v4117, %v2822
        %v4119 = vmax.f32 %v4118, %v2826
        %v4120 = vmax.f32 %v4119, %v2832
        %v4121 = vmax.f32 %v4120, %v2836
        %v4122 = vmax.f32 %v4121, %v2842
        %v4123 = vmax.f32 %v4122, %v2846
        %v4124 = vmax.f32 %v4123, %v2852
        %v4125 = vmax.f32 %v4124, %v2856
        %v4126 = vmax.f32 %v4125, %v2862
        %v4127 = vmax.f32 %v4126, %v2866
        %v4128 = vmax.f32 %v4127, %v2872
        %v4129 = vmax.f32 %v4128, %v2876
        %v4130 = vmax.f32 %v4129, %v2882
        %v4131 = vmax.f32 %v4130, %v2886
        %v4132 = vmax.f32 %v4131, %v2892
        %v4133 = vmax.f32 %v4132, %v2896
        %v4134 = vmax.f32 %v4133, %v2902
        %v4135 = vmax.f32 %v4134, %v2906
        %v4136 = vmax.f32 %v4135, %v2912
        %v4137 = vmax.f32 %v4136, %v2916
        %v4138 = vmax.f32 %v4137, %v2922
        %v4139 = vmax.f32 %v4138, %v2926
        %v4140 = vmax.f32 %v4139, %v2932
        %v4141 = vmax.f32 %v4140, %v2936
        %v4142 = vmax.f32 %v4141, %v2942
        %v4143 = vmax.f32 %v4142, %v2946
        %v4144 = vmax.f32 %v4143, %v2952
        %v4145 = vmax.f32 %v4144, %v2956
        %v4146 = vmax.f32 %v4145, %v2962
        %v4147 = vmax.f32 %v4146, %v2966
        %v4148 = vmax.f32 %v4147, %v2972
        %v4149 = vmax.f32 %v4148, %v2976
        %v4150 = vmax.f32 %v4149, %v2982
        %v4151 = vmax.f32 %v4150, %v2986
        %v4152 = vmax.f32 %v4151, %v2992
        %v4153 = vmax.f32 %v4152, %v2996
        %v4154 = vmax.f32 %v4153, %v3002
        %v4155 = vmax.f32 %v4154, %v3006
        %v4156 = vmax.f32 %v4155, %v3012
        %v4157 = vmax.f32 %v4156, %v3016
        %v4158 = vmax.f32 %v4157, %v3022
        %v4159 = vmax.f32 %v4158, %v3026
        %v4160 = vmax.f32 %v2714, %v2718
        %v4161 = vmax.f32 %v4160, %v2724
        %v4162 = vmax.f32 %v4161, %v2728
        %v4163 = vmax.f32 %v4162, %v2734
        %v4164 = vmax.f32 %v4163, %v2738
        %v4165 = vmax.f32 %v4164, %v2744
        %v4166 = vmax.f32 %v4165, %v2748
        %v4167 = vmax.f32 %v4166, %v2754
        %v4168 = vmax.f32 %v4167, %v2758
        %v4169 = vmax.f32 %v4168, %v2764
        %v4170 = vmax.f32 %v4169, %v2768
        %v4171 = vmax.f32 %v4170, %v2774
        %v4172 = vmax.f32 %v4171, %v2778
        %v4173 = vmax.f32 %v4172, %v2784
        %v4174 = vmax.f32 %v4173, %v2788
        %v4175 = vmax.f32 %v4174, %v2794
        %v4176 = vmax.f32 %v4175, %v2798
        %v4177 = vmax.f32 %v4176, %v2804
        %v4178 = vmax.f32 %v4177, %v2808
        %v4179 = vmax.f32 %v4178, %v2814
        %v4180 = vmax.f32 %v4179, %v2818
        %v4181 = vmax.f32 %v4180, %v2824
        %v4182 = vmax.f32 %v4181, %v2828
        %v4183 = vmax.f32 %v4182, %v2834
        %v4184 = vmax.f32 %v4183, %v2838
        %v4185 = vmax.f32 %v4184, %v2844
        %v4186 = vmax.f32 %v4185, %v2848
        %v4187 = vmax.f32 %v4186, %v2854
        %v4188 = vmax.f32 %v4187, %v2858
        %v4189 = vmax.f32 %v4188, %v2864
        %v4190 = vmax.f32 %v4189, %v2868
        %v4191 = vmax.f32 %v4190, %v2874
        %v4192 = vmax.f32 %v4191, %v2878
        %v4193 = vmax.f32 %v4192, %v2884
        %v4194 = vmax.f32 %v4193, %v2888
        %v4195 = vmax.f32 %v4194, %v2894
        %v4196 = vmax.f32 %v4195, %v2898
        %v4197 = vmax.f32 %v4196, %v2904
        %v4198 = vmax.f32 %v4197, %v2908
        %v4199 = vmax.f32 %v4198, %v2914
        %v4200 = vmax.f32 %v4199, %v2918
        %v4201 = vmax.f32 %v4200, %v2924
        %v4202 = vmax.f32 %v4201, %v2928
        %v4203 = vmax.f32 %v4202, %v2934
        %v4204 = vmax.f32 %v4203, %v2938
        %v4205 = vmax.f32 %v4204, %v2944
        %v4206 = vmax.f32 %v4205, %v2948
        %v4207 = vmax.f32 %v4206, %v2954
        %v4208 = vmax.f32 %v4207, %v2958
        %v4209 = vmax.f32 %v4208, %v2964
        %v4210 = vmax.f32 %v4209, %v2968
        %v4211 = vmax.f32 %v4210, %v2974
        %v4212 = vmax.f32 %v4211, %v2978
        %v4213 = vmax.f32 %v4212, %v2984
        %v4214 = vmax.f32 %v4213, %v2988
        %v4215 = vmax.f32 %v4214, %v2994
        %v4216 = vmax.f32 %v4215, %v2998
        %v4217 = vmax.f32 %v4216, %v3004
        %v4218 = vmax.f32 %v4217, %v3008
        %v4219 = vmax.f32 %v4218, %v3014
        %v4220 = vmax.f32 %v4219, %v3018
        %v4221 = vmax.f32 %v4220, %v3024
        %v4222 = vmax.f32 %v4221, %v3028
        %v4223 = vmax.f32 %v3065, %v3069
        %v4224 = vmax.f32 %v4223, %v3075
        %v4225 = vmax.f32 %v4224, %v3079
        %v4226 = vmax.f32 %v4225, %v3085
        %v4227 = vmax.f32 %v4226, %v3089
        %v4228 = vmax.f32 %v4227, %v3095
        %v4229 = vmax.f32 %v4228, %v3099
        %v4230 = vmax.f32 %v4229, %v3105
        %v4231 = vmax.f32 %v4230, %v3109
        %v4232 = vmax.f32 %v4231, %v3115
        %v4233 = vmax.f32 %v4232, %v3119
        %v4234 = vmax.f32 %v4233, %v3125
        %v4235 = vmax.f32 %v4234, %v3129
        %v4236 = vmax.f32 %v4235, %v3135
        %v4237 = vmax.f32 %v4236, %v3139
        %v4238 = vmax.f32 %v4237, %v3145
        %v4239 = vmax.f32 %v4238, %v3149
        %v4240 = vmax.f32 %v4239, %v3155
        %v4241 = vmax.f32 %v4240, %v3159
        %v4242 = vmax.f32 %v4241, %v3165
        %v4243 = vmax.f32 %v4242, %v3169
        %v4244 = vmax.f32 %v4243, %v3175
        %v4245 = vmax.f32 %v4244, %v3179
        %v4246 = vmax.f32 %v4245, %v3185
        %v4247 = vmax.f32 %v4246, %v3189
        %v4248 = vmax.f32 %v4247, %v3195
        %v4249 = vmax.f32 %v4248, %v3199
        %v4250 = vmax.f32 %v4249, %v3205
        %v4251 = vmax.f32 %v4250, %v3209
        %v4252 = vmax.f32 %v4251, %v3215
        %v4253 = vmax.f32 %v4252, %v3219
        %v4254 = vmax.f32 %v4253, %v3225
        %v4255 = vmax.f32 %v4254, %v3229
        %v4256 = vmax.f32 %v4255, %v3235
        %v4257 = vmax.f32 %v4256, %v3239
        %v4258 = vmax.f32 %v4257, %v3245
        %v4259 = vmax.f32 %v4258, %v3249
        %v4260 = vmax.f32 %v4259, %v3255
        %v4261 = vmax.f32 %v4260, %v3259
        %v4262 = vmax.f32 %v4261, %v3265
        %v4263 = vmax.f32 %v4262, %v3269
        %v4264 = vmax.f32 %v4263, %v3275
        %v4265 = vmax.f32 %v4264, %v3279
        %v4266 = vmax.f32 %v4265, %v3285
        %v4267 = vmax.f32 %v4266, %v3289
        %v4268 = vmax.f32 %v4267, %v3295
        %v4269 = vmax.f32 %v4268, %v3299
        %v4270 = vmax.f32 %v4269, %v3305
        %v4271 = vmax.f32 %v4270, %v3309
        %v4272 = vmax.f32 %v4271, %v3315
        %v4273 = vmax.f32 %v4272, %v3319
        %v4274 = vmax.f32 %v4273, %v3325
        %v4275 = vmax.f32 %v4274, %v3329
        %v4276 = vmax.f32 %v4275, %v3335
        %v4277 = vmax.f32 %v4276, %v3339
        %v4278 = vmax.f32 %v4277, %v3345
        %v4279 = vmax.f32 %v4278, %v3349
        %v4280 = vmax.f32 %v4279, %v3355
        %v4281 = vmax.f32 %v4280, %v3359
        %v4282 = vmax.f32 %v4281, %v3365
        %v4283 = vmax.f32 %v4282, %v3369
        %v4284 = vmax.f32 %v4283, %v3375
        %v4285 = vmax.f32 %v4284, %v3379
        %v4286 = vmax.f32 %v3067, %v3071
        %v4287 = vmax.f32 %v4286, %v3077
        %v4288 = vmax.f32 %v4287, %v3081
        %v4289 = vmax.f32 %v4288, %v3087
        %v4290 = vmax.f32 %v4289, %v3091
        %v4291 = vmax.f32 %v4290, %v3097
        %v4292 = vmax.f32 %v4291, %v3101
        %v4293 = vmax.f32 %v4292, %v3107
        %v4294 = vmax.f32 %v4293, %v3111
        %v4295 = vmax.f32 %v4294, %v3117
        %v4296 = vmax.f32 %v4295, %v3121
        %v4297 = vmax.f32 %v4296, %v3127
        %v4298 = vmax.f32 %v4297, %v3131
        %v4299 = vmax.f32 %v4298, %v3137
        %v4300 = vmax.f32 %v4299, %v3141
        %v4301 = vmax.f32 %v4300, %v3147
        %v4302 = vmax.f32 %v4301, %v3151
        %v4303 = vmax.f32 %v4302, %v3157
        %v4304 = vmax.f32 %v4303, %v3161
        %v4305 = vmax.f32 %v4304, %v3167
        %v4306 = vmax.f32 %v4305, %v3171
        %v4307 = vmax.f32 %v4306, %v3177
        %v4308 = vmax.f32 %v4307, %v3181
        %v4309 = vmax.f32 %v4308, %v3187
        %v4310 = vmax.f32 %v4309, %v3191
        %v4311 = vmax.f32 %v4310, %v3197
        %v4312 = vmax.f32 %v4311, %v3201
        %v4313 = vmax.f32 %v4312, %v3207
        %v4314 = vmax.f32 %v4313, %v3211
        %v4315 = vmax.f32 %v4314, %v3217
        %v4316 = vmax.f32 %v4315, %v3221
        %v4317 = vmax.f32 %v4316, %v3227
        %v4318 = vmax.f32 %v4317, %v3231
        %v4319 = vmax.f32 %v4318, %v3237
        %v4320 = vmax.f32 %v4319, %v3241
        %v4321 = vmax.f32 %v4320, %v3247
        %v4322 = vmax.f32 %v4321, %v3251
        %v4323 = vmax.f32 %v4322, %v3257
        %v4324 = vmax.f32 %v4323, %v3261
        %v4325 = vmax.f32 %v4324, %v3267
        %v4326 = vmax.f32 %v4325, %v3271
        %v4327 = vmax.f32 %v4326, %v3277
        %v4328 = vmax.f32 %v4327, %v3281
        %v4329 = vmax.f32 %v4328, %v3287
        %v4330 = vmax.f32 %v4329, %v3291
        %v4331 = vmax.f32 %v4330, %v3297
        %v4332 = vmax.f32 %v4331, %v3301
        %v4333 = vmax.f32 %v4332, %v3307
        %v4334 = vmax.f32 %v4333, %v3311
        %v4335 = vmax.f32 %v4334, %v3317
        %v4336 = vmax.f32 %v4335, %v3321
        %v4337 = vmax.f32 %v4336, %v3327
        %v4338 = vmax.f32 %v4337, %v3331
        %v4339 = vmax.f32 %v4338, %v3337
        %v4340 = vmax.f32 %v4339, %v3341
        %v4341 = vmax.f32 %v4340, %v3347
        %v4342 = vmax.f32 %v4341, %v3351
        %v4343 = vmax.f32 %v4342, %v3357
        %v4344 = vmax.f32 %v4343, %v3361
        %v4345 = vmax.f32 %v4344, %v3367
        %v4346 = vmax.f32 %v4345, %v3371
        %v4347 = vmax.f32 %v4346, %v3377
        %v4348 = vmax.f32 %v4347, %v3381
        %v4349 = vmax.f32 %v3418, %v3422
        %v4350 = vmax.f32 %v4349, %v3428
        %v4351 = vmax.f32 %v4350, %v3432
        %v4352 = vmax.f32 %v4351, %v3438
        %v4353 = vmax.f32 %v4352, %v3442
        %v4354 = vmax.f32 %v4353, %v3448
        %v4355 = vmax.f32 %v4354, %v3452
        %v4356 = vmax.f32 %v4355, %v3458
        %v4357 = vmax.f32 %v4356, %v3462
        %v4358 = vmax.f32 %v4357, %v3468
        %v4359 = vmax.f32 %v4358, %v3472
        %v4360 = vmax.f32 %v4359, %v3478
        %v4361 = vmax.f32 %v4360, %v3482
        %v4362 = vmax.f32 %v4361, %v3488
        %v4363 = vmax.f32 %v4362, %v3492
        %v4364 = vmax.f32 %v4363, %v3498
        %v4365 = vmax.f32 %v4364, %v3502
        %v4366 = vmax.f32 %v4365, %v3508
        %v4367 = vmax.f32 %v4366, %v3512
        %v4368 = vmax.f32 %v4367, %v3518
        %v4369 = vmax.f32 %v4368, %v3522
        %v4370 = vmax.f32 %v4369, %v3528
        %v4371 = vmax.f32 %v4370, %v3532
        %v4372 = vmax.f32 %v4371, %v3538
        %v4373 = vmax.f32 %v4372, %v3542
        %v4374 = vmax.f32 %v4373, %v3548
        %v4375 = vmax.f32 %v4374, %v3552
        %v4376 = vmax.f32 %v4375, %v3558
        %v4377 = vmax.f32 %v4376, %v3562
        %v4378 = vmax.f32 %v4377, %v3568
        %v4379 = vmax.f32 %v4378, %v3572
        %v4380 = vmax.f32 %v4379, %v3578
        %v4381 = vmax.f32 %v4380, %v3582
        %v4382 = vmax.f32 %v4381, %v3588
        %v4383 = vmax.f32 %v4382, %v3592
        %v4384 = vmax.f32 %v4383, %v3598
        %v4385 = vmax.f32 %v4384, %v3602
        %v4386 = vmax.f32 %v4385, %v3608
        %v4387 = vmax.f32 %v4386, %v3612
        %v4388 = vmax.f32 %v4387, %v3618
        %v4389 = vmax.f32 %v4388, %v3622
        %v4390 = vmax.f32 %v4389, %v3628
        %v4391 = vmax.f32 %v4390, %v3632
        %v4392 = vmax.f32 %v4391, %v3638
        %v4393 = vmax.f32 %v4392, %v3642
        %v4394 = vmax.f32 %v4393, %v3648
        %v4395 = vmax.f32 %v4394, %v3652
        %v4396 = vmax.f32 %v4395, %v3658
        %v4397 = vmax.f32 %v4396, %v3662
        %v4398 = vmax.f32 %v4397, %v3668
        %v4399 = vmax.f32 %v4398, %v3672
        %v4400 = vmax.f32 %v4399, %v3678
        %v4401 = vmax.f32 %v4400, %v3682
        %v4402 = vmax.f32 %v4401, %v3688
        %v4403 = vmax.f32 %v4402, %v3692
        %v4404 = vmax.f32 %v4403, %v3698
        %v4405 = vmax.f32 %v4404, %v3702
        %v4406 = vmax.f32 %v4405, %v3708
        %v4407 = vmax.f32 %v4406, %v3712
        %v4408 = vmax.f32 %v4407, %v3718
        %v4409 = vmax.f32 %v4408, %v3722
        %v4410 = vmax.f32 %v4409, %v3728
        %v4411 = vmax.f32 %v4410, %v3732
        %v4412 = vmax.f32 %v3420, %v3424
        %v4413 = vmax.f32 %v4412, %v3430
        %v4414 = vmax.f32 %v4413, %v3434
        %v4415 = vmax.f32 %v4414, %v3440
        %v4416 = vmax.f32 %v4415, %v3444
        %v4417 = vmax.f32 %v4416, %v3450
        %v4418 = vmax.f32 %v4417, %v3454
        %v4419 = vmax.f32 %v4418, %v3460
        %v4420 = vmax.f32 %v4419, %v3464
        %v4421 = vmax.f32 %v4420, %v3470
        %v4422 = vmax.f32 %v4421, %v3474
        %v4423 = vmax.f32 %v4422, %v3480
        %v4424 = vmax.f32 %v4423, %v3484
        %v4425 = vmax.f32 %v4424, %v3490
        %v4426 = vmax.f32 %v4425, %v3494
        %v4427 = vmax.f32 %v4426, %v3500
        %v4428 = vmax.f32 %v4427, %v3504
        %v4429 = vmax.f32 %v4428, %v3510
        %v4430 = vmax.f32 %v4429, %v3514
        %v4431 = vmax.f32 %v4430, %v3520
        %v4432 = vmax.f32 %v4431, %v3524
        %v4433 = vmax.f32 %v4432, %v3530
        %v4434 = vmax.f32 %v4433, %v3534
        %v4435 = vmax.f32 %v4434, %v3540
        %v4436 = vmax.f32 %v4435, %v3544
        %v4437 = vmax.f32 %v4436, %v3550
        %v4438 = vmax.f32 %v4437, %v3554
        %v4439 = vmax.f32 %v4438, %v3560
        %v4440 = vmax.f32 %v4439, %v3564
        %v4441 = vmax.f32 %v4440, %v3570
        %v4442 = vmax.f32 %v4441, %v3574
        %v4443 = vmax.f32 %v4442, %v3580
        %v4444 = vmax.f32 %v4443, %v3584
        %v4445 = vmax.f32 %v4444, %v3590
        %v4446 = vmax.f32 %v4445, %v3594
        %v4447 = vmax.f32 %v4446, %v3600
        %v4448 = vmax.f32 %v4447, %v3604
        %v4449 = vmax.f32 %v4448, %v3610
        %v4450 = vmax.f32 %v4449, %v3614
        %v4451 = vmax.f32 %v4450, %v3620
        %v4452 = vmax.f32 %v4451, %v3624
        %v4453 = vmax.f32 %v4452, %v3630
        %v4454 = vmax.f32 %v4453, %v3634
        %v4455 = vmax.f32 %v4454, %v3640
        %v4456 = vmax.f32 %v4455, %v3644
        %v4457 = vmax.f32 %v4456, %v3650
        %v4458 = vmax.f32 %v4457, %v3654
        %v4459 = vmax.f32 %v4458, %v3660
        %v4460 = vmax.f32 %v4459, %v3664
        %v4461 = vmax.f32 %v4460, %v3670
        %v4462 = vmax.f32 %v4461, %v3674
        %v4463 = vmax.f32 %v4462, %v3680
        %v4464 = vmax.f32 %v4463, %v3684
        %v4465 = vmax.f32 %v4464, %v3690
        %v4466 = vmax.f32 %v4465, %v3694
        %v4467 = vmax.f32 %v4466, %v3700
        %v4468 = vmax.f32 %v4467, %v3704
        %v4469 = vmax.f32 %v4468, %v3710
        %v4470 = vmax.f32 %v4469, %v3714
        %v4471 = vmax.f32 %v4470, %v3720
        %v4472 = vmax.f32 %v4471, %v3724
        %v4473 = vmax.f32 %v4472, %v3730
        %v4474 = vmax.f32 %v4473, %v3734
        %v4475 = vmax.f32 %v3771, %v3775
        %v4476 = vmax.f32 %v4475, %v3781
        %v4477 = vmax.f32 %v4476, %v3785
        %v4478 = vmax.f32 %v4477, %v3791
        %v4479 = vmax.f32 %v4478, %v3795
        %v4480 = vmax.f32 %v4479, %v3801
        %v4481 = vmax.f32 %v4480, %v3805
        %v4482 = vmax.f32 %v4481, %v3811
        %v4483 = vmax.f32 %v4482, %v3815
        %v4484 = vmax.f32 %v4483, %v3821
        %v4485 = vmax.f32 %v4484, %v3825
        %v4486 = vmax.f32 %v4485, %v3831
        %v4487 = vmax.f32 %v4486, %v3835
        %v4488 = vmax.f32 %v4487, %v3841
        %v4489 = vmax.f32 %v4488, %v3845
        %v4490 = vmax.f32 %v4489, %v3851
        %v4491 = vmax.f32 %v4490, %v3855
        %v4492 = vmax.f32 %v4491, %v3861
        %v4493 = vmax.f32 %v4492, %v3865
        %v4494 = vmax.f32 %v4493, %v3871
        %v4495 = vmax.f32 %v4494, %v3875
        %v4496 = vmax.f32 %v4495, %v3881
        %v4497 = vmax.f32 %v4496, %v3885
        %v4498 = vmax.f32 %v4497, %v3891
        %v4499 = vmax.f32 %v4498, %v3895
        %v4500 = vmax.f32 %v4499, %v3901
        %v4501 = vmax.f32 %v4500, %v3905
        %v4502 = vmax.f32 %v4501, %v3911
        %v4503 = vmax.f32 %v4502, %v3915
        %v4504 = vmax.f32 %v4503, %v3921
        %v4505 = vmax.f32 %v4504, %v3925
        %v4506 = vmax.f32 %v4505, %v3931
        %v4507 = vmax.f32 %v4506, %v3935
        %v4508 = vmax.f32 %v4507, %v3941
        %v4509 = vmax.f32 %v4508, %v3945
        %v4510 = vmax.f32 %v4509, %v3951
        %v4511 = vmax.f32 %v4510, %v3955
        %v4512 = vmax.f32 %v4511, %v3961
        %v4513 = vmax.f32 %v4512, %v3965
        %v4514 = vmax.f32 %v4513, %v3971
        %v4515 = vmax.f32 %v4514, %v3975
        %v4516 = vmax.f32 %v4515, %v3981
        %v4517 = vmax.f32 %v4516, %v3985
        %v4518 = vmax.f32 %v4517, %v3991
        %v4519 = vmax.f32 %v4518, %v3995
        %v4520 = vmax.f32 %v4519, %v4001
        %v4521 = vmax.f32 %v4520, %v4005
        %v4522 = vmax.f32 %v4521, %v4011
        %v4523 = vmax.f32 %v4522, %v4015
        %v4524 = vmax.f32 %v4523, %v4021
        %v4525 = vmax.f32 %v4524, %v4025
        %v4526 = vmax.f32 %v4525, %v4031
        %v4527 = vmax.f32 %v4526, %v4035
        %v4528 = vmax.f32 %v4527, %v4041
        %v4529 = vmax.f32 %v4528, %v4045
        %v4530 = vmax.f32 %v4529, %v4051
        %v4531 = vmax.f32 %v4530, %v4055
        %v4532 = vmax.f32 %v4531, %v4061
        %v4533 = vmax.f32 %v4532, %v4065
        %v4534 = vmax.f32 %v4533, %v4071
        %v4535 = vmax.f32 %v4534, %v4075
        %v4536 = vmax.f32 %v4535, %v4081
        %v4537 = vmax.f32 %v4536, %v4085
        %v4538 = vmax.f32 %v3773, %v3777
        %v4539 = vmax.f32 %v4538, %v3783
        %v4540 = vmax.f32 %v4539, %v3787
        %v4541 = vmax.f32 %v4540, %v3793
        %v4542 = vmax.f32 %v4541, %v3797
        %v4543 = vmax.f32 %v4542, %v3803
        %v4544 = vmax.f32 %v4543, %v3807
        %v4545 = vmax.f32 %v4544, %v3813
        %v4546 = vmax.f32 %v4545, %v3817
        %v4547 = vmax.f32 %v4546, %v3823
        %v4548 = vmax.f32 %v4547, %v3827
        %v4549 = vmax.f32 %v4548, %v3833
        %v4550 = vmax.f32 %v4549, %v3837
        %v4551 = vmax.f32 %v4550, %v3843
        %v4552 = vmax.f32 %v4551, %v3847
        %v4553 = vmax.f32 %v4552, %v3853
        %v4554 = vmax.f32 %v4553, %v3857
        %v4555 = vmax.f32 %v4554, %v3863
        %v4556 = vmax.f32 %v4555, %v3867
        %v4557 = vmax.f32 %v4556, %v3873
        %v4558 = vmax.f32 %v4557, %v3877
        %v4559 = vmax.f32 %v4558, %v3883
        %v4560 = vmax.f32 %v4559, %v3887
        %v4561 = vmax.f32 %v4560, %v3893
        %v4562 = vmax.f32 %v4561, %v3897
        %v4563 = vmax.f32 %v4562, %v3903
        %v4564 = vmax.f32 %v4563, %v3907
        %v4565 = vmax.f32 %v4564, %v3913
        %v4566 = vmax.f32 %v4565, %v3917
        %v4567 = vmax.f32 %v4566, %v3923
        %v4568 = vmax.f32 %v4567, %v3927
        %v4569 = vmax.f32 %v4568, %v3933
        %v4570 = vmax.f32 %v4569, %v3937
        %v4571 = vmax.f32 %v4570, %v3943
        %v4572 = vmax.f32 %v4571, %v3947
        %v4573 = vmax.f32 %v4572, %v3953
        %v4574 = vmax.f32 %v4573, %v3957
        %v4575 = vmax.f32 %v4574, %v3963
        %v4576 = vmax.f32 %v4575, %v3967
        %v4577 = vmax.f32 %v4576, %v3973
        %v4578 = vmax.f32 %v4577, %v3977
        %v4579 = vmax.f32 %v4578, %v3983
        %v4580 = vmax.f32 %v4579, %v3987
        %v4581 = vmax.f32 %v4580, %v3993
        %v4582 = vmax.f32 %v4581, %v3997
        %v4583 = vmax.f32 %v4582, %v4003
        %v4584 = vmax.f32 %v4583, %v4007
        %v4585 = vmax.f32 %v4584, %v4013
        %v4586 = vmax.f32 %v4585, %v4017
        %v4587 = vmax.f32 %v4586, %v4023
        %v4588 = vmax.f32 %v4587, %v4027
        %v4589 = vmax.f32 %v4588, %v4033
        %v4590 = vmax.f32 %v4589, %v4037
        %v4591 = vmax.f32 %v4590, %v4043
        %v4592 = vmax.f32 %v4591, %v4047
        %v4593 = vmax.f32 %v4592, %v4053
        %v4594 = vmax.f32 %v4593, %v4057
        %v4595 = vmax.f32 %v4594, %v4063
        %v4596 = vmax.f32 %v4595, %v4067
        %v4597 = vmax.f32 %v4596, %v4073
        %v4598 = vmax.f32 %v4597, %v4077
        %v4599 = vmax.f32 %v4598, %v4083
        %v4600 = vmax.f32 %v4599, %v4087
        %v4601 = vmax.f32 %v4089, %v4159
        %v4602 = vmax.f32 %v4090, %v4222
        %v4603 = vmax.f32 %v4091, %v4285
        %v4604 = vmax.f32 %v4092, %v4348
        %v4605 = vmax.f32 %v4093, %v4411
        %v4606 = vmax.f32 %v4094, %v4474
        %v4607 = vmax.f32 %v4095, %v4537
        %v4608 = vmax.f32 %v4096, %v4600
        %4609 = vst [vmem:[#allocation2] sm:$0xff] %v4601
        %4610 = vst [vmem:[#allocation2 + $0x8] sm:$0xff] %v4602
        %4611 = vst [vmem:[#allocation2 + $0x10] sm:$0xff] %v4603
        %4612 = vst [vmem:[#allocation2 + $0x18] sm:$0xff] %v4604
        %4613 = vst [vmem:[#allocation2 + $0x20] sm:$0xff] %v4605
        %4614 = vst [vmem:[#allocation2 + $0x28] sm:$0xff] %v4606
        %4615 = vst [vmem:[#allocation2 + $0x30] sm:$0xff] %v4607
        %4616 = vst [vmem:[#allocation2 + $0x38] sm:$0xff] %v4608
        // Predicated region
        $region53: #{tpu_custom_call.1} parent=47 // pred_check
          %p4617 = pneg %p322
        $region54: #{tpu_custom_call.1} parent=47 // pred_check_branch
          %4619 = sbr.rel (%p4617) target = $region56
        $region55: #{tpu_custom_call.1} parent=47 // pred_region
          %v4620 = vld [vmem:[#allocation2] sm:$0xff]
          %v4621 = vld [vmem:[#allocation2 + $0x8] sm:$0xff]
          %v4622 = vld [vmem:[#allocation2 + $0x10] sm:$0xff]
          %v4623 = vld [vmem:[#allocation2 + $0x18] sm:$0xff]
          %v4624 = vld [vmem:[#allocation2 + $0x20] sm:$0xff]
          %v4625 = vld [vmem:[#allocation2 + $0x28] sm:$0xff]
          %v4626 = vld [vmem:[#allocation2 + $0x30] sm:$0xff]
          %v4627 = vld [vmem:[#allocation2 + $0x38] sm:$0xff]
          %v4628 = vrot.slane %v4620, 4
          %v4629 = vmax.f32 %v4620, %v4628
          %v4630 = vrot.slane %v4629, 2
          %v4631 = vmax.f32 %v4629, %v4630
          %v4632 = vrot.slane %v4631, 1
          %v4633 = vmax.f32 %v4631, %v4632
          %v4634 = vrot.slane %v4621, 4
          %v4635 = vmax.f32 %v4621, %v4634
          %v4636 = vrot.slane %v4635, 2
          %v4637 = vmax.f32 %v4635, %v4636
          %v4638 = vrot.slane %v4637, 1
          %v4639 = vmax.f32 %v4637, %v4638
          %v4640 = vrot.slane %v4622, 4
          %v4641 = vmax.f32 %v4622, %v4640
          %v4642 = vrot.slane %v4641, 2
          %v4643 = vmax.f32 %v4641, %v4642
          %v4644 = vrot.slane %v4643, 1
          %v4645 = vmax.f32 %v4643, %v4644
          %v4646 = vrot.slane %v4623, 4
          %v4647 = vmax.f32 %v4623, %v4646
          %v4648 = vrot.slane %v4647, 2
          %v4649 = vmax.f32 %v4647, %v4648
          %v4650 = vrot.slane %v4649, 1
          %v4651 = vmax.f32 %v4649, %v4650
          %v4652 = vrot.slane %v4624, 4
          %v4653 = vmax.f32 %v4624, %v4652
          %v4654 = vrot.slane %v4653, 2
          %v4655 = vmax.f32 %v4653, %v4654
          %v4656 = vrot.slane %v4655, 1
          %v4657 = vmax.f32 %v4655, %v4656
          %v4658 = vrot.slane %v4625, 4
          %v4659 = vmax.f32 %v4625, %v4658
          %v4660 = vrot.slane %v4659, 2
          %v4661 = vmax.f32 %v4659, %v4660
          %v4662 = vrot.slane %v4661, 1
          %v4663 = vmax.f32 %v4661, %v4662
          %v4664 = vrot.slane %v4626, 4
          %v4665 = vmax.f32 %v4626, %v4664
          %v4666 = vrot.slane %v4665, 2
          %v4667 = vmax.f32 %v4665, %v4666
          %v4668 = vrot.slane %v4667, 1
          %v4669 = vmax.f32 %v4667, %v4668
          %v4670 = vrot.slane %v4627, 4
          %v4671 = vmax.f32 %v4627, %v4670
          %v4672 = vrot.slane %v4671, 2
          %v4673 = vmax.f32 %v4671, %v4672
          %v4674 = vrot.slane %v4673, 1
          %v4675 = vmax.f32 %v4673, %v4674
          %v4684 = vcombine.low %v4633, %v4639
          %v4685 = vcombine.low %v4645, %v4651
          %v4686 = vcombine.low %v4657, %v4663
          %v4687 = vcombine.low %v4669, %v4675
          %v4689 = vunpack.c.l.s4 1966171168
          %v4690 = vunpack.c.0.s8 %v4689
          %v4691 = vlaneseq
          %v4692 = vshrl.u32 %v4691, 7
          %v4693 = vsub.s32 %v4690, %v4692
          %v4694 = vrot.slane %v4684, %v4693
          %v4696 = vunpack.c.l.s4 1966171168
          %v4697 = vunpack.c.0.s8 %v4696
          %v4698 = vlaneseq
          %v4699 = vshrl.u32 %v4698, 7
          %v4700 = vsub.s32 %v4697, %v4699
          %v4701 = vrot.slane %v4685, %v4700
          %v4703 = vunpack.c.l.s4 1966171168
          %v4704 = vunpack.c.0.s8 %v4703
          %v4705 = vlaneseq
          %v4706 = vshrl.u32 %v4705, 7
          %v4707 = vsub.s32 %v4704, %v4706
          %v4708 = vrot.slane %v4686, %v4707
          %v4710 = vunpack.c.l.s4 1966171168
          %v4711 = vunpack.c.0.s8 %v4710
          %v4712 = vlaneseq
          %v4713 = vshrl.u32 %v4712, 7
          %v4714 = vsub.s32 %v4711, %v4713
          %v4715 = vrot.slane %v4687, %v4714
          %v4716 = vcombine.low %v4694, %v4701
          %v4717 = vcombine.low %v4708, %v4715
          %v4719 = vunpack.c.l.s4 1966171168
          %v4720 = vunpack.c.0.s8 %v4719
          %v4721 = vlaneseq
          %v4722 = vshrl.u32 %v4721, 7
          %v4723 = vsub.s32 %v4720, %v4722
          %v4724 = vrot.slane %v4716, %v4723
          %v4726 = vunpack.c.l.s4 1966171168
          %v4727 = vunpack.c.0.s8 %v4726
          %v4728 = vlaneseq
          %v4729 = vshrl.u32 %v4728, 7
          %v4730 = vsub.s32 %v4727, %v4729
          %v4731 = vrot.slane %v4717, %v4730
          %v4732 = vcombine.low %v4724, %v4731
          %4734 = vst [vmem:[%s308] sm:$0xff] %v4732
        $region56: #{tpu_custom_call.1} parent=47 // pred_fallthru
          _
        %s4735 = sand.u32 %s206, 1
        %s4736 = scalar_lea.sflag [#allocation4], %s4735
        %s4737 = sand.u32 %s206, 1
        %s4738 = smul.addr %s4737, 8
        %s4739 = scalar_lea.vmem [#allocation3], %s4738
        // Predicated region
        $region57: #{tpu_custom_call.1} parent=47 // pred_check
          %p4740 = pneg %p216
        $region58: #{tpu_custom_call.1} parent=47 // pred_check_branch
          %4742 = sbr.rel (%p4740) target = $region60
        $region59: #{tpu_custom_call.1} parent=47 // pred_region
          %s4744 = ssub.s32 128, 128
          %4745 = vsyncadd %s4736, %s4744
          %s4746 = smul.addr %s27, 8
          %s4747 = smul.addr %s26, 8
          %s4748 = sadd.s32 %s4746, %s4747
          %s4749 = smul.addr %s4748, 16
          %s4750 = scalar_lea.hbm %s7, %s4749
          %s4752 = sshll.u32 %s4739, 4
          %s4753 = int_to_ptr.vmem [resolvable:$true] %s4752
          %4755 = dma.vmem_to_hbm [thread:$0]  %s4753, 128, %s4750, %s4736
        $region60: #{tpu_custom_call.1} parent=47 // pred_fallthru
          _
      $region48: #{tpu_custom_call.1} parent=5 // pred_fallthru
        _
      %p4756 = scmp.le.s32.totalorder 2, %s16
      // Predicated region
      $region61: #{tpu_custom_call.1} parent=5 // pred_check
        %p4757 = pneg %p4756
      $region62: #{tpu_custom_call.1} parent=5 // pred_check_branch
        %4759 = sbr.rel (%p4757) target = $region64
      $region63: #{tpu_custom_call.1} parent=5 // pred_region
        %s4760 = ssub.s32 %s16, 2
        // Predicated region
        $region65: #{tpu_custom_call.1} parent=63 // pred_check
          %p4761 = pneg %p222
        $region66: #{tpu_custom_call.1} parent=63 // pred_check_branch
          %4763 = sbr.rel (%p4761) target = $region68
        $region67: #{tpu_custom_call.1} parent=63 // pred_region
          %s4764 = sand.u32 %s207, 1
          %s4765 = scalar_lea.sflag [#allocation4], %s4764
          %s4766 = sand.u32 %s207, 1
          %s4767 = smul.addr %s4766, 8
          %s4768 = scalar_lea.vmem [#allocation3], %s4767
          %4769 = dma.done %s4765, 128
        $region68: #{tpu_custom_call.1} parent=63 // pred_fallthru
          _
      $region64: #{tpu_custom_call.1} parent=5 // pred_fallthru
        _
    $region6: #{tpu_custom_call.1} parent=1 // loop_footer
      %s20 = sadd.s32 1, %s16
    $region7: #{tpu_custom_call.1} parent=1 // loop_footer_branch
      %15 = sbr.rel target = $region3
    $region8: #{tpu_custom_call.1} parent=1 // loop_exit
      _
    %4770 = vsyncpa [#allocation4], 1
    %s4771 = scalar_lea.sflag [#allocation4], 1
    %4772 = vsyncpa %s4771, 1

</llo_original>
